<compile_context>
chip_gen: v7x
topology: tpu7x:2x2x1
jax: 0.10.0
libtpu: 0.0.40
codegen_flags: <defaults>
</compile_context>

<pallas_src>
import math

import jax
import jax.numpy as jnp
from jax.experimental import pallas as pl
from jax.experimental.pallas import tpu as pltpu

MAXP = 4  # 'same' padding of the largest stage-1 kernel (k=9)


# ----------------------------------------------------------------------------
# Pallas kernel: TB batch elements (TB*L rows) per grid step.
# ----------------------------------------------------------------------------
def _disc_kernel(x_ref, lpos_ref, w1_ref, b1_ref, w2_ref, b2_ref, wd_ref, bd_ref,
                 out_ref):
    N, A = x_ref.shape                 # N = TB * L rows (batch * length)
    L = wd_ref.shape[1]
    TB = N // L
    C2 = w2_ref.shape[-1]

    x2 = x_ref[...]                    # (N, A) bf16
    l_pos = lpos_ref[...]              # (N, 1) int32: position inside the phrase

    def fused_conv(lhs, w_ref, b_ref, pad):
        # 'same' conv over the length axis expressed as per-tap matmuls with
        # the unshifted LHS, followed by a row roll of the f32 tap output and
        # a phrase-edge mask:  acc[r] += y_t[r + (t - pad)] for valid rows.
        ntaps = w_ref.shape[0]
        # Center tap first: no shift, no mask; bias folded into the init.
        acc = jnp.dot(lhs, w_ref[pad], preferred_element_type=jnp.float32) + b_ref[...]
        for t in range(ntaps):
            d = t - pad                # source-row offset of this tap
            if d == 0:
                continue
            y = jnp.dot(lhs, w_ref[t], preferred_element_type=jnp.float32)
            y = pltpu.roll(y, (-d) % N, 0)                     # y'[r] = y[r + d]
            valid = (l_pos >= -d) if d < 0 else (l_pos < L - d)
            acc = acc + jnp.where(valid, y, 0.0)
        return acc

    # Stage 1: four branches (k=3/5/7/9) + embedding fused into one 9-tap conv.
    acc1 = fused_conv(x2, w1_ref, b1_ref, MAXP)
    a1 = jnp.maximum(acc1, 0.1 * acc1).astype(jnp.bfloat16)    # LReluCustom(0.1)

    # Stage 2: the four k=3 convs fused into one 3-tap, 4*H2-wide conv.
    acc2 = fused_conv(a1, w2_ref, b2_ref, 1)
    a2 = jnp.maximum(acc2, 0.1 * acc2)

    # Dense(4*H2*L -> 1): wd_ref is (1, L, 4*H2) in torch channel-major flatten
    # order, so the linear layer is a weighted per-batch full reduction.
    prod = a2.reshape(TB, L, C2) * wd_ref[...]                 # (TB, L, C2)
    v = jnp.sum(prod, axis=2)                                  # (TB, L)
    out_ref[...] = jnp.sum(v, axis=1, keepdims=True) + bd_ref[...]   # (TB, 1)


# ----------------------------------------------------------------------------
# Wrapper: host-side weight packing / embedding folding + pallas_call.
# ----------------------------------------------------------------------------
def discriminator_forward(x, params, config, block_b=None):
    B, L, A = x.shape
    E = config['dis_emb_size']
    H1 = config['dis_hidden_1_size']
    H2 = config['dis_hidden_2_size']
    C1, C2 = 4 * H1, 4 * H2

    # ---- stage 1: pack 4 branches into one 9-tap weight, fold the embedding --
    W1 = jnp.zeros((9, E, C1), jnp.float32)
    for j, k in enumerate((3, 5, 7, 9)):
        p = k // 2
        tap = jnp.transpose(params[f'conv_{k}_1_w'], (2, 1, 0))        # (k, E, H1)
        W1 = W1.at[MAXP - p:MAXP - p + k, :, j * H1:(j + 1) * H1].set(tap)
    # Fold the embedding matmul into the conv weights (f32, then cast to bf16).
    W1f = jnp.einsum('ae,tec->tac', params['emb_w'], W1).astype(jnp.bfloat16)
    b1 = jnp.concatenate([params[f'conv_{k}_1_b'] for k in (3, 5, 7, 9)]).reshape(1, C1)

    # ---- stage 2: all four convs are k=3 -> one (3, 4*H1, 4*H2) weight -------
    W2 = jnp.concatenate(
        [jnp.transpose(params[f'conv_{k}_2_w'], (2, 1, 0)) for k in (3, 5, 7, 9)],
        axis=-1).astype(jnp.bfloat16)
    b2 = jnp.concatenate([params[f'conv_{k}_2_b'] for k in (3, 5, 7, 9)]).reshape(1, C2)

    # torch flatten order over (C, L) is index c*L + l  ->  (1, L, 4*H2) mask.
    wd = params['dense_w'].reshape(C2, L).T.reshape(1, L, C2)
    bd = params['dense_b'].reshape(1, 1)

    # ---- batch blocking: ~512 MXU rows per step, >=2 steps for megacore ------
    if block_b is None:
        block_b = max(8, 512 // L)
    TB = min(block_b, B)
    if B >= 16:
        TB = min(TB, max(8, B // 2))        # keep >=2 grid steps (v7x megacore)
    if TB < B and TB % 8 != 0:
        TB = max(8, (TB // 8) * 8)
    Bp = -(-B // TB) * TB

    xp = x.astype(jnp.bfloat16)
    if Bp != B:
        xp = jnp.pad(xp, ((0, Bp - B), (0, 0), (0, 0)))
    xp = xp.reshape(Bp * L, A)              # rows = batch*length, lanes = ascii

    # Per-row position inside its phrase (for the conv edge masks).
    lpos = jnp.tile(jnp.arange(L, dtype=jnp.int32), Bp).reshape(Bp * L, 1)

    cost = pl.CostEstimate(
        flops=2 * Bp * L * (9 * A * C1 + 3 * C1 * C2 + C2),
        transcendentals=0,
        bytes_accessed=(xp.size * 2 + W1f.size * 2 + W2.size * 2
                        + (lpos.size + b1.size + b2.size + wd.size + bd.size + Bp) * 4))

    def const_spec(shape):
        n = len(shape)
        return pl.BlockSpec(shape, lambda i, n=n: (0,) * n)

    out = pl.pallas_call(
        _disc_kernel,
        out_shape=jax.ShapeDtypeStruct((Bp, 1), jnp.float32),
        grid_spec=pltpu.PrefetchScalarGridSpec(
            num_scalar_prefetch=0,
            grid=(Bp // TB,),
            in_specs=[pl.BlockSpec((TB * L, A), lambda i: (i, 0)),     # x rows
                      pl.BlockSpec((TB * L, 1), lambda i: (i, 0)),     # l positions
                      const_spec((9, A, C1)), const_spec((1, C1)),
                      const_spec((3, C1, C2)), const_spec((1, C2)),
                      const_spec((1, L, C2)), const_spec((1, 1))],
            out_specs=pl.BlockSpec((TB, 1), lambda i: (i, 0)),
        ),
        compiler_params=pltpu.CompilerParams(
            dimension_semantics=("parallel",)),   # batch blocks are independent
        cost_estimate=cost,
    )(xp, lpos, W1f, b1, W2, b2, wd, bd)
    return out[:B]


# ----------------------------------------------------------------------------
# Pure-JAX reference (mirrors the PyTorch forward, NCL semantics, f32).
# ----------------------------------------------------------------------------
def ref_forward(x, params, config):
    B, L, A = x.shape
    emb = x @ params['emb_w']                                     # (B, L, E)

    def conv1d_same(inp, w, b):  # inp (B, L, Cin), w (Cout, Cin, k)
        k = w.shape[-1]
        p = k // 2
        pad = jnp.pad(inp, ((0, 0), (p, p), (0, 0)))
        out = jnp.zeros((B, L, w.shape[0]), jnp.float32)
        for t in range(k):
            out = out + pad[:, t:t + L, :] @ w[:, :, t].T
        return out + b

    outs1 = [conv1d_same(emb, params[f'conv_{k}_1_w'], params[f'conv_{k}_1_b'])
             for k in (3, 5, 7, 9)]
    a1 = jnp.concatenate(outs1, axis=-1)
    a1 = jnp.where(a1 > 0, a1, 0.1 * a1)
    outs2 = [conv1d_same(a1, params[f'conv_{k}_2_w'], params[f'conv_{k}_2_b'])
             for k in (3, 5, 7, 9)]
    a2 = jnp.concatenate(outs2, axis=-1)
    a2 = jnp.where(a2 > 0, a2, 0.1 * a2)
    flat = jnp.transpose(a2, (0, 2, 1)).reshape(B, -1)            # torch flatten order
    return flat @ params['dense_w'].T + params['dense_b']


# ----------------------------------------------------------------------------
# Deterministic parameter init (shapes follow the torch module __init__).
# ----------------------------------------------------------------------------
def init_params(config, key):
    A, E = config['ascii_size'], config['dis_emb_size']
    H1, H2 = config['dis_hidden_1_size'], config['dis_hidden_2_size']
    L = config['phrase_length']
    keys = iter(jax.random.split(key, 32))
    p = {}
    bound = math.sqrt(6.0 / (A + E))                              # xavier_uniform_
    p['emb_w'] = jax.random.uniform(next(keys), (A, E), jnp.float32, -bound, bound)

    def conv_init(cin, cout, k):
        b = 1.0 / math.sqrt(cin * k)
        w = jax.random.uniform(next(keys), (cout, cin, k), jnp.float32, -b, b)
        bias = jax.random.uniform(next(keys), (cout,), jnp.float32, -b, b)
        return w, bias

    for k in (3, 5, 7, 9):
        p[f'conv_{k}_1_w'], p[f'conv_{k}_1_b'] = conv_init(E, H1, k)
    for k in (3, 5, 7, 9):
        # NOTE: in the torch module all stage-2 convs use kernel_size=3.
        p[f'conv_{k}_2_w'], p[f'conv_{k}_2_b'] = conv_init(4 * H1, H2, 3)

    D = 4 * H2 * L
    bd = 1.0 / math.sqrt(D)
    p['dense_w'] = jax.random.uniform(next(keys), (1, D), jnp.float32, -bd, bd)
    p['dense_b'] = jax.random.uniform(next(keys), (1,), jnp.float32, -bd, bd)
    return p


if __name__ == "__main__":
    config = dict(ascii_size=128, dis_emb_size=32,
                  dis_hidden_1_size=32, dis_hidden_2_size=32,
                  phrase_length=16)
    B, L, A = 8, config['phrase_length'], config['ascii_size']

    key = jax.random.PRNGKey(0)
    pkey, xkey = jax.random.split(key)
    params = init_params(config, pkey)

    ids = jax.random.randint(xkey, (B, L), 0, A)
    x = jax.nn.one_hot(ids, A, dtype=jnp.float32)                 # (B, L, ascii_size)

    out = jax.block_until_ready(discriminator_forward(x, params, config))
    ref = ref_forward(x, params, config)
    assert out.shape == (B, 1), out.shape
    # bf16 MXU operands (f32 accumulation): tolerance loosened vs the f32 rev.
    assert jnp.allclose(out, ref, rtol=2e-2, atol=2e-2), (out, ref)
    print("KERNEL_OK")
</pallas_src>

<mosaic_0001>
module attributes {stable_mosaic.version = 11 : i64} {
  func.func @_disc_kernel(%arg0: i32, %arg1: memref<128x128xbf16, #tpu.memory_space<vmem>>, %arg2: memref<128x1xi32, #tpu.memory_space<vmem>>, %arg3: memref<9x128x128xbf16, #tpu.memory_space<vmem>>, %arg4: memref<1x128xf32, #tpu.memory_space<vmem>>, %arg5: memref<3x128x128xbf16, #tpu.memory_space<vmem>>, %arg6: memref<1x128xf32, #tpu.memory_space<vmem>>, %arg7: memref<1x16x128xf32, #tpu.memory_space<vmem>>, %arg8: memref<1x1xf32, #tpu.memory_space<vmem>>, %arg9: memref<8x1xf32, #tpu.memory_space<vmem>>) attributes {dimension_semantics = [#tpu.dimension_semantics<parallel>], iteration_bounds = array<i64: 1>, scalar_prefetch = 0 : i64, scratch_operands = 0 : i64, tpu.core_type = #tpu.core_type<tc>, window_params = [{transform_indices = @transform_0, window_bounds = array<i64: 128, 128>}, {transform_indices = @transform_1, window_bounds = array<i64: 128, 1>}, {pipeline_mode = #tpu.pipeline_mode<synchronous>, transform_indices = @transform_2, window_bounds = array<i64: 9, 128, 128>}, {pipeline_mode = #tpu.pipeline_mode<synchronous>, transform_indices = @transform_3, window_bounds = array<i64: 1, 128>}, {pipeline_mode = #tpu.pipeline_mode<synchronous>, transform_indices = @transform_4, window_bounds = array<i64: 3, 128, 128>}, {pipeline_mode = #tpu.pipeline_mode<synchronous>, transform_indices = @transform_5, window_bounds = array<i64: 1, 128>}, {pipeline_mode = #tpu.pipeline_mode<synchronous>, transform_indices = @transform_6, window_bounds = array<i64: 1, 16, 128>}, {pipeline_mode = #tpu.pipeline_mode<synchronous>, transform_indices = @transform_7, window_bounds = array<i64: 1, 1>}, {transform_indices = @transform_8, window_bounds = array<i64: 8, 1>}]} {
    %c0 = arith.constant 0 : index
    %c0_0 = arith.constant 0 : index
    %0 = vector.load %arg1[%c0, %c0_0] : memref<128x128xbf16, #tpu.memory_space<vmem>>, vector<128x128xbf16>
    %c0_1 = arith.constant 0 : index
    %c0_2 = arith.constant 0 : index
    %1 = vector.load %arg2[%c0_1, %c0_2] : memref<128x1xi32, #tpu.memory_space<vmem>>, vector<128x1xi32>
    %c4 = arith.constant 4 : index
    %c0_3 = arith.constant 0 : index
    %c0_4 = arith.constant 0 : index
    %2 = vector.load %arg3[%c4, %c0_3, %c0_4] : memref<9x128x128xbf16, #tpu.memory_space<vmem>>, vector<1x128x128xbf16>
    %3 = vector.shape_cast %2 : vector<1x128x128xbf16> to vector<128x128xbf16>
    %cst = arith.constant dense<0.000000e+00> : vector<128x128xf32>
    %4 = tpu.matmul %0, %3, %cst {dimension_numbers = #tpu.dot_dimension_numbers<[1], [0], [0], [1], [0, 0, 1, 1], [], []>} : vector<128x128xbf16>, vector<128x128xbf16>, vector<128x128xf32> -> vector<128x128xf32>
    %c0_5 = arith.constant 0 : index
    %c0_6 = arith.constant 0 : index
    %5 = vector.load %arg4[%c0_5, %c0_6] : memref<1x128xf32, #tpu.memory_space<vmem>>, vector<1x128xf32>
    %6 = vector.broadcast %5 : vector<1x128xf32> to vector<128x128xf32>
    %7 = arith.addf %4, %6 : vector<128x128xf32>
    %c0_7 = arith.constant 0 : index
    %c0_8 = arith.constant 0 : index
    %c0_9 = arith.constant 0 : index
    %8 = vector.load %arg3[%c0_7, %c0_8, %c0_9] : memref<9x128x128xbf16, #tpu.memory_space<vmem>>, vector<1x128x128xbf16>
    %9 = vector.shape_cast %8 : vector<1x128x128xbf16> to vector<128x128xbf16>
    %cst_10 = arith.constant dense<0.000000e+00> : vector<128x128xf32>
    %10 = tpu.matmul %0, %9, %cst_10 {dimension_numbers = #tpu.dot_dimension_numbers<[1], [0], [0], [1], [0, 0, 1, 1], [], []>} : vector<128x128xbf16>, vector<128x128xbf16>, vector<128x128xf32> -> vector<128x128xf32>
    %c4_i32 = arith.constant 4 : i32
    %11 = tpu.dynamic_rotate %10 by %c4_i32 dim 0 : vector<128x128xf32>, i32 -> vector<128x128xf32>
    %c4_i32_11 = arith.constant 4 : i32
    %12 = vector.broadcast %c4_i32_11 : i32 to vector<128x1xi32>
    %13 = arith.cmpi sge, %1, %12 : vector<128x1xi32>
    %cst_12 = arith.constant 0.000000e+00 : f32
    %14 = vector.shape_cast %13 : vector<128x1xi1> to vector<128x1xi1>
    %15 = vector.broadcast %14 : vector<128x1xi1> to vector<128x128xi1>
    %16 = vector.broadcast %cst_12 : f32 to vector<128x128xf32>
    %17 = arith.select %15, %11, %16 : vector<128x128xi1>, vector<128x128xf32>
    %18 = arith.addf %7, %17 : vector<128x128xf32>
    %c1 = arith.constant 1 : index
    %c0_13 = arith.constant 0 : index
    %c0_14 = arith.constant 0 : index
    %19 = vector.load %arg3[%c1, %c0_13, %c0_14] : memref<9x128x128xbf16, #tpu.memory_space<vmem>>, vector<1x128x128xbf16>
    %20 = vector.shape_cast %19 : vector<1x128x128xbf16> to vector<128x128xbf16>
    %cst_15 = arith.constant dense<0.000000e+00> : vector<128x128xf32>
    %21 = tpu.matmul %0, %20, %cst_15 {dimension_numbers = #tpu.dot_dimension_numbers<[1], [0], [0], [1], [0, 0, 1, 1], [], []>} : vector<128x128xbf16>, vector<128x128xbf16>, vector<128x128xf32> -> vector<128x128xf32>
    %c3_i32 = arith.constant 3 : i32
    %22 = tpu.dynamic_rotate %21 by %c3_i32 dim 0 : vector<128x128xf32>, i32 -> vector<128x128xf32>
    %c3_i32_16 = arith.constant 3 : i32
    %23 = vector.broadcast %c3_i32_16 : i32 to vector<128x1xi32>
    %24 = arith.cmpi sge, %1, %23 : vector<128x1xi32>
    %cst_17 = arith.constant 0.000000e+00 : f32
    %25 = vector.shape_cast %24 : vector<128x1xi1> to vector<128x1xi1>
    %26 = vector.broadcast %25 : vector<128x1xi1> to vector<128x128xi1>
    %27 = vector.broadcast %cst_17 : f32 to vector<128x128xf32>
    %28 = arith.select %26, %22, %27 : vector<128x128xi1>, vector<128x128xf32>
    %29 = arith.addf %18, %28 : vector<128x128xf32>
    %c2 = arith.constant 2 : index
    %c0_18 = arith.constant 0 : index
    %c0_19 = arith.constant 0 : index
    %30 = vector.load %arg3[%c2, %c0_18, %c0_19] : memref<9x128x128xbf16, #tpu.memory_space<vmem>>, vector<1x128x128xbf16>
    %31 = vector.shape_cast %30 : vector<1x128x128xbf16> to vector<128x128xbf16>
    %cst_20 = arith.constant dense<0.000000e+00> : vector<128x128xf32>
    %32 = tpu.matmul %0, %31, %cst_20 {dimension_numbers = #tpu.dot_dimension_numbers<[1], [0], [0], [1], [0, 0, 1, 1], [], []>} : vector<128x128xbf16>, vector<128x128xbf16>, vector<128x128xf32> -> vector<128x128xf32>
    %c2_i32 = arith.constant 2 : i32
    %33 = tpu.dynamic_rotate %32 by %c2_i32 dim 0 : vector<128x128xf32>, i32 -> vector<128x128xf32>
    %c2_i32_21 = arith.constant 2 : i32
    %34 = vector.broadcast %c2_i32_21 : i32 to vector<128x1xi32>
    %35 = arith.cmpi sge, %1, %34 : vector<128x1xi32>
    %cst_22 = arith.constant 0.000000e+00 : f32
    %36 = vector.shape_cast %35 : vector<128x1xi1> to vector<128x1xi1>
    %37 = vector.broadcast %36 : vector<128x1xi1> to vector<128x128xi1>
    %38 = vector.broadcast %cst_22 : f32 to vector<128x128xf32>
    %39 = arith.select %37, %33, %38 : vector<128x128xi1>, vector<128x128xf32>
    %40 = arith.addf %29, %39 : vector<128x128xf32>
    %c3 = arith.constant 3 : index
    %c0_23 = arith.constant 0 : index
    %c0_24 = arith.constant 0 : index
    %41 = vector.load %arg3[%c3, %c0_23, %c0_24] : memref<9x128x128xbf16, #tpu.memory_space<vmem>>, vector<1x128x128xbf16>
    %42 = vector.shape_cast %41 : vector<1x128x128xbf16> to vector<128x128xbf16>
    %cst_25 = arith.constant dense<0.000000e+00> : vector<128x128xf32>
    %43 = tpu.matmul %0, %42, %cst_25 {dimension_numbers = #tpu.dot_dimension_numbers<[1], [0], [0], [1], [0, 0, 1, 1], [], []>} : vector<128x128xbf16>, vector<128x128xbf16>, vector<128x128xf32> -> vector<128x128xf32>
    %c1_i32 = arith.constant 1 : i32
    %44 = tpu.dynamic_rotate %43 by %c1_i32 dim 0 : vector<128x128xf32>, i32 -> vector<128x128xf32>
    %c1_i32_26 = arith.constant 1 : i32
    %45 = vector.broadcast %c1_i32_26 : i32 to vector<128x1xi32>
    %46 = arith.cmpi sge, %1, %45 : vector<128x1xi32>
    %cst_27 = arith.constant 0.000000e+00 : f32
    %47 = vector.shape_cast %46 : vector<128x1xi1> to vector<128x1xi1>
    %48 = vector.broadcast %47 : vector<128x1xi1> to vector<128x128xi1>
    %49 = vector.broadcast %cst_27 : f32 to vector<128x128xf32>
    %50 = arith.select %48, %44, %49 : vector<128x128xi1>, vector<128x128xf32>
    %51 = arith.addf %40, %50 : vector<128x128xf32>
    %c5 = arith.constant 5 : index
    %c0_28 = arith.constant 0 : index
    %c0_29 = arith.constant 0 : index
    %52 = vector.load %arg3[%c5, %c0_28, %c0_29] : memref<9x128x128xbf16, #tpu.memory_space<vmem>>, vector<1x128x128xbf16>
    %53 = vector.shape_cast %52 : vector<1x128x128xbf16> to vector<128x128xbf16>
    %cst_30 = arith.constant dense<0.000000e+00> : vector<128x128xf32>
    %54 = tpu.matmul %0, %53, %cst_30 {dimension_numbers = #tpu.dot_dimension_numbers<[1], [0], [0], [1], [0, 0, 1, 1], [], []>} : vector<128x128xbf16>, vector<128x128xbf16>, vector<128x128xf32> -> vector<128x128xf32>
    %c127_i32 = arith.constant 127 : i32
    %55 = tpu.dynamic_rotate %54 by %c127_i32 dim 0 : vector<128x128xf32>, i32 -> vector<128x128xf32>
    %c15_i32 = arith.constant 15 : i32
    %56 = vector.broadcast %c15_i32 : i32 to vector<128x1xi32>
    %57 = arith.cmpi slt, %1, %56 : vector<128x1xi32>
    %cst_31 = arith.constant 0.000000e+00 : f32
    %58 = vector.shape_cast %57 : vector<128x1xi1> to vector<128x1xi1>
    %59 = vector.broadcast %58 : vector<128x1xi1> to vector<128x128xi1>
    %60 = vector.broadcast %cst_31 : f32 to vector<128x128xf32>
    %61 = arith.select %59, %55, %60 : vector<128x128xi1>, vector<128x128xf32>
    %62 = arith.addf %51, %61 : vector<128x128xf32>
    %c6 = arith.constant 6 : index
    %c0_32 = arith.constant 0 : index
    %c0_33 = arith.constant 0 : index
    %63 = vector.load %arg3[%c6, %c0_32, %c0_33] : memref<9x128x128xbf16, #tpu.memory_space<vmem>>, vector<1x128x128xbf16>
    %64 = vector.shape_cast %63 : vector<1x128x128xbf16> to vector<128x128xbf16>
    %cst_34 = arith.constant dense<0.000000e+00> : vector<128x128xf32>
    %65 = tpu.matmul %0, %64, %cst_34 {dimension_numbers = #tpu.dot_dimension_numbers<[1], [0], [0], [1], [0, 0, 1, 1], [], []>} : vector<128x128xbf16>, vector<128x128xbf16>, vector<128x128xf32> -> vector<128x128xf32>
    %c126_i32 = arith.constant 126 : i32
    %66 = tpu.dynamic_rotate %65 by %c126_i32 dim 0 : vector<128x128xf32>, i32 -> vector<128x128xf32>
    %c14_i32 = arith.constant 14 : i32
    %67 = vector.broadcast %c14_i32 : i32 to vector<128x1xi32>
    %68 = arith.cmpi slt, %1, %67 : vector<128x1xi32>
    %cst_35 = arith.constant 0.000000e+00 : f32
    %69 = vector.shape_cast %68 : vector<128x1xi1> to vector<128x1xi1>
    %70 = vector.broadcast %69 : vector<128x1xi1> to vector<128x128xi1>
    %71 = vector.broadcast %cst_35 : f32 to vector<128x128xf32>
    %72 = arith.select %70, %66, %71 : vector<128x128xi1>, vector<128x128xf32>
    %73 = arith.addf %62, %72 : vector<128x128xf32>
    %c7 = arith.constant 7 : index
    %c0_36 = arith.constant 0 : index
    %c0_37 = arith.constant 0 : index
    %74 = vector.load %arg3[%c7, %c0_36, %c0_37] : memref<9x128x128xbf16, #tpu.memory_space<vmem>>, vector<1x128x128xbf16>
    %75 = vector.shape_cast %74 : vector<1x128x128xbf16> to vector<128x128xbf16>
    %cst_38 = arith.constant dense<0.000000e+00> : vector<128x128xf32>
    %76 = tpu.matmul %0, %75, %cst_38 {dimension_numbers = #tpu.dot_dimension_numbers<[1], [0], [0], [1], [0, 0, 1, 1], [], []>} : vector<128x128xbf16>, vector<128x128xbf16>, vector<128x128xf32> -> vector<128x128xf32>
    %c125_i32 = arith.constant 125 : i32
    %77 = tpu.dynamic_rotate %76 by %c125_i32 dim 0 : vector<128x128xf32>, i32 -> vector<128x128xf32>
    %c13_i32 = arith.constant 13 : i32
    %78 = vector.broadcast %c13_i32 : i32 to vector<128x1xi32>
    %79 = arith.cmpi slt, %1, %78 : vector<128x1xi32>
    %cst_39 = arith.constant 0.000000e+00 : f32
    %80 = vector.shape_cast %79 : vector<128x1xi1> to vector<128x1xi1>
    %81 = vector.broadcast %80 : vector<128x1xi1> to vector<128x128xi1>
    %82 = vector.broadcast %cst_39 : f32 to vector<128x128xf32>
    %83 = arith.select %81, %77, %82 : vector<128x128xi1>, vector<128x128xf32>
    %84 = arith.addf %73, %83 : vector<128x128xf32>
    %c8 = arith.constant 8 : index
    %c0_40 = arith.constant 0 : index
    %c0_41 = arith.constant 0 : index
    %85 = vector.load %arg3[%c8, %c0_40, %c0_41] : memref<9x128x128xbf16, #tpu.memory_space<vmem>>, vector<1x128x128xbf16>
    %86 = vector.shape_cast %85 : vector<1x128x128xbf16> to vector<128x128xbf16>
    %cst_42 = arith.constant dense<0.000000e+00> : vector<128x128xf32>
    %87 = tpu.matmul %0, %86, %cst_42 {dimension_numbers = #tpu.dot_dimension_numbers<[1], [0], [0], [1], [0, 0, 1, 1], [], []>} : vector<128x128xbf16>, vector<128x128xbf16>, vector<128x128xf32> -> vector<128x128xf32>
    %c124_i32 = arith.constant 124 : i32
    %88 = tpu.dynamic_rotate %87 by %c124_i32 dim 0 : vector<128x128xf32>, i32 -> vector<128x128xf32>
    %c12_i32 = arith.constant 12 : i32
    %89 = vector.broadcast %c12_i32 : i32 to vector<128x1xi32>
    %90 = arith.cmpi slt, %1, %89 : vector<128x1xi32>
    %cst_43 = arith.constant 0.000000e+00 : f32
    %91 = vector.shape_cast %90 : vector<128x1xi1> to vector<128x1xi1>
    %92 = vector.broadcast %91 : vector<128x1xi1> to vector<128x128xi1>
    %93 = vector.broadcast %cst_43 : f32 to vector<128x128xf32>
    %94 = arith.select %92, %88, %93 : vector<128x128xi1>, vector<128x128xf32>
    %95 = arith.addf %84, %94 : vector<128x128xf32>
    %cst_44 = arith.constant 1.000000e-01 : f32
    %96 = vector.broadcast %cst_44 : f32 to vector<128x128xf32>
    %97 = arith.mulf %96, %95 : vector<128x128xf32>
    %98 = arith.maximumf %95, %97 : vector<128x128xf32>
    %99 = arith.truncf %98 : vector<128x128xf32> to vector<128x128xbf16>
    %c1_45 = arith.constant 1 : index
    %c0_46 = arith.constant 0 : index
    %c0_47 = arith.constant 0 : index
    %100 = vector.load %arg5[%c1_45, %c0_46, %c0_47] : memref<3x128x128xbf16, #tpu.memory_space<vmem>>, vector<1x128x128xbf16>
    %101 = vector.shape_cast %100 : vector<1x128x128xbf16> to vector<128x128xbf16>
    %cst_48 = arith.constant dense<0.000000e+00> : vector<128x128xf32>
    %102 = tpu.matmul %99, %101, %cst_48 {dimension_numbers = #tpu.dot_dimension_numbers<[1], [0], [0], [1], [0, 0, 1, 1], [], []>} : vector<128x128xbf16>, vector<128x128xbf16>, vector<128x128xf32> -> vector<128x128xf32>
    %c0_49 = arith.constant 0 : index
    %c0_50 = arith.constant 0 : index
    %103 = vector.load %arg6[%c0_49, %c0_50] : memref<1x128xf32, #tpu.memory_space<vmem>>, vector<1x128xf32>
    %104 = vector.broadcast %103 : vector<1x128xf32> to vector<128x128xf32>
    %105 = arith.addf %102, %104 : vector<128x128xf32>
    %c0_51 = arith.constant 0 : index
    %c0_52 = arith.constant 0 : index
    %c0_53 = arith.constant 0 : index
    %106 = vector.load %arg5[%c0_51, %c0_52, %c0_53] : memref<3x128x128xbf16, #tpu.memory_space<vmem>>, vector<1x128x128xbf16>
    %107 = vector.shape_cast %106 : vector<1x128x128xbf16> to vector<128x128xbf16>
    %cst_54 = arith.constant dense<0.000000e+00> : vector<128x128xf32>
    %108 = tpu.matmul %99, %107, %cst_54 {dimension_numbers = #tpu.dot_dimension_numbers<[1], [0], [0], [1], [0, 0, 1, 1], [], []>} : vector<128x128xbf16>, vector<128x128xbf16>, vector<128x128xf32> -> vector<128x128xf32>
    %c1_i32_55 = arith.constant 1 : i32
    %109 = tpu.dynamic_rotate %108 by %c1_i32_55 dim 0 : vector<128x128xf32>, i32 -> vector<128x128xf32>
    %c1_i32_56 = arith.constant 1 : i32
    %110 = vector.broadcast %c1_i32_56 : i32 to vector<128x1xi32>
    %111 = arith.cmpi sge, %1, %110 : vector<128x1xi32>
    %cst_57 = arith.constant 0.000000e+00 : f32
    %112 = vector.shape_cast %111 : vector<128x1xi1> to vector<128x1xi1>
    %113 = vector.broadcast %112 : vector<128x1xi1> to vector<128x128xi1>
    %114 = vector.broadcast %cst_57 : f32 to vector<128x128xf32>
    %115 = arith.select %113, %109, %114 : vector<128x128xi1>, vector<128x128xf32>
    %116 = arith.addf %105, %115 : vector<128x128xf32>
    %c2_58 = arith.constant 2 : index
    %c0_59 = arith.constant 0 : index
    %c0_60 = arith.constant 0 : index
    %117 = vector.load %arg5[%c2_58, %c0_59, %c0_60] : memref<3x128x128xbf16, #tpu.memory_space<vmem>>, vector<1x128x128xbf16>
    %118 = vector.shape_cast %117 : vector<1x128x128xbf16> to vector<128x128xbf16>
    %cst_61 = arith.constant dense<0.000000e+00> : vector<128x128xf32>
    %119 = tpu.matmul %99, %118, %cst_61 {dimension_numbers = #tpu.dot_dimension_numbers<[1], [0], [0], [1], [0, 0, 1, 1], [], []>} : vector<128x128xbf16>, vector<128x128xbf16>, vector<128x128xf32> -> vector<128x128xf32>
    %c127_i32_62 = arith.constant 127 : i32
    %120 = tpu.dynamic_rotate %119 by %c127_i32_62 dim 0 : vector<128x128xf32>, i32 -> vector<128x128xf32>
    %c15_i32_63 = arith.constant 15 : i32
    %121 = vector.broadcast %c15_i32_63 : i32 to vector<128x1xi32>
    %122 = arith.cmpi slt, %1, %121 : vector<128x1xi32>
    %cst_64 = arith.constant 0.000000e+00 : f32
    %123 = vector.shape_cast %122 : vector<128x1xi1> to vector<128x1xi1>
    %124 = vector.broadcast %123 : vector<128x1xi1> to vector<128x128xi1>
    %125 = vector.broadcast %cst_64 : f32 to vector<128x128xf32>
    %126 = arith.select %124, %120, %125 : vector<128x128xi1>, vector<128x128xf32>
    %127 = arith.addf %116, %126 : vector<128x128xf32>
    %cst_65 = arith.constant 1.000000e-01 : f32
    %128 = vector.broadcast %cst_65 : f32 to vector<128x128xf32>
    %129 = arith.mulf %128, %127 : vector<128x128xf32>
    %130 = arith.maximumf %127, %129 : vector<128x128xf32>
    %131 = vector.shape_cast %130 : vector<128x128xf32> to vector<8x16x128xf32>
    %c0_66 = arith.constant 0 : index
    %c0_67 = arith.constant 0 : index
    %c0_68 = arith.constant 0 : index
    %132 = vector.load %arg7[%c0_66, %c0_67, %c0_68] : memref<1x16x128xf32, #tpu.memory_space<vmem>>, vector<1x16x128xf32>
    %133 = vector.broadcast %132 : vector<1x16x128xf32> to vector<8x16x128xf32>
    %134 = arith.mulf %131, %133 : vector<8x16x128xf32>
    %cst_69 = arith.constant dense<0.000000e+00> : vector<8x16xf32>
    %135 = vector.multi_reduction <add>, %134, %cst_69 [2] : vector<8x16x128xf32> to vector<8x16xf32>
    %cst_70 = arith.constant dense<0.000000e+00> : vector<8xf32>
    %136 = vector.multi_reduction <add>, %135, %cst_70 [1] : vector<8x16xf32> to vector<8xf32>
    %137 = vector.shape_cast %136 : vector<8xf32> to vector<8x1xf32>
    %c0_71 = arith.constant 0 : index
    %c0_72 = arith.constant 0 : index
    %138 = vector.load %arg8[%c0_71, %c0_72] : memref<1x1xf32, #tpu.memory_space<vmem>>, vector<1x1xf32>
    %139 = vector.broadcast %138 : vector<1x1xf32> to vector<8x1xf32>
    %140 = arith.addf %137, %139 : vector<8x1xf32>
    %c0_73 = arith.constant 0 : index
    %c0_74 = arith.constant 0 : index
    %141 = vector.load %arg9[%c0_73, %c0_74] : memref<8x1xf32, #tpu.memory_space<vmem>>, vector<8x1xf32>
    tpu.vector_store %arg9[%c0_73, %c0_74], %140 {strides = array<i32>} : memref<8x1xf32, #tpu.memory_space<vmem>>, vector<8x1xf32>,
    return
  }
  func.func @transform_0(%arg0: i32) -> (i32, i32) {
    %c0_i32 = arith.constant 0 : i32
    %c0_i32_0 = arith.constant 0 : i32
    return %arg0, %c0_i32 : i32, i32
  }
  func.func @transform_1(%arg0: i32) -> (i32, i32) {
    %c0_i32 = arith.constant 0 : i32
    %c0_i32_0 = arith.constant 0 : i32
    return %arg0, %c0_i32 : i32, i32
  }
  func.func @transform_2(%arg0: i32) -> (i32, i32, i32) {
    %c0_i32 = arith.constant 0 : i32
    %c0_i32_0 = arith.constant 0 : i32
    %c0_i32_1 = arith.constant 0 : i32
    %c0_i32_2 = arith.constant 0 : i32
    return %c0_i32, %c0_i32_0, %c0_i32_1 : i32, i32, i32
  }
  func.func @transform_3(%arg0: i32) -> (i32, i32) {
    %c0_i32 = arith.constant 0 : i32
    %c0_i32_0 = arith.constant 0 : i32
    %c0_i32_1 = arith.constant 0 : i32
    return %c0_i32, %c0_i32_0 : i32, i32
  }
  func.func @transform_4(%arg0: i32) -> (i32, i32, i32) {
    %c0_i32 = arith.constant 0 : i32
    %c0_i32_0 = arith.constant 0 : i32
    %c0_i32_1 = arith.constant 0 : i32
    %c0_i32_2 = arith.constant 0 : i32
    return %c0_i32, %c0_i32_0, %c0_i32_1 : i32, i32, i32
  }
  func.func @transform_5(%arg0: i32) -> (i32, i32) {
    %c0_i32 = arith.constant 0 : i32
    %c0_i32_0 = arith.constant 0 : i32
    %c0_i32_1 = arith.constant 0 : i32
    return %c0_i32, %c0_i32_0 : i32, i32
  }
  func.func @transform_6(%arg0: i32) -> (i32, i32, i32) {
    %c0_i32 = arith.constant 0 : i32
    %c0_i32_0 = arith.constant 0 : i32
    %c0_i32_1 = arith.constant 0 : i32
    %c0_i32_2 = arith.constant 0 : i32
    return %c0_i32, %c0_i32_0, %c0_i32_1 : i32, i32, i32
  }
  func.func @transform_7(%arg0: i32) -> (i32, i32) {
    %c0_i32 = arith.constant 0 : i32
    %c0_i32_0 = arith.constant 0 : i32
    %c0_i32_1 = arith.constant 0 : i32
    return %c0_i32, %c0_i32_0 : i32, i32
  }
  func.func @transform_8(%arg0: i32) -> (i32, i32) {
    %c0_i32 = arith.constant 0 : i32
    %c0_i32_0 = arith.constant 0 : i32
    return %arg0, %c0_i32 : i32, i32
  }
}

</mosaic_0001>

<llo_original>
// kernel: tpu_custom_call.1
$region0: #{tpu_custom_call.1}
  #allocation0 [shape = 'u32[]', space=smem, size = 0x4, offset = 0x4, fixed_abs, tag = 'smem constant byte address 0x4 - core index']
  #allocation1 [shape = 'u32[144,128]{1,0:T(1,128)}', space=vmem, size = 0x12000, scoped, tag = 'internal scratch']
  #allocation2 [shape = 'f32[1,1]{1,0:T(1,128)S(1)}', space=vmem, size = 0x200, scoped, tag = 'scoped memory for tpu_custom_call.1']
  %s0 = inlined_call_operand.vmem [shape: bf16[128,128], index: 0, kind: input, shape index: {}]
  %s1 = inlined_call_operand.vmem [shape: s32[128,1], index: 1, kind: input, shape index: {}]
  %s2 = inlined_call_operand.hbm [shape: bf16[9,128,128], index: 2, kind: input, shape index: {}]
  %s3 = inlined_call_operand.vmem [shape: f32[1,128], index: 3, kind: input, shape index: {}]
  %s4 = inlined_call_operand.hbm [shape: bf16[3,128,128], index: 4, kind: input, shape index: {}]
  %s5 = inlined_call_operand.vmem [shape: f32[1,128], index: 5, kind: input, shape index: {}]
  %s6 = inlined_call_operand.vmem [shape: f32[1,16,128], index: 6, kind: input, shape index: {}]
  %s7 = inlined_call_operand.<no memory space> [shape: f32[1,1], index: 7, kind: input, shape index: {}]
  %s8 = inlined_call_operand.vmem [shape: f32[8,1], index: 8, kind: output, shape index: {}]
  %s9 = sld [smem:[#allocation0]]
  $region50: #{tpu_custom_call.1} parent=0
    _
  %s11 = ssub.s32 1, %s9
  %s12 = scalar_select 0, %s11, %s9
  %v13 = vstv %s7
  %14 = vst [vmem:[#allocation2] sm:$0x1] %v13
  $region1: #{tpu_custom_call.1} parent=0
    #allocation3 [shape = 'u8[294912]{0}', space=vmem, size = 0x48000, scoped, tag = 'input window, operand 2, single buffered']
    #allocation4 [shape = 's32[1]{0}', space=sflag, size = 0x4, scoped, tag = 'scoped memory for tpu_custom_call.1']
    #allocation5 [shape = 'u8[98304]{0}', space=vmem, size = 0x18000, scoped, tag = 'input window, operand 4, single buffered']
    #allocation6 [shape = 's32[1]{0}', space=sflag, size = 0x4, scoped, tag = 'scoped memory for tpu_custom_call.1']
    %15 = vsyncpa [#allocation4], 0
    %16 = vsyncpa [#allocation6], 0
    // Predicated region
    $region2: #{tpu_custom_call.1} parent=1 // pred_check
      _
    $region3: #{tpu_custom_call.1} parent=1 // pred_check_branch
      %18 = sbr.rel (0) target = $region5
    $region4: #{tpu_custom_call.1} parent=1 // pred_region
      _
    $region5: #{tpu_custom_call.1} parent=1 // pred_fallthru
      _
    // Predicated region
    $region6: #{tpu_custom_call.1} parent=1 // pred_check
      _
    $region7: #{tpu_custom_call.1} parent=1 // pred_check_branch
      %20 = sbr.rel (0) target = $region9
    $region8: #{tpu_custom_call.1} parent=1 // pred_region
      _
    $region9: #{tpu_custom_call.1} parent=1 // pred_fallthru
      _
    // Predicated region
    $region10: #{tpu_custom_call.1} parent=1 // pred_check
      _
    $region11: #{tpu_custom_call.1} parent=1 // pred_check_branch
      %22 = sbr.rel (0) target = $region13
    $region12: #{tpu_custom_call.1} parent=1 // pred_region
      %s24 = ssub.s32 9216, 9216
      %25 = vsyncadd [#allocation4], %s24
      %s26 = sshll.u32 [#allocation3], 4
      %s27 = int_to_ptr.vmem [resolvable:$true] %s26
      %32 = dma.hbm_to_vmem [thread:$0]  %s2, 9216, %s27, [#allocation4], 64, 64, 4
    $region13: #{tpu_custom_call.1} parent=1 // pred_fallthru
      _
    // Predicated region
    $region14: #{tpu_custom_call.1} parent=1 // pred_check
      _
    $region15: #{tpu_custom_call.1} parent=1 // pred_check_branch
      %34 = sbr.rel (0) target = $region17
    $region16: #{tpu_custom_call.1} parent=1 // pred_region
      _
    $region17: #{tpu_custom_call.1} parent=1 // pred_fallthru
      _
    // Predicated region
    $region18: #{tpu_custom_call.1} parent=1 // pred_check
      _
    $region19: #{tpu_custom_call.1} parent=1 // pred_check_branch
      %36 = sbr.rel (0) target = $region21
    $region20: #{tpu_custom_call.1} parent=1 // pred_region
      %s38 = ssub.s32 3072, 3072
      %39 = vsyncadd [#allocation6], %s38
      %s40 = sshll.u32 [#allocation5], 4
      %s41 = int_to_ptr.vmem [resolvable:$true] %s40
      %46 = dma.hbm_to_vmem [thread:$0]  %s4, 3072, %s41, [#allocation6], 64, 64, 4
    $region21: #{tpu_custom_call.1} parent=1 // pred_fallthru
      _
    // Predicated region
    $region22: #{tpu_custom_call.1} parent=1 // pred_check
      _
    $region23: #{tpu_custom_call.1} parent=1 // pred_check_branch
      %48 = sbr.rel (0) target = $region25
    $region24: #{tpu_custom_call.1} parent=1 // pred_region
      _
    $region25: #{tpu_custom_call.1} parent=1 // pred_fallthru
      _
    // Predicated region
    $region26: #{tpu_custom_call.1} parent=1 // pred_check
      _
    $region27: #{tpu_custom_call.1} parent=1 // pred_check_branch
      %50 = sbr.rel (0) target = $region29
    $region28: #{tpu_custom_call.1} parent=1 // pred_region
      _
    $region29: #{tpu_custom_call.1} parent=1 // pred_fallthru
      _
    // Predicated region
    $region30: #{tpu_custom_call.1} parent=1 // pred_check
      _
    $region31: #{tpu_custom_call.1} parent=1 // pred_check_branch
      %52 = sbr.rel (0) target = $region33
    $region32: #{tpu_custom_call.1} parent=1 // pred_region
      _
    $region33: #{tpu_custom_call.1} parent=1 // pred_fallthru
      _
    // Predicated region
    $region34: #{tpu_custom_call.1} parent=1 // pred_check
      _
    $region35: #{tpu_custom_call.1} parent=1 // pred_check_branch
      %54 = sbr.rel (0) target = $region37
    $region36: #{tpu_custom_call.1} parent=1 // pred_region
      %55 = dma.done [#allocation4], 9216
    $region37: #{tpu_custom_call.1} parent=1 // pred_fallthru
      _
    // Predicated region
    $region38: #{tpu_custom_call.1} parent=1 // pred_check
      _
    $region39: #{tpu_custom_call.1} parent=1 // pred_check_branch
      %57 = sbr.rel (0) target = $region41
    $region40: #{tpu_custom_call.1} parent=1 // pred_region
      %58 = dma.done [#allocation6], 3072
    $region41: #{tpu_custom_call.1} parent=1 // pred_fallthru
      _
    %v60 = vld [vmem:[%s0] sm:$0xf]
    %v61 = vld [vmem:[%s0 + $0x4] sm:$0xf]
    %v62 = vld [vmem:[%s0 + $0x8] sm:$0xf]
    %v63 = vld [vmem:[%s0 + $0xc] sm:$0xf]
    %v64 = vld [vmem:[%s0 + $0x10] sm:$0xf]
    %v65 = vld [vmem:[%s0 + $0x14] sm:$0xf]
    %v66 = vld [vmem:[%s0 + $0x18] sm:$0xf]
    %v67 = vld [vmem:[%s0 + $0x1c] sm:$0xf]
    %v68 = vld [vmem:[%s0 + $0x20] sm:$0xf]
    %v69 = vld [vmem:[%s0 + $0x24] sm:$0xf]
    %v70 = vld [vmem:[%s0 + $0x28] sm:$0xf]
    %v71 = vld [vmem:[%s0 + $0x2c] sm:$0xf]
    %v72 = vld [vmem:[%s0 + $0x30] sm:$0xf]
    %v73 = vld [vmem:[%s0 + $0x34] sm:$0xf]
    %v74 = vld [vmem:[%s0 + $0x38] sm:$0xf]
    %v75 = vld [vmem:[%s0 + $0x3c] sm:$0xf]
    %v76 = vld [vmem:[%s1] sm:$0xff]
    %v77 = vld [vmem:[%s1 + $0x8] sm:$0xff]
    %v78 = vld [vmem:[%s1 + $0x10] sm:$0xff]
    %v79 = vld [vmem:[%s1 + $0x18] sm:$0xff]
    %v80 = vld [vmem:[%s1 + $0x20] sm:$0xff]
    %v81 = vld [vmem:[%s1 + $0x28] sm:$0xff]
    %v82 = vld [vmem:[%s1 + $0x30] sm:$0xff]
    %v83 = vld [vmem:[%s1 + $0x38] sm:$0xff]
    %v84 = vld [vmem:[%s1 + $0x40] sm:$0xff]
    %v85 = vld [vmem:[%s1 + $0x48] sm:$0xff]
    %v86 = vld [vmem:[%s1 + $0x50] sm:$0xff]
    %v87 = vld [vmem:[%s1 + $0x58] sm:$0xff]
    %v88 = vld [vmem:[%s1 + $0x60] sm:$0xff]
    %v89 = vld [vmem:[%s1 + $0x68] sm:$0xff]
    %v90 = vld [vmem:[%s1 + $0x70] sm:$0xff]
    %v91 = vld [vmem:[%s1 + $0x78] sm:$0xff]
    %s92 = scalar_lea.vmem [#allocation3], 256
    %v93 = vld [vmem:[%s92] sm:$0xf]
    %v94 = vld [vmem:[%s92 + $0x4] sm:$0xf]
    %v95 = vld [vmem:[%s92 + $0x8] sm:$0xf]
    %v96 = vld [vmem:[%s92 + $0xc] sm:$0xf]
    %v97 = vld [vmem:[%s92 + $0x10] sm:$0xf]
    %v98 = vld [vmem:[%s92 + $0x14] sm:$0xf]
    %v99 = vld [vmem:[%s92 + $0x18] sm:$0xf]
    %v100 = vld [vmem:[%s92 + $0x1c] sm:$0xf]
    %v101 = vld [vmem:[%s92 + $0x20] sm:$0xf]
    %v102 = vld [vmem:[%s92 + $0x24] sm:$0xf]
    %v103 = vld [vmem:[%s92 + $0x28] sm:$0xf]
    %v104 = vld [vmem:[%s92 + $0x2c] sm:$0xf]
    %v105 = vld [vmem:[%s92 + $0x30] sm:$0xf]
    %v106 = vld [vmem:[%s92 + $0x34] sm:$0xf]
    %v107 = vld [vmem:[%s92 + $0x38] sm:$0xf]
    %v108 = vld [vmem:[%s92 + $0x3c] sm:$0xf]
    %v109 = vld [vmem:[%s3] sm:$0x1]
    %v111 = vlaneseq
    %v112 = vshrl.u32 %v111, 7
    %v113 = vsub.s32 0, %v112
    %v114 = vrot.slane %v109, %v113
    %v132 = vunpack.c.l.b16 %v60
    %v133 = vunpack.c.l.b16 %v61
    %v134 = vunpack.c.l.b16 %v62
    %v135 = vunpack.c.l.b16 %v63
    %v136 = vunpack.c.l.b16 %v64
    %v137 = vunpack.c.l.b16 %v65
    %v138 = vunpack.c.l.b16 %v66
    %v139 = vunpack.c.l.b16 %v67
    %v140 = vunpack.c.l.b16 %v68
    %v141 = vunpack.c.l.b16 %v69
    %v142 = vunpack.c.l.b16 %v70
    %v143 = vunpack.c.l.b16 %v71
    %v144 = vunpack.c.l.b16 %v72
    %v145 = vunpack.c.l.b16 %v73
    %v146 = vunpack.c.l.b16 %v74
    %v147 = vunpack.c.l.b16 %v75
    %v148 = vpack.c.b16 %v133, %v132
    %v149 = vpack.c.b16 %v135, %v134
    %v150 = vpack.c.b16 %v137, %v136
    %v151 = vpack.c.b16 %v139, %v138
    %v152 = vpack.c.b16 %v141, %v140
    %v153 = vpack.c.b16 %v143, %v142
    %v154 = vpack.c.b16 %v145, %v144
    %v155 = vpack.c.b16 %v147, %v146
    %v180 = vunpack.c.l.b16 %v93
    %v181 = vunpack.c.l.b16 %v94
    %v182 = vunpack.c.l.b16 %v95
    %v183 = vunpack.c.l.b16 %v96
    %v184 = vunpack.c.l.b16 %v97
    %v185 = vunpack.c.l.b16 %v98
    %v186 = vunpack.c.l.b16 %v99
    %v187 = vunpack.c.l.b16 %v100
    %v188 = vunpack.c.l.b16 %v101
    %v189 = vunpack.c.l.b16 %v102
    %v190 = vunpack.c.l.b16 %v103
    %v191 = vunpack.c.l.b16 %v104
    %v192 = vunpack.c.l.b16 %v105
    %v193 = vunpack.c.l.b16 %v106
    %v194 = vunpack.c.l.b16 %v107
    %v195 = vunpack.c.l.b16 %v108
    %v196 = vpack.c.b16 %v181, %v180
    %v197 = vpack.c.b16 %v183, %v182
    %v198 = vpack.c.b16 %v185, %v184
    %v199 = vpack.c.b16 %v187, %v186
    %v200 = vpack.c.b16 %v189, %v188
    %v201 = vpack.c.b16 %v191, %v190
    %v202 = vpack.c.b16 %v193, %v192
    %v203 = vpack.c.b16 %v195, %v194
    %212 = vmatprep.subr.bf16.mxu0 0
    %213 = vmatpush1.bf16.msra.mxu0 %v196
    %214 = vmatprep.subr.bf16.mxu0 0
    %215 = vmatpush1.bf16.msra.mxu0 %v197
    %216 = vmatprep.subr.bf16.mxu0 0
    %217 = vmatpush1.bf16.msra.mxu0 %v198
    %218 = vmatprep.subr.bf16.mxu0 0
    %219 = vmatpush1.bf16.msra.mxu0 %v199
    %220 = vmatprep.subr.bf16.mxu0 0
    %221 = vmatpush1.bf16.msra.mxu0 %v200
    %222 = vmatprep.subr.bf16.mxu0 0
    %223 = vmatpush1.bf16.msra.mxu0 %v201
    %224 = vmatprep.subr.bf16.mxu0 0
    %225 = vmatpush1.bf16.msra.mxu0 %v202
    %226 = vmatprep.subr.bf16.mxu0 0
    %227 = vmatpush1.bf16.msra.mxu0 %v203
    %228 = vmatprep.subr.bf16.mxu0 0
    %229 = vmatpush1.bf16.msra.mxu0 0
    %230 = vmatprep.subr.bf16.mxu0 0
    %231 = vmatpush1.bf16.msra.mxu0 0
    %232 = vmatprep.subr.bf16.mxu0 0
    %233 = vmatpush1.bf16.msra.mxu0 0
    %234 = vmatprep.subr.bf16.mxu0 0
    %235 = vmatpush1.bf16.msra.mxu0 0
    %236 = vmatprep.subr.bf16.mxu0 0
    %237 = vmatpush1.bf16.msra.mxu0 0
    %238 = vmatprep.subr.bf16.mxu0 0
    %239 = vmatpush1.bf16.msra.mxu0 0
    %240 = vmatprep.subr.bf16.mxu0 0
    %241 = vmatpush1.bf16.msra.mxu0 0
    %242 = vmatprep.subr.bf16.mxu0 0
    %243 = vmatpush1.bf16.msra.mxu0 0
    %244 = vmatprep.mubr.bf16.mxu0 0
    %245 = vmatmul.mubr.bf16.gmra.mrb[0].mxu0 %v148
    %v246 = vpop.f32.mrb[0].mxu0
    %v247 = vadd.f32 %v114, %v246
    %v248 = vpop.f32.mrb[0].mxu0
    %v249 = vpop.f32.mrb[0].mxu0
    %v250 = vadd.f32 %v114, %v249
    %v251 = vpop.f32.mrb[0].mxu0
    %252 = vmatprep.mubr.bf16.mxu0 0
    %253 = vmatmul.mubr.bf16.gmra.mrb[0].mxu0 %v149
    %v254 = vpop.f32.mrb[0].mxu0
    %v255 = vadd.f32 %v114, %v254
    %v256 = vpop.f32.mrb[0].mxu0
    %v257 = vpop.f32.mrb[0].mxu0
    %v258 = vadd.f32 %v114, %v257
    %v259 = vpop.f32.mrb[0].mxu0
    %260 = vmatprep.mubr.bf16.mxu0 0
    %261 = vmatmul.mubr.bf16.gmra.mrb[0].mxu0 %v150
    %v262 = vpop.f32.mrb[0].mxu0
    %v263 = vadd.f32 %v114, %v262
    %v264 = vpop.f32.mrb[0].mxu0
    %v265 = vpop.f32.mrb[0].mxu0
    %v266 = vadd.f32 %v114, %v265
    %v267 = vpop.f32.mrb[0].mxu0
    %268 = vmatprep.mubr.bf16.mxu0 0
    %269 = vmatmul.mubr.bf16.gmra.mrb[0].mxu0 %v151
    %v270 = vpop.f32.mrb[0].mxu0
    %v271 = vadd.f32 %v114, %v270
    %v272 = vpop.f32.mrb[0].mxu0
    %v273 = vpop.f32.mrb[0].mxu0
    %v274 = vadd.f32 %v114, %v273
    %v275 = vpop.f32.mrb[0].mxu0
    %276 = vmatprep.mubr.bf16.mxu0 0
    %277 = vmatmul.mubr.bf16.gmra.mrb[0].mxu0 %v152
    %v278 = vpop.f32.mrb[0].mxu0
    %v279 = vadd.f32 %v114, %v278
    %v280 = vpop.f32.mrb[0].mxu0
    %v281 = vpop.f32.mrb[0].mxu0
    %v282 = vadd.f32 %v114, %v281
    %v283 = vpop.f32.mrb[0].mxu0
    %284 = vmatprep.mubr.bf16.mxu0 0
    %285 = vmatmul.mubr.bf16.gmra.mrb[0].mxu0 %v153
    %v286 = vpop.f32.mrb[0].mxu0
    %v287 = vadd.f32 %v114, %v286
    %v288 = vpop.f32.mrb[0].mxu0
    %v289 = vpop.f32.mrb[0].mxu0
    %v290 = vadd.f32 %v114, %v289
    %v291 = vpop.f32.mrb[0].mxu0
    %292 = vmatprep.mubr.bf16.mxu0 0
    %293 = vmatmul.mubr.bf16.gmra.mrb[0].mxu0 %v154
    %v294 = vpop.f32.mrb[0].mxu0
    %v295 = vadd.f32 %v114, %v294
    %v296 = vpop.f32.mrb[0].mxu0
    %v297 = vpop.f32.mrb[0].mxu0
    %v298 = vadd.f32 %v114, %v297
    %v299 = vpop.f32.mrb[0].mxu0
    %300 = vmatprep.mubr.bf16.mxu0 0
    %301 = vmatmul.mubr.bf16.gmra.mrb[0].mxu0 %v155
    %v302 = vpop.f32.mrb[0].mxu0
    %v303 = vadd.f32 %v114, %v302
    %v304 = vpop.f32.mrb[0].mxu0
    %v305 = vpop.f32.mrb[0].mxu0
    %v306 = vadd.f32 %v114, %v305
    %v307 = vpop.f32.mrb[0].mxu0
    %308 = vdwg.mxu0
    %v309 = vld [vmem:[#allocation3] sm:$0xf]
    %v310 = vld [vmem:[#allocation3 + $0x4] sm:$0xf]
    %v311 = vld [vmem:[#allocation3 + $0x8] sm:$0xf]
    %v312 = vld [vmem:[#allocation3 + $0xc] sm:$0xf]
    %v313 = vld [vmem:[#allocation3 + $0x10] sm:$0xf]
    %v314 = vld [vmem:[#allocation3 + $0x14] sm:$0xf]
    %v315 = vld [vmem:[#allocation3 + $0x18] sm:$0xf]
    %v316 = vld [vmem:[#allocation3 + $0x1c] sm:$0xf]
    %v317 = vld [vmem:[#allocation3 + $0x20] sm:$0xf]
    %v318 = vld [vmem:[#allocation3 + $0x24] sm:$0xf]
    %v319 = vld [vmem:[#allocation3 + $0x28] sm:$0xf]
    %v320 = vld [vmem:[#allocation3 + $0x2c] sm:$0xf]
    %v321 = vld [vmem:[#allocation3 + $0x30] sm:$0xf]
    %v322 = vld [vmem:[#allocation3 + $0x34] sm:$0xf]
    %v323 = vld [vmem:[#allocation3 + $0x38] sm:$0xf]
    %v324 = vld [vmem:[#allocation3 + $0x3c] sm:$0xf]
    %v341 = vunpack.c.l.b16 %v309
    %v342 = vunpack.c.l.b16 %v310
    %v343 = vunpack.c.l.b16 %v311
    %v344 = vunpack.c.l.b16 %v312
    %v345 = vunpack.c.l.b16 %v313
    %v346 = vunpack.c.l.b16 %v314
    %v347 = vunpack.c.l.b16 %v315
    %v348 = vunpack.c.l.b16 %v316
    %v349 = vunpack.c.l.b16 %v317
    %v350 = vunpack.c.l.b16 %v318
    %v351 = vunpack.c.l.b16 %v319
    %v352 = vunpack.c.l.b16 %v320
    %v353 = vunpack.c.l.b16 %v321
    %v354 = vunpack.c.l.b16 %v322
    %v355 = vunpack.c.l.b16 %v323
    %v356 = vunpack.c.l.b16 %v324
    %v357 = vpack.c.b16 %v342, %v341
    %v358 = vpack.c.b16 %v344, %v343
    %v359 = vpack.c.b16 %v346, %v345
    %v360 = vpack.c.b16 %v348, %v347
    %v361 = vpack.c.b16 %v350, %v349
    %v362 = vpack.c.b16 %v352, %v351
    %v363 = vpack.c.b16 %v354, %v353
    %v364 = vpack.c.b16 %v356, %v355
    %373 = vmatprep.subr.bf16.mxu0 0
    %374 = vmatpush1.bf16.msra.mxu0 %v357
    %375 = vmatprep.subr.bf16.mxu0 0
    %376 = vmatpush1.bf16.msra.mxu0 %v358
    %377 = vmatprep.subr.bf16.mxu0 0
    %378 = vmatpush1.bf16.msra.mxu0 %v359
    %379 = vmatprep.subr.bf16.mxu0 0
    %380 = vmatpush1.bf16.msra.mxu0 %v360
    %381 = vmatprep.subr.bf16.mxu0 0
    %382 = vmatpush1.bf16.msra.mxu0 %v361
    %383 = vmatprep.subr.bf16.mxu0 0
    %384 = vmatpush1.bf16.msra.mxu0 %v362
    %385 = vmatprep.subr.bf16.mxu0 0
    %386 = vmatpush1.bf16.msra.mxu0 %v363
    %387 = vmatprep.subr.bf16.mxu0 0
    %388 = vmatpush1.bf16.msra.mxu0 %v364
    %389 = vmatprep.subr.bf16.mxu0 0
    %390 = vmatpush1.bf16.msra.mxu0 0
    %391 = vmatprep.subr.bf16.mxu0 0
    %392 = vmatpush1.bf16.msra.mxu0 0
    %393 = vmatprep.subr.bf16.mxu0 0
    %394 = vmatpush1.bf16.msra.mxu0 0
    %395 = vmatprep.subr.bf16.mxu0 0
    %396 = vmatpush1.bf16.msra.mxu0 0
    %397 = vmatprep.subr.bf16.mxu0 0
    %398 = vmatpush1.bf16.msra.mxu0 0
    %399 = vmatprep.subr.bf16.mxu0 0
    %400 = vmatpush1.bf16.msra.mxu0 0
    %401 = vmatprep.subr.bf16.mxu0 0
    %402 = vmatpush1.bf16.msra.mxu0 0
    %403 = vmatprep.subr.bf16.mxu0 0
    %404 = vmatpush1.bf16.msra.mxu0 0
    %405 = vmatprep.mubr.bf16.mxu0 0
    %406 = vmatmul.mubr.bf16.gmra.mrb[0].mxu0 %v148
    %v407 = vpop.f32.mrb[0].mxu0
    %v408 = vadd.f32 0.0, %v407
    %v409 = vpop.f32.mrb[0].mxu0
    %v410 = vpop.f32.mrb[0].mxu0
    %v411 = vadd.f32 0.0, %v410
    %v412 = vpop.f32.mrb[0].mxu0
    %413 = vmatprep.mubr.bf16.mxu0 0
    %414 = vmatmul.mubr.bf16.gmra.mrb[0].mxu0 %v149
    %v415 = vpop.f32.mrb[0].mxu0
    %v416 = vadd.f32 0.0, %v415
    %v417 = vpop.f32.mrb[0].mxu0
    %v418 = vpop.f32.mrb[0].mxu0
    %v419 = vadd.f32 0.0, %v418
    %v420 = vpop.f32.mrb[0].mxu0
    %421 = vmatprep.mubr.bf16.mxu0 0
    %422 = vmatmul.mubr.bf16.gmra.mrb[0].mxu0 %v150
    %v423 = vpop.f32.mrb[0].mxu0
    %v424 = vadd.f32 0.0, %v423
    %v425 = vpop.f32.mrb[0].mxu0
    %v426 = vpop.f32.mrb[0].mxu0
    %v427 = vadd.f32 0.0, %v426
    %v428 = vpop.f32.mrb[0].mxu0
    %429 = vmatprep.mubr.bf16.mxu0 0
    %430 = vmatmul.mubr.bf16.gmra.mrb[0].mxu0 %v151
    %v431 = vpop.f32.mrb[0].mxu0
    %v432 = vadd.f32 0.0, %v431
    %v433 = vpop.f32.mrb[0].mxu0
    %v434 = vpop.f32.mrb[0].mxu0
    %v435 = vadd.f32 0.0, %v434
    %v436 = vpop.f32.mrb[0].mxu0
    %437 = vmatprep.mubr.bf16.mxu0 0
    %438 = vmatmul.mubr.bf16.gmra.mrb[0].mxu0 %v152
    %v439 = vpop.f32.mrb[0].mxu0
    %v440 = vadd.f32 0.0, %v439
    %v441 = vpop.f32.mrb[0].mxu0
    %v442 = vpop.f32.mrb[0].mxu0
    %v443 = vadd.f32 0.0, %v442
    %v444 = vpop.f32.mrb[0].mxu0
    %445 = vmatprep.mubr.bf16.mxu0 0
    %446 = vmatmul.mubr.bf16.gmra.mrb[0].mxu0 %v153
    %v447 = vpop.f32.mrb[0].mxu0
    %v448 = vadd.f32 0.0, %v447
    %v449 = vpop.f32.mrb[0].mxu0
    %v450 = vpop.f32.mrb[0].mxu0
    %v451 = vadd.f32 0.0, %v450
    %v452 = vpop.f32.mrb[0].mxu0
    %453 = vmatprep.mubr.bf16.mxu0 0
    %454 = vmatmul.mubr.bf16.gmra.mrb[0].mxu0 %v154
    %v455 = vpop.f32.mrb[0].mxu0
    %v456 = vadd.f32 0.0, %v455
    %v457 = vpop.f32.mrb[0].mxu0
    %v458 = vpop.f32.mrb[0].mxu0
    %v459 = vadd.f32 0.0, %v458
    %v460 = vpop.f32.mrb[0].mxu0
    %461 = vmatprep.mubr.bf16.mxu0 0
    %462 = vmatmul.mubr.bf16.gmra.mrb[0].mxu0 %v155
    %v463 = vpop.f32.mrb[0].mxu0
    %v464 = vadd.f32 0.0, %v463
    %v465 = vpop.f32.mrb[0].mxu0
    %v466 = vpop.f32.mrb[0].mxu0
    %v467 = vadd.f32 0.0, %v466
    %v468 = vpop.f32.mrb[0].mxu0
    %469 = vdwg.mxu0
    %v470 = vrot.slane %v408, 4
    %v471 = vrot.slane %v411, 4
    %v472 = vrot.slane %v416, 4
    %v473 = vrot.slane %v419, 4
    %v474 = vrot.slane %v424, 4
    %v475 = vrot.slane %v427, 4
    %v476 = vrot.slane %v432, 4
    %v477 = vrot.slane %v435, 4
    %v478 = vrot.slane %v440, 4
    %v479 = vrot.slane %v443, 4
    %v480 = vrot.slane %v448, 4
    %v481 = vrot.slane %v451, 4
    %v482 = vrot.slane %v456, 4
    %v483 = vrot.slane %v459, 4
    %v484 = vrot.slane %v464, 4
    %v485 = vrot.slane %v467, 4
    %v486 = vlaneseq
    %v487 = vshrl.u32 %v486, 7
    %vm488 = vcmp.lt.s32.totalorder %v487, 4
    %v489 = vsel %vm488, %v484, %v485
    %v490 = vsel %vm488, %v483, %v484
    %v491 = vsel %vm488, %v482, %v483
    %v492 = vsel %vm488, %v481, %v482
    %v493 = vsel %vm488, %v480, %v481
    %v494 = vsel %vm488, %v479, %v480
    %v495 = vsel %vm488, %v478, %v479
    %v496 = vsel %vm488, %v477, %v478
    %v497 = vsel %vm488, %v476, %v477
    %v498 = vsel %vm488, %v475, %v476
    %v499 = vsel %vm488, %v474, %v475
    %v500 = vsel %vm488, %v473, %v474
    %v501 = vsel %vm488, %v472, %v473
    %v502 = vsel %vm488, %v471, %v472
    %v503 = vsel %vm488, %v470, %v471
    %v504 = vsel %vm488, %v485, %v470
    %vm505 = vcmp.ge.s32.totalorder %v76, 4
    %vm506 = vcmp.ge.s32.totalorder %v77, 4
    %vm507 = vcmp.ge.s32.totalorder %v78, 4
    %vm508 = vcmp.ge.s32.totalorder %v79, 4
    %vm509 = vcmp.ge.s32.totalorder %v80, 4
    %vm510 = vcmp.ge.s32.totalorder %v81, 4
    %vm511 = vcmp.ge.s32.totalorder %v82, 4
    %vm512 = vcmp.ge.s32.totalorder %v83, 4
    %vm513 = vcmp.ge.s32.totalorder %v84, 4
    %vm514 = vcmp.ge.s32.totalorder %v85, 4
    %vm515 = vcmp.ge.s32.totalorder %v86, 4
    %vm516 = vcmp.ge.s32.totalorder %v87, 4
    %vm517 = vcmp.ge.s32.totalorder %v88, 4
    %vm518 = vcmp.ge.s32.totalorder %v89, 4
    %vm519 = vcmp.ge.s32.totalorder %v90, 4
    %vm520 = vcmp.ge.s32.totalorder %v91, 4
    %v521 = vsel %vm505, 1, 0
    %v522 = vsel %vm506, 1, 0
    %v523 = vsel %vm507, 1, 0
    %v524 = vsel %vm508, 1, 0
    %v525 = vsel %vm509, 1, 0
    %v526 = vsel %vm510, 1, 0
    %v527 = vsel %vm511, 1, 0
    %v528 = vsel %vm512, 1, 0
    %v529 = vsel %vm513, 1, 0
    %v530 = vsel %vm514, 1, 0
    %v531 = vsel %vm515, 1, 0
    %v532 = vsel %vm516, 1, 0
    %v533 = vsel %vm517, 1, 0
    %v534 = vsel %vm518, 1, 0
    %v535 = vsel %vm519, 1, 0
    %v536 = vsel %vm520, 1, 0
    %537 = vset.pattern.permute.xlu0 0
    %538 = vperm.xlu0 %537, %v521
    %v539 = vpop.permute.xlu0 %538
    %540 = vset.pattern.permute.xlu0 0
    %541 = vperm.xlu0 %540, %v522
    %v542 = vpop.permute.xlu0 %541
    %543 = vset.pattern.permute.xlu0 0
    %544 = vperm.xlu0 %543, %v523
    %v545 = vpop.permute.xlu0 %544
    %546 = vset.pattern.permute.xlu0 0
    %547 = vperm.xlu0 %546, %v524
    %v548 = vpop.permute.xlu0 %547
    %549 = vset.pattern.permute.xlu0 0
    %550 = vperm.xlu0 %549, %v525
    %v551 = vpop.permute.xlu0 %550
    %552 = vset.pattern.permute.xlu0 0
    %553 = vperm.xlu0 %552, %v526
    %v554 = vpop.permute.xlu0 %553
    %555 = vset.pattern.permute.xlu0 0
    %556 = vperm.xlu0 %555, %v527
    %v557 = vpop.permute.xlu0 %556
    %558 = vset.pattern.permute.xlu0 0
    %559 = vperm.xlu0 %558, %v528
    %v560 = vpop.permute.xlu0 %559
    %561 = vset.pattern.permute.xlu0 0
    %562 = vperm.xlu0 %561, %v529
    %v563 = vpop.permute.xlu0 %562
    %564 = vset.pattern.permute.xlu0 0
    %565 = vperm.xlu0 %564, %v530
    %v566 = vpop.permute.xlu0 %565
    %567 = vset.pattern.permute.xlu0 0
    %568 = vperm.xlu0 %567, %v531
    %v569 = vpop.permute.xlu0 %568
    %570 = vset.pattern.permute.xlu0 0
    %571 = vperm.xlu0 %570, %v532
    %v572 = vpop.permute.xlu0 %571
    %573 = vset.pattern.permute.xlu0 0
    %574 = vperm.xlu0 %573, %v533
    %v575 = vpop.permute.xlu0 %574
    %576 = vset.pattern.permute.xlu0 0
    %577 = vperm.xlu0 %576, %v534
    %v578 = vpop.permute.xlu0 %577
    %579 = vset.pattern.permute.xlu0 0
    %580 = vperm.xlu0 %579, %v535
    %v581 = vpop.permute.xlu0 %580
    %582 = vset.pattern.permute.xlu0 0
    %583 = vperm.xlu0 %582, %v536
    %v584 = vpop.permute.xlu0 %583
    %vm585 = vcmp.eq.s32.totalorder %v539, 1
    %vm586 = vcmp.eq.s32.totalorder %v542, 1
    %vm587 = vcmp.eq.s32.totalorder %v545, 1
    %vm588 = vcmp.eq.s32.totalorder %v548, 1
    %vm589 = vcmp.eq.s32.totalorder %v551, 1
    %vm590 = vcmp.eq.s32.totalorder %v554, 1
    %vm591 = vcmp.eq.s32.totalorder %v557, 1
    %vm592 = vcmp.eq.s32.totalorder %v560, 1
    %vm593 = vcmp.eq.s32.totalorder %v563, 1
    %vm594 = vcmp.eq.s32.totalorder %v566, 1
    %vm595 = vcmp.eq.s32.totalorder %v569, 1
    %vm596 = vcmp.eq.s32.totalorder %v572, 1
    %vm597 = vcmp.eq.s32.totalorder %v575, 1
    %vm598 = vcmp.eq.s32.totalorder %v578, 1
    %vm599 = vcmp.eq.s32.totalorder %v581, 1
    %vm600 = vcmp.eq.s32.totalorder %v584, 1
    %v601 = vsel %vm585, %v504, 0.0
    %v602 = vsel %vm586, %v503, 0.0
    %v603 = vsel %vm587, %v502, 0.0
    %v604 = vsel %vm588, %v501, 0.0
    %v605 = vsel %vm589, %v500, 0.0
    %v606 = vsel %vm590, %v499, 0.0
    %v607 = vsel %vm591, %v498, 0.0
    %v608 = vsel %vm592, %v497, 0.0
    %v609 = vsel %vm593, %v496, 0.0
    %v610 = vsel %vm594, %v495, 0.0
    %v611 = vsel %vm595, %v494, 0.0
    %v612 = vsel %vm596, %v493, 0.0
    %v613 = vsel %vm597, %v492, 0.0
    %v614 = vsel %vm598, %v491, 0.0
    %v615 = vsel %vm599, %v490, 0.0
    %v616 = vsel %vm600, %v489, 0.0
    %v617 = vadd.f32 %v247, %v601
    %v618 = vadd.f32 %v250, %v602
    %v619 = vadd.f32 %v255, %v603
    %v620 = vadd.f32 %v258, %v604
    %v621 = vadd.f32 %v263, %v605
    %v622 = vadd.f32 %v266, %v606
    %v623 = vadd.f32 %v271, %v607
    %v624 = vadd.f32 %v274, %v608
    %v625 = vadd.f32 %v279, %v609
    %v626 = vadd.f32 %v282, %v610
    %v627 = vadd.f32 %v287, %v611
    %v628 = vadd.f32 %v290, %v612
    %v629 = vadd.f32 %v295, %v613
    %v630 = vadd.f32 %v298, %v614
    %v631 = vadd.f32 %v303, %v615
    %v632 = vadd.f32 %v306, %v616
    %s633 = scalar_lea.vmem [#allocation3], 64
    %v634 = vld [vmem:[%s633] sm:$0xf]
    %v635 = vld [vmem:[%s633 + $0x4] sm:$0xf]
    %v636 = vld [vmem:[%s633 + $0x8] sm:$0xf]
    %v637 = vld [vmem:[%s633 + $0xc] sm:$0xf]
    %v638 = vld [vmem:[%s633 + $0x10] sm:$0xf]
    %v639 = vld [vmem:[%s633 + $0x14] sm:$0xf]
    %v640 = vld [vmem:[%s633 + $0x18] sm:$0xf]
    %v641 = vld [vmem:[%s633 + $0x1c] sm:$0xf]
    %v642 = vld [vmem:[%s633 + $0x20] sm:$0xf]
    %v643 = vld [vmem:[%s633 + $0x24] sm:$0xf]
    %v644 = vld [vmem:[%s633 + $0x28] sm:$0xf]
    %v645 = vld [vmem:[%s633 + $0x2c] sm:$0xf]
    %v646 = vld [vmem:[%s633 + $0x30] sm:$0xf]
    %v647 = vld [vmem:[%s633 + $0x34] sm:$0xf]
    %v648 = vld [vmem:[%s633 + $0x38] sm:$0xf]
    %v649 = vld [vmem:[%s633 + $0x3c] sm:$0xf]
    %v666 = vunpack.c.l.b16 %v634
    %v667 = vunpack.c.l.b16 %v635
    %v668 = vunpack.c.l.b16 %v636
    %v669 = vunpack.c.l.b16 %v637
    %v670 = vunpack.c.l.b16 %v638
    %v671 = vunpack.c.l.b16 %v639
    %v672 = vunpack.c.l.b16 %v640
    %v673 = vunpack.c.l.b16 %v641
    %v674 = vunpack.c.l.b16 %v642
    %v675 = vunpack.c.l.b16 %v643
    %v676 = vunpack.c.l.b16 %v644
    %v677 = vunpack.c.l.b16 %v645
    %v678 = vunpack.c.l.b16 %v646
    %v679 = vunpack.c.l.b16 %v647
    %v680 = vunpack.c.l.b16 %v648
    %v681 = vunpack.c.l.b16 %v649
    %v682 = vpack.c.b16 %v667, %v666
    %v683 = vpack.c.b16 %v669, %v668
    %v684 = vpack.c.b16 %v671, %v670
    %v685 = vpack.c.b16 %v673, %v672
    %v686 = vpack.c.b16 %v675, %v674
    %v687 = vpack.c.b16 %v677, %v676
    %v688 = vpack.c.b16 %v679, %v678
    %v689 = vpack.c.b16 %v681, %v680
    %698 = vmatprep.subr.bf16.mxu0 0
    %699 = vmatpush1.bf16.msra.mxu0 %v682
    %700 = vmatprep.subr.bf16.mxu0 0
    %701 = vmatpush1.bf16.msra.mxu0 %v683
    %702 = vmatprep.subr.bf16.mxu0 0
    %703 = vmatpush1.bf16.msra.mxu0 %v684
    %704 = vmatprep.subr.bf16.mxu0 0
    %705 = vmatpush1.bf16.msra.mxu0 %v685
    %706 = vmatprep.subr.bf16.mxu0 0
    %707 = vmatpush1.bf16.msra.mxu0 %v686
    %708 = vmatprep.subr.bf16.mxu0 0
    %709 = vmatpush1.bf16.msra.mxu0 %v687
    %710 = vmatprep.subr.bf16.mxu0 0
    %711 = vmatpush1.bf16.msra.mxu0 %v688
    %712 = vmatprep.subr.bf16.mxu0 0
    %713 = vmatpush1.bf16.msra.mxu0 %v689
    %714 = vmatprep.subr.bf16.mxu0 0
    %715 = vmatpush1.bf16.msra.mxu0 0
    %716 = vmatprep.subr.bf16.mxu0 0
    %717 = vmatpush1.bf16.msra.mxu0 0
    %718 = vmatprep.subr.bf16.mxu0 0
    %719 = vmatpush1.bf16.msra.mxu0 0
    %720 = vmatprep.subr.bf16.mxu0 0
    %721 = vmatpush1.bf16.msra.mxu0 0
    %722 = vmatprep.subr.bf16.mxu0 0
    %723 = vmatpush1.bf16.msra.mxu0 0
    %724 = vmatprep.subr.bf16.mxu0 0
    %725 = vmatpush1.bf16.msra.mxu0 0
    %726 = vmatprep.subr.bf16.mxu0 0
    %727 = vmatpush1.bf16.msra.mxu0 0
    %728 = vmatprep.subr.bf16.mxu0 0
    %729 = vmatpush1.bf16.msra.mxu0 0
    %730 = vmatprep.mubr.bf16.mxu0 0
    %731 = vmatmul.mubr.bf16.gmra.mrb[0].mxu0 %v148
    %v732 = vpop.f32.mrb[0].mxu0
    %v733 = vadd.f32 0.0, %v732
    %v734 = vpop.f32.mrb[0].mxu0
    %v735 = vpop.f32.mrb[0].mxu0
    %v736 = vadd.f32 0.0, %v735
    %v737 = vpop.f32.mrb[0].mxu0
    %738 = vmatprep.mubr.bf16.mxu0 0
    %739 = vmatmul.mubr.bf16.gmra.mrb[0].mxu0 %v149
    %v740 = vpop.f32.mrb[0].mxu0
    %v741 = vadd.f32 0.0, %v740
    %v742 = vpop.f32.mrb[0].mxu0
    %v743 = vpop.f32.mrb[0].mxu0
    %v744 = vadd.f32 0.0, %v743
    %v745 = vpop.f32.mrb[0].mxu0
    %746 = vmatprep.mubr.bf16.mxu0 0
    %747 = vmatmul.mubr.bf16.gmra.mrb[0].mxu0 %v150
    %v748 = vpop.f32.mrb[0].mxu0
    %v749 = vadd.f32 0.0, %v748
    %v750 = vpop.f32.mrb[0].mxu0
    %v751 = vpop.f32.mrb[0].mxu0
    %v752 = vadd.f32 0.0, %v751
    %v753 = vpop.f32.mrb[0].mxu0
    %754 = vmatprep.mubr.bf16.mxu0 0
    %755 = vmatmul.mubr.bf16.gmra.mrb[0].mxu0 %v151
    %v756 = vpop.f32.mrb[0].mxu0
    %v757 = vadd.f32 0.0, %v756
    %v758 = vpop.f32.mrb[0].mxu0
    %v759 = vpop.f32.mrb[0].mxu0
    %v760 = vadd.f32 0.0, %v759
    %v761 = vpop.f32.mrb[0].mxu0
    %762 = vmatprep.mubr.bf16.mxu0 0
    %763 = vmatmul.mubr.bf16.gmra.mrb[0].mxu0 %v152
    %v764 = vpop.f32.mrb[0].mxu0
    %v765 = vadd.f32 0.0, %v764
    %v766 = vpop.f32.mrb[0].mxu0
    %v767 = vpop.f32.mrb[0].mxu0
    %v768 = vadd.f32 0.0, %v767
    %v769 = vpop.f32.mrb[0].mxu0
    %770 = vmatprep.mubr.bf16.mxu0 0
    %771 = vmatmul.mubr.bf16.gmra.mrb[0].mxu0 %v153
    %v772 = vpop.f32.mrb[0].mxu0
    %v773 = vadd.f32 0.0, %v772
    %v774 = vpop.f32.mrb[0].mxu0
    %v775 = vpop.f32.mrb[0].mxu0
    %v776 = vadd.f32 0.0, %v775
    %v777 = vpop.f32.mrb[0].mxu0
    %778 = vmatprep.mubr.bf16.mxu0 0
    %779 = vmatmul.mubr.bf16.gmra.mrb[0].mxu0 %v154
    %v780 = vpop.f32.mrb[0].mxu0
    %v781 = vadd.f32 0.0, %v780
    %v782 = vpop.f32.mrb[0].mxu0
    %v783 = vpop.f32.mrb[0].mxu0
    %v784 = vadd.f32 0.0, %v783
    %v785 = vpop.f32.mrb[0].mxu0
    %786 = vmatprep.mubr.bf16.mxu0 0
    %787 = vmatmul.mubr.bf16.gmra.mrb[0].mxu0 %v155
    %v788 = vpop.f32.mrb[0].mxu0
    %v789 = vadd.f32 0.0, %v788
    %v790 = vpop.f32.mrb[0].mxu0
    %v791 = vpop.f32.mrb[0].mxu0
    %v792 = vadd.f32 0.0, %v791
    %v793 = vpop.f32.mrb[0].mxu0
    %794 = vdwg.mxu0
    %v795 = vrot.slane %v733, 5
    %v796 = vrot.slane %v736, 5
    %v797 = vrot.slane %v741, 5
    %v798 = vrot.slane %v744, 5
    %v799 = vrot.slane %v749, 5
    %v800 = vrot.slane %v752, 5
    %v801 = vrot.slane %v757, 5
    %v802 = vrot.slane %v760, 5
    %v803 = vrot.slane %v765, 5
    %v804 = vrot.slane %v768, 5
    %v805 = vrot.slane %v773, 5
    %v806 = vrot.slane %v776, 5
    %v807 = vrot.slane %v781, 5
    %v808 = vrot.slane %v784, 5
    %v809 = vrot.slane %v789, 5
    %v810 = vrot.slane %v792, 5
    %vm811 = vcmp.lt.s32.totalorder %v487, 3
    %v812 = vsel %vm811, %v809, %v810
    %v813 = vsel %vm811, %v808, %v809
    %v814 = vsel %vm811, %v807, %v808
    %v815 = vsel %vm811, %v806, %v807
    %v816 = vsel %vm811, %v805, %v806
    %v817 = vsel %vm811, %v804, %v805
    %v818 = vsel %vm811, %v803, %v804
    %v819 = vsel %vm811, %v802, %v803
    %v820 = vsel %vm811, %v801, %v802
    %v821 = vsel %vm811, %v800, %v801
    %v822 = vsel %vm811, %v799, %v800
    %v823 = vsel %vm811, %v798, %v799
    %v824 = vsel %vm811, %v797, %v798
    %v825 = vsel %vm811, %v796, %v797
    %v826 = vsel %vm811, %v795, %v796
    %v827 = vsel %vm811, %v810, %v795
    %vm828 = vcmp.ge.s32.totalorder %v76, 3
    %vm829 = vcmp.ge.s32.totalorder %v77, 3
    %vm830 = vcmp.ge.s32.totalorder %v78, 3
    %vm831 = vcmp.ge.s32.totalorder %v79, 3
    %vm832 = vcmp.ge.s32.totalorder %v80, 3
    %vm833 = vcmp.ge.s32.totalorder %v81, 3
    %vm834 = vcmp.ge.s32.totalorder %v82, 3
    %vm835 = vcmp.ge.s32.totalorder %v83, 3
    %vm836 = vcmp.ge.s32.totalorder %v84, 3
    %vm837 = vcmp.ge.s32.totalorder %v85, 3
    %vm838 = vcmp.ge.s32.totalorder %v86, 3
    %vm839 = vcmp.ge.s32.totalorder %v87, 3
    %vm840 = vcmp.ge.s32.totalorder %v88, 3
    %vm841 = vcmp.ge.s32.totalorder %v89, 3
    %vm842 = vcmp.ge.s32.totalorder %v90, 3
    %vm843 = vcmp.ge.s32.totalorder %v91, 3
    %v844 = vsel %vm828, 1, 0
    %v845 = vsel %vm829, 1, 0
    %v846 = vsel %vm830, 1, 0
    %v847 = vsel %vm831, 1, 0
    %v848 = vsel %vm832, 1, 0
    %v849 = vsel %vm833, 1, 0
    %v850 = vsel %vm834, 1, 0
    %v851 = vsel %vm835, 1, 0
    %v852 = vsel %vm836, 1, 0
    %v853 = vsel %vm837, 1, 0
    %v854 = vsel %vm838, 1, 0
    %v855 = vsel %vm839, 1, 0
    %v856 = vsel %vm840, 1, 0
    %v857 = vsel %vm841, 1, 0
    %v858 = vsel %vm842, 1, 0
    %v859 = vsel %vm843, 1, 0
    %860 = vset.pattern.permute.xlu0 0
    %861 = vperm.xlu0 %860, %v844
    %v862 = vpop.permute.xlu0 %861
    %863 = vset.pattern.permute.xlu0 0
    %864 = vperm.xlu0 %863, %v845
    %v865 = vpop.permute.xlu0 %864
    %866 = vset.pattern.permute.xlu0 0
    %867 = vperm.xlu0 %866, %v846
    %v868 = vpop.permute.xlu0 %867
    %869 = vset.pattern.permute.xlu0 0
    %870 = vperm.xlu0 %869, %v847
    %v871 = vpop.permute.xlu0 %870
    %872 = vset.pattern.permute.xlu0 0
    %873 = vperm.xlu0 %872, %v848
    %v874 = vpop.permute.xlu0 %873
    %875 = vset.pattern.permute.xlu0 0
    %876 = vperm.xlu0 %875, %v849
    %v877 = vpop.permute.xlu0 %876
    %878 = vset.pattern.permute.xlu0 0
    %879 = vperm.xlu0 %878, %v850
    %v880 = vpop.permute.xlu0 %879
    %881 = vset.pattern.permute.xlu0 0
    %882 = vperm.xlu0 %881, %v851
    %v883 = vpop.permute.xlu0 %882
    %884 = vset.pattern.permute.xlu0 0
    %885 = vperm.xlu0 %884, %v852
    %v886 = vpop.permute.xlu0 %885
    %887 = vset.pattern.permute.xlu0 0
    %888 = vperm.xlu0 %887, %v853
    %v889 = vpop.permute.xlu0 %888
    %890 = vset.pattern.permute.xlu0 0
    %891 = vperm.xlu0 %890, %v854
    %v892 = vpop.permute.xlu0 %891
    %893 = vset.pattern.permute.xlu0 0
    %894 = vperm.xlu0 %893, %v855
    %v895 = vpop.permute.xlu0 %894
    %896 = vset.pattern.permute.xlu0 0
    %897 = vperm.xlu0 %896, %v856
    %v898 = vpop.permute.xlu0 %897
    %899 = vset.pattern.permute.xlu0 0
    %900 = vperm.xlu0 %899, %v857
    %v901 = vpop.permute.xlu0 %900
    %902 = vset.pattern.permute.xlu0 0
    %903 = vperm.xlu0 %902, %v858
    %v904 = vpop.permute.xlu0 %903
    %905 = vset.pattern.permute.xlu0 0
    %906 = vperm.xlu0 %905, %v859
    %v907 = vpop.permute.xlu0 %906
    %vm908 = vcmp.eq.s32.totalorder %v862, 1
    %vm909 = vcmp.eq.s32.totalorder %v865, 1
    %vm910 = vcmp.eq.s32.totalorder %v868, 1
    %vm911 = vcmp.eq.s32.totalorder %v871, 1
    %vm912 = vcmp.eq.s32.totalorder %v874, 1
    %vm913 = vcmp.eq.s32.totalorder %v877, 1
    %vm914 = vcmp.eq.s32.totalorder %v880, 1
    %vm915 = vcmp.eq.s32.totalorder %v883, 1
    %vm916 = vcmp.eq.s32.totalorder %v886, 1
    %vm917 = vcmp.eq.s32.totalorder %v889, 1
    %vm918 = vcmp.eq.s32.totalorder %v892, 1
    %vm919 = vcmp.eq.s32.totalorder %v895, 1
    %vm920 = vcmp.eq.s32.totalorder %v898, 1
    %vm921 = vcmp.eq.s32.totalorder %v901, 1
    %vm922 = vcmp.eq.s32.totalorder %v904, 1
    %vm923 = vcmp.eq.s32.totalorder %v907, 1
    %v924 = vsel %vm908, %v827, 0.0
    %v925 = vsel %vm909, %v826, 0.0
    %v926 = vsel %vm910, %v825, 0.0
    %v927 = vsel %vm911, %v824, 0.0
    %v928 = vsel %vm912, %v823, 0.0
    %v929 = vsel %vm913, %v822, 0.0
    %v930 = vsel %vm914, %v821, 0.0
    %v931 = vsel %vm915, %v820, 0.0
    %v932 = vsel %vm916, %v819, 0.0
    %v933 = vsel %vm917, %v818, 0.0
    %v934 = vsel %vm918, %v817, 0.0
    %v935 = vsel %vm919, %v816, 0.0
    %v936 = vsel %vm920, %v815, 0.0
    %v937 = vsel %vm921, %v814, 0.0
    %v938 = vsel %vm922, %v813, 0.0
    %v939 = vsel %vm923, %v812, 0.0
    %v940 = vadd.f32 %v617, %v924
    %v941 = vadd.f32 %v618, %v925
    %v942 = vadd.f32 %v619, %v926
    %v943 = vadd.f32 %v620, %v927
    %v944 = vadd.f32 %v621, %v928
    %v945 = vadd.f32 %v622, %v929
    %v946 = vadd.f32 %v623, %v930
    %v947 = vadd.f32 %v624, %v931
    %v948 = vadd.f32 %v625, %v932
    %v949 = vadd.f32 %v626, %v933
    %v950 = vadd.f32 %v627, %v934
    %v951 = vadd.f32 %v628, %v935
    %v952 = vadd.f32 %v629, %v936
    %v953 = vadd.f32 %v630, %v937
    %v954 = vadd.f32 %v631, %v938
    %v955 = vadd.f32 %v632, %v939
    %s956 = scalar_lea.vmem [#allocation3], 128
    %v957 = vld [vmem:[%s956] sm:$0xf]
    %v958 = vld [vmem:[%s956 + $0x4] sm:$0xf]
    %v959 = vld [vmem:[%s956 + $0x8] sm:$0xf]
    %v960 = vld [vmem:[%s956 + $0xc] sm:$0xf]
    %v961 = vld [vmem:[%s956 + $0x10] sm:$0xf]
    %v962 = vld [vmem:[%s956 + $0x14] sm:$0xf]
    %v963 = vld [vmem:[%s956 + $0x18] sm:$0xf]
    %v964 = vld [vmem:[%s956 + $0x1c] sm:$0xf]
    %v965 = vld [vmem:[%s956 + $0x20] sm:$0xf]
    %v966 = vld [vmem:[%s956 + $0x24] sm:$0xf]
    %v967 = vld [vmem:[%s956 + $0x28] sm:$0xf]
    %v968 = vld [vmem:[%s956 + $0x2c] sm:$0xf]
    %v969 = vld [vmem:[%s956 + $0x30] sm:$0xf]
    %v970 = vld [vmem:[%s956 + $0x34] sm:$0xf]
    %v971 = vld [vmem:[%s956 + $0x38] sm:$0xf]
    %v972 = vld [vmem:[%s956 + $0x3c] sm:$0xf]
    %v989 = vunpack.c.l.b16 %v957
    %v990 = vunpack.c.l.b16 %v958
    %v991 = vunpack.c.l.b16 %v959
    %v992 = vunpack.c.l.b16 %v960
    %v993 = vunpack.c.l.b16 %v961
    %v994 = vunpack.c.l.b16 %v962
    %v995 = vunpack.c.l.b16 %v963
    %v996 = vunpack.c.l.b16 %v964
    %v997 = vunpack.c.l.b16 %v965
    %v998 = vunpack.c.l.b16 %v966
    %v999 = vunpack.c.l.b16 %v967
    %v1000 = vunpack.c.l.b16 %v968
    %v1001 = vunpack.c.l.b16 %v969
    %v1002 = vunpack.c.l.b16 %v970
    %v1003 = vunpack.c.l.b16 %v971
    %v1004 = vunpack.c.l.b16 %v972
    %v1005 = vpack.c.b16 %v990, %v989
    %v1006 = vpack.c.b16 %v992, %v991
    %v1007 = vpack.c.b16 %v994, %v993
    %v1008 = vpack.c.b16 %v996, %v995
    %v1009 = vpack.c.b16 %v998, %v997
    %v1010 = vpack.c.b16 %v1000, %v999
    %v1011 = vpack.c.b16 %v1002, %v1001
    %v1012 = vpack.c.b16 %v1004, %v1003
    %1021 = vmatprep.subr.bf16.mxu0 0
    %1022 = vmatpush1.bf16.msra.mxu0 %v1005
    %1023 = vmatprep.subr.bf16.mxu0 0
    %1024 = vmatpush1.bf16.msra.mxu0 %v1006
    %1025 = vmatprep.subr.bf16.mxu0 0
    %1026 = vmatpush1.bf16.msra.mxu0 %v1007
    %1027 = vmatprep.subr.bf16.mxu0 0
    %1028 = vmatpush1.bf16.msra.mxu0 %v1008
    %1029 = vmatprep.subr.bf16.mxu0 0
    %1030 = vmatpush1.bf16.msra.mxu0 %v1009
    %1031 = vmatprep.subr.bf16.mxu0 0
    %1032 = vmatpush1.bf16.msra.mxu0 %v1010
    %1033 = vmatprep.subr.bf16.mxu0 0
    %1034 = vmatpush1.bf16.msra.mxu0 %v1011
    %1035 = vmatprep.subr.bf16.mxu0 0
    %1036 = vmatpush1.bf16.msra.mxu0 %v1012
    %1037 = vmatprep.subr.bf16.mxu0 0
    %1038 = vmatpush1.bf16.msra.mxu0 0
    %1039 = vmatprep.subr.bf16.mxu0 0
    %1040 = vmatpush1.bf16.msra.mxu0 0
    %1041 = vmatprep.subr.bf16.mxu0 0
    %1042 = vmatpush1.bf16.msra.mxu0 0
    %1043 = vmatprep.subr.bf16.mxu0 0
    %1044 = vmatpush1.bf16.msra.mxu0 0
    %1045 = vmatprep.subr.bf16.mxu0 0
    %1046 = vmatpush1.bf16.msra.mxu0 0
    %1047 = vmatprep.subr.bf16.mxu0 0
    %1048 = vmatpush1.bf16.msra.mxu0 0
    %1049 = vmatprep.subr.bf16.mxu0 0
    %1050 = vmatpush1.bf16.msra.mxu0 0
    %1051 = vmatprep.subr.bf16.mxu0 0
    %1052 = vmatpush1.bf16.msra.mxu0 0
    %1053 = vmatprep.mubr.bf16.mxu0 0
    %1054 = vmatmul.mubr.bf16.gmra.mrb[0].mxu0 %v148
    %v1055 = vpop.f32.mrb[0].mxu0
    %v1056 = vadd.f32 0.0, %v1055
    %v1057 = vpop.f32.mrb[0].mxu0
    %v1058 = vpop.f32.mrb[0].mxu0
    %v1059 = vadd.f32 0.0, %v1058
    %v1060 = vpop.f32.mrb[0].mxu0
    %1061 = vmatprep.mubr.bf16.mxu0 0
    %1062 = vmatmul.mubr.bf16.gmra.mrb[0].mxu0 %v149
    %v1063 = vpop.f32.mrb[0].mxu0
    %v1064 = vadd.f32 0.0, %v1063
    %v1065 = vpop.f32.mrb[0].mxu0
    %v1066 = vpop.f32.mrb[0].mxu0
    %v1067 = vadd.f32 0.0, %v1066
    %v1068 = vpop.f32.mrb[0].mxu0
    %1069 = vmatprep.mubr.bf16.mxu0 0
    %1070 = vmatmul.mubr.bf16.gmra.mrb[0].mxu0 %v150
    %v1071 = vpop.f32.mrb[0].mxu0
    %v1072 = vadd.f32 0.0, %v1071
    %v1073 = vpop.f32.mrb[0].mxu0
    %v1074 = vpop.f32.mrb[0].mxu0
    %v1075 = vadd.f32 0.0, %v1074
    %v1076 = vpop.f32.mrb[0].mxu0
    %1077 = vmatprep.mubr.bf16.mxu0 0
    %1078 = vmatmul.mubr.bf16.gmra.mrb[0].mxu0 %v151
    %v1079 = vpop.f32.mrb[0].mxu0
    %v1080 = vadd.f32 0.0, %v1079
    %v1081 = vpop.f32.mrb[0].mxu0
    %v1082 = vpop.f32.mrb[0].mxu0
    %v1083 = vadd.f32 0.0, %v1082
    %v1084 = vpop.f32.mrb[0].mxu0
    %1085 = vmatprep.mubr.bf16.mxu0 0
    %1086 = vmatmul.mubr.bf16.gmra.mrb[0].mxu0 %v152
    %v1087 = vpop.f32.mrb[0].mxu0
    %v1088 = vadd.f32 0.0, %v1087
    %v1089 = vpop.f32.mrb[0].mxu0
    %v1090 = vpop.f32.mrb[0].mxu0
    %v1091 = vadd.f32 0.0, %v1090
    %v1092 = vpop.f32.mrb[0].mxu0
    %1093 = vmatprep.mubr.bf16.mxu0 0
    %1094 = vmatmul.mubr.bf16.gmra.mrb[0].mxu0 %v153
    %v1095 = vpop.f32.mrb[0].mxu0
    %v1096 = vadd.f32 0.0, %v1095
    %v1097 = vpop.f32.mrb[0].mxu0
    %v1098 = vpop.f32.mrb[0].mxu0
    %v1099 = vadd.f32 0.0, %v1098
    %v1100 = vpop.f32.mrb[0].mxu0
    %1101 = vmatprep.mubr.bf16.mxu0 0
    %1102 = vmatmul.mubr.bf16.gmra.mrb[0].mxu0 %v154
    %v1103 = vpop.f32.mrb[0].mxu0
    %v1104 = vadd.f32 0.0, %v1103
    %v1105 = vpop.f32.mrb[0].mxu0
    %v1106 = vpop.f32.mrb[0].mxu0
    %v1107 = vadd.f32 0.0, %v1106
    %v1108 = vpop.f32.mrb[0].mxu0
    %1109 = vmatprep.mubr.bf16.mxu0 0
    %1110 = vmatmul.mubr.bf16.gmra.mrb[0].mxu0 %v155
    %v1111 = vpop.f32.mrb[0].mxu0
    %v1112 = vadd.f32 0.0, %v1111
    %v1113 = vpop.f32.mrb[0].mxu0
    %v1114 = vpop.f32.mrb[0].mxu0
    %v1115 = vadd.f32 0.0, %v1114
    %v1116 = vpop.f32.mrb[0].mxu0
    %1117 = vdwg.mxu0
    %v1118 = vrot.slane %v1056, 6
    %v1119 = vrot.slane %v1059, 6
    %v1120 = vrot.slane %v1064, 6
    %v1121 = vrot.slane %v1067, 6
    %v1122 = vrot.slane %v1072, 6
    %v1123 = vrot.slane %v1075, 6
    %v1124 = vrot.slane %v1080, 6
    %v1125 = vrot.slane %v1083, 6
    %v1126 = vrot.slane %v1088, 6
    %v1127 = vrot.slane %v1091, 6
    %v1128 = vrot.slane %v1096, 6
    %v1129 = vrot.slane %v1099, 6
    %v1130 = vrot.slane %v1104, 6
    %v1131 = vrot.slane %v1107, 6
    %v1132 = vrot.slane %v1112, 6
    %v1133 = vrot.slane %v1115, 6
    %vm1134 = vcmp.lt.s32.totalorder %v487, 2
    %v1135 = vsel %vm1134, %v1132, %v1133
    %v1136 = vsel %vm1134, %v1131, %v1132
    %v1137 = vsel %vm1134, %v1130, %v1131
    %v1138 = vsel %vm1134, %v1129, %v1130
    %v1139 = vsel %vm1134, %v1128, %v1129
    %v1140 = vsel %vm1134, %v1127, %v1128
    %v1141 = vsel %vm1134, %v1126, %v1127
    %v1142 = vsel %vm1134, %v1125, %v1126
    %v1143 = vsel %vm1134, %v1124, %v1125
    %v1144 = vsel %vm1134, %v1123, %v1124
    %v1145 = vsel %vm1134, %v1122, %v1123
    %v1146 = vsel %vm1134, %v1121, %v1122
    %v1147 = vsel %vm1134, %v1120, %v1121
    %v1148 = vsel %vm1134, %v1119, %v1120
    %v1149 = vsel %vm1134, %v1118, %v1119
    %v1150 = vsel %vm1134, %v1133, %v1118
    %vm1151 = vcmp.ge.s32.totalorder %v76, 2
    %vm1152 = vcmp.ge.s32.totalorder %v77, 2
    %vm1153 = vcmp.ge.s32.totalorder %v78, 2
    %vm1154 = vcmp.ge.s32.totalorder %v79, 2
    %vm1155 = vcmp.ge.s32.totalorder %v80, 2
    %vm1156 = vcmp.ge.s32.totalorder %v81, 2
    %vm1157 = vcmp.ge.s32.totalorder %v82, 2
    %vm1158 = vcmp.ge.s32.totalorder %v83, 2
    %vm1159 = vcmp.ge.s32.totalorder %v84, 2
    %vm1160 = vcmp.ge.s32.totalorder %v85, 2
    %vm1161 = vcmp.ge.s32.totalorder %v86, 2
    %vm1162 = vcmp.ge.s32.totalorder %v87, 2
    %vm1163 = vcmp.ge.s32.totalorder %v88, 2
    %vm1164 = vcmp.ge.s32.totalorder %v89, 2
    %vm1165 = vcmp.ge.s32.totalorder %v90, 2
    %vm1166 = vcmp.ge.s32.totalorder %v91, 2
    %v1167 = vsel %vm1151, 1, 0
    %v1168 = vsel %vm1152, 1, 0
    %v1169 = vsel %vm1153, 1, 0
    %v1170 = vsel %vm1154, 1, 0
    %v1171 = vsel %vm1155, 1, 0
    %v1172 = vsel %vm1156, 1, 0
    %v1173 = vsel %vm1157, 1, 0
    %v1174 = vsel %vm1158, 1, 0
    %v1175 = vsel %vm1159, 1, 0
    %v1176 = vsel %vm1160, 1, 0
    %v1177 = vsel %vm1161, 1, 0
    %v1178 = vsel %vm1162, 1, 0
    %v1179 = vsel %vm1163, 1, 0
    %v1180 = vsel %vm1164, 1, 0
    %v1181 = vsel %vm1165, 1, 0
    %v1182 = vsel %vm1166, 1, 0
    %1183 = vset.pattern.permute.xlu0 0
    %1184 = vperm.xlu0 %1183, %v1167
    %v1185 = vpop.permute.xlu0 %1184
    %1186 = vset.pattern.permute.xlu0 0
    %1187 = vperm.xlu0 %1186, %v1168
    %v1188 = vpop.permute.xlu0 %1187
    %1189 = vset.pattern.permute.xlu0 0
    %1190 = vperm.xlu0 %1189, %v1169
    %v1191 = vpop.permute.xlu0 %1190
    %1192 = vset.pattern.permute.xlu0 0
    %1193 = vperm.xlu0 %1192, %v1170
    %v1194 = vpop.permute.xlu0 %1193
    %1195 = vset.pattern.permute.xlu0 0
    %1196 = vperm.xlu0 %1195, %v1171
    %v1197 = vpop.permute.xlu0 %1196
    %1198 = vset.pattern.permute.xlu0 0
    %1199 = vperm.xlu0 %1198, %v1172
    %v1200 = vpop.permute.xlu0 %1199
    %1201 = vset.pattern.permute.xlu0 0
    %1202 = vperm.xlu0 %1201, %v1173
    %v1203 = vpop.permute.xlu0 %1202
    %1204 = vset.pattern.permute.xlu0 0
    %1205 = vperm.xlu0 %1204, %v1174
    %v1206 = vpop.permute.xlu0 %1205
    %1207 = vset.pattern.permute.xlu0 0
    %1208 = vperm.xlu0 %1207, %v1175
    %v1209 = vpop.permute.xlu0 %1208
    %1210 = vset.pattern.permute.xlu0 0
    %1211 = vperm.xlu0 %1210, %v1176
    %v1212 = vpop.permute.xlu0 %1211
    %1213 = vset.pattern.permute.xlu0 0
    %1214 = vperm.xlu0 %1213, %v1177
    %v1215 = vpop.permute.xlu0 %1214
    %1216 = vset.pattern.permute.xlu0 0
    %1217 = vperm.xlu0 %1216, %v1178
    %v1218 = vpop.permute.xlu0 %1217
    %1219 = vset.pattern.permute.xlu0 0
    %1220 = vperm.xlu0 %1219, %v1179
    %v1221 = vpop.permute.xlu0 %1220
    %1222 = vset.pattern.permute.xlu0 0
    %1223 = vperm.xlu0 %1222, %v1180
    %v1224 = vpop.permute.xlu0 %1223
    %1225 = vset.pattern.permute.xlu0 0
    %1226 = vperm.xlu0 %1225, %v1181
    %v1227 = vpop.permute.xlu0 %1226
    %1228 = vset.pattern.permute.xlu0 0
    %1229 = vperm.xlu0 %1228, %v1182
    %v1230 = vpop.permute.xlu0 %1229
    %vm1231 = vcmp.eq.s32.totalorder %v1185, 1
    %vm1232 = vcmp.eq.s32.totalorder %v1188, 1
    %vm1233 = vcmp.eq.s32.totalorder %v1191, 1
    %vm1234 = vcmp.eq.s32.totalorder %v1194, 1
    %vm1235 = vcmp.eq.s32.totalorder %v1197, 1
    %vm1236 = vcmp.eq.s32.totalorder %v1200, 1
    %vm1237 = vcmp.eq.s32.totalorder %v1203, 1
    %vm1238 = vcmp.eq.s32.totalorder %v1206, 1
    %vm1239 = vcmp.eq.s32.totalorder %v1209, 1
    %vm1240 = vcmp.eq.s32.totalorder %v1212, 1
    %vm1241 = vcmp.eq.s32.totalorder %v1215, 1
    %vm1242 = vcmp.eq.s32.totalorder %v1218, 1
    %vm1243 = vcmp.eq.s32.totalorder %v1221, 1
    %vm1244 = vcmp.eq.s32.totalorder %v1224, 1
    %vm1245 = vcmp.eq.s32.totalorder %v1227, 1
    %vm1246 = vcmp.eq.s32.totalorder %v1230, 1
    %v1247 = vsel %vm1231, %v1150, 0.0
    %v1248 = vsel %vm1232, %v1149, 0.0
    %v1249 = vsel %vm1233, %v1148, 0.0
    %v1250 = vsel %vm1234, %v1147, 0.0
    %v1251 = vsel %vm1235, %v1146, 0.0
    %v1252 = vsel %vm1236, %v1145, 0.0
    %v1253 = vsel %vm1237, %v1144, 0.0
    %v1254 = vsel %vm1238, %v1143, 0.0
    %v1255 = vsel %vm1239, %v1142, 0.0
    %v1256 = vsel %vm1240, %v1141, 0.0
    %v1257 = vsel %vm1241, %v1140, 0.0
    %v1258 = vsel %vm1242, %v1139, 0.0
    %v1259 = vsel %vm1243, %v1138, 0.0
    %v1260 = vsel %vm1244, %v1137, 0.0
    %v1261 = vsel %vm1245, %v1136, 0.0
    %v1262 = vsel %vm1246, %v1135, 0.0
    %v1263 = vadd.f32 %v940, %v1247
    %v1264 = vadd.f32 %v941, %v1248
    %v1265 = vadd.f32 %v942, %v1249
    %v1266 = vadd.f32 %v943, %v1250
    %v1267 = vadd.f32 %v944, %v1251
    %v1268 = vadd.f32 %v945, %v1252
    %v1269 = vadd.f32 %v946, %v1253
    %v1270 = vadd.f32 %v947, %v1254
    %v1271 = vadd.f32 %v948, %v1255
    %v1272 = vadd.f32 %v949, %v1256
    %v1273 = vadd.f32 %v950, %v1257
    %v1274 = vadd.f32 %v951, %v1258
    %v1275 = vadd.f32 %v952, %v1259
    %v1276 = vadd.f32 %v953, %v1260
    %v1277 = vadd.f32 %v954, %v1261
    %v1278 = vadd.f32 %v955, %v1262
    %s1279 = scalar_lea.vmem [#allocation3], 192
    %v1280 = vld [vmem:[%s1279] sm:$0xf]
    %v1281 = vld [vmem:[%s1279 + $0x4] sm:$0xf]
    %v1282 = vld [vmem:[%s1279 + $0x8] sm:$0xf]
    %v1283 = vld [vmem:[%s1279 + $0xc] sm:$0xf]
    %v1284 = vld [vmem:[%s1279 + $0x10] sm:$0xf]
    %v1285 = vld [vmem:[%s1279 + $0x14] sm:$0xf]
    %v1286 = vld [vmem:[%s1279 + $0x18] sm:$0xf]
    %v1287 = vld [vmem:[%s1279 + $0x1c] sm:$0xf]
    %v1288 = vld [vmem:[%s1279 + $0x20] sm:$0xf]
    %v1289 = vld [vmem:[%s1279 + $0x24] sm:$0xf]
    %v1290 = vld [vmem:[%s1279 + $0x28] sm:$0xf]
    %v1291 = vld [vmem:[%s1279 + $0x2c] sm:$0xf]
    %v1292 = vld [vmem:[%s1279 + $0x30] sm:$0xf]
    %v1293 = vld [vmem:[%s1279 + $0x34] sm:$0xf]
    %v1294 = vld [vmem:[%s1279 + $0x38] sm:$0xf]
    %v1295 = vld [vmem:[%s1279 + $0x3c] sm:$0xf]
    %v1312 = vunpack.c.l.b16 %v1280
    %v1313 = vunpack.c.l.b16 %v1281
    %v1314 = vunpack.c.l.b16 %v1282
    %v1315 = vunpack.c.l.b16 %v1283
    %v1316 = vunpack.c.l.b16 %v1284
    %v1317 = vunpack.c.l.b16 %v1285
    %v1318 = vunpack.c.l.b16 %v1286
    %v1319 = vunpack.c.l.b16 %v1287
    %v1320 = vunpack.c.l.b16 %v1288
    %v1321 = vunpack.c.l.b16 %v1289
    %v1322 = vunpack.c.l.b16 %v1290
    %v1323 = vunpack.c.l.b16 %v1291
    %v1324 = vunpack.c.l.b16 %v1292
    %v1325 = vunpack.c.l.b16 %v1293
    %v1326 = vunpack.c.l.b16 %v1294
    %v1327 = vunpack.c.l.b16 %v1295
    %v1328 = vpack.c.b16 %v1313, %v1312
    %v1329 = vpack.c.b16 %v1315, %v1314
    %v1330 = vpack.c.b16 %v1317, %v1316
    %v1331 = vpack.c.b16 %v1319, %v1318
    %v1332 = vpack.c.b16 %v1321, %v1320
    %v1333 = vpack.c.b16 %v1323, %v1322
    %v1334 = vpack.c.b16 %v1325, %v1324
    %v1335 = vpack.c.b16 %v1327, %v1326
    %1344 = vmatprep.subr.bf16.mxu0 0
    %1345 = vmatpush1.bf16.msra.mxu0 %v1328
    %1346 = vmatprep.subr.bf16.mxu0 0
    %1347 = vmatpush1.bf16.msra.mxu0 %v1329
    %1348 = vmatprep.subr.bf16.mxu0 0
    %1349 = vmatpush1.bf16.msra.mxu0 %v1330
    %1350 = vmatprep.subr.bf16.mxu0 0
    %1351 = vmatpush1.bf16.msra.mxu0 %v1331
    %1352 = vmatprep.subr.bf16.mxu0 0
    %1353 = vmatpush1.bf16.msra.mxu0 %v1332
    %1354 = vmatprep.subr.bf16.mxu0 0
    %1355 = vmatpush1.bf16.msra.mxu0 %v1333
    %1356 = vmatprep.subr.bf16.mxu0 0
    %1357 = vmatpush1.bf16.msra.mxu0 %v1334
    %1358 = vmatprep.subr.bf16.mxu0 0
    %1359 = vmatpush1.bf16.msra.mxu0 %v1335
    %1360 = vmatprep.subr.bf16.mxu0 0
    %1361 = vmatpush1.bf16.msra.mxu0 0
    %1362 = vmatprep.subr.bf16.mxu0 0
    %1363 = vmatpush1.bf16.msra.mxu0 0
    %1364 = vmatprep.subr.bf16.mxu0 0
    %1365 = vmatpush1.bf16.msra.mxu0 0
    %1366 = vmatprep.subr.bf16.mxu0 0
    %1367 = vmatpush1.bf16.msra.mxu0 0
    %1368 = vmatprep.subr.bf16.mxu0 0
    %1369 = vmatpush1.bf16.msra.mxu0 0
    %1370 = vmatprep.subr.bf16.mxu0 0
    %1371 = vmatpush1.bf16.msra.mxu0 0
    %1372 = vmatprep.subr.bf16.mxu0 0
    %1373 = vmatpush1.bf16.msra.mxu0 0
    %1374 = vmatprep.subr.bf16.mxu0 0
    %1375 = vmatpush1.bf16.msra.mxu0 0
    %1376 = vmatprep.mubr.bf16.mxu0 0
    %1377 = vmatmul.mubr.bf16.gmra.mrb[0].mxu0 %v148
    %v1378 = vpop.f32.mrb[0].mxu0
    %v1379 = vadd.f32 0.0, %v1378
    %v1380 = vpop.f32.mrb[0].mxu0
    %v1381 = vpop.f32.mrb[0].mxu0
    %v1382 = vadd.f32 0.0, %v1381
    %v1383 = vpop.f32.mrb[0].mxu0
    %1384 = vmatprep.mubr.bf16.mxu0 0
    %1385 = vmatmul.mubr.bf16.gmra.mrb[0].mxu0 %v149
    %v1386 = vpop.f32.mrb[0].mxu0
    %v1387 = vadd.f32 0.0, %v1386
    %v1388 = vpop.f32.mrb[0].mxu0
    %v1389 = vpop.f32.mrb[0].mxu0
    %v1390 = vadd.f32 0.0, %v1389
    %v1391 = vpop.f32.mrb[0].mxu0
    %1392 = vmatprep.mubr.bf16.mxu0 0
    %1393 = vmatmul.mubr.bf16.gmra.mrb[0].mxu0 %v150
    %v1394 = vpop.f32.mrb[0].mxu0
    %v1395 = vadd.f32 0.0, %v1394
    %v1396 = vpop.f32.mrb[0].mxu0
    %v1397 = vpop.f32.mrb[0].mxu0
    %v1398 = vadd.f32 0.0, %v1397
    %v1399 = vpop.f32.mrb[0].mxu0
    %1400 = vmatprep.mubr.bf16.mxu0 0
    %1401 = vmatmul.mubr.bf16.gmra.mrb[0].mxu0 %v151
    %v1402 = vpop.f32.mrb[0].mxu0
    %v1403 = vadd.f32 0.0, %v1402
    %v1404 = vpop.f32.mrb[0].mxu0
    %v1405 = vpop.f32.mrb[0].mxu0
    %v1406 = vadd.f32 0.0, %v1405
    %v1407 = vpop.f32.mrb[0].mxu0
    %1408 = vmatprep.mubr.bf16.mxu0 0
    %1409 = vmatmul.mubr.bf16.gmra.mrb[0].mxu0 %v152
    %v1410 = vpop.f32.mrb[0].mxu0
    %v1411 = vadd.f32 0.0, %v1410
    %v1412 = vpop.f32.mrb[0].mxu0
    %v1413 = vpop.f32.mrb[0].mxu0
    %v1414 = vadd.f32 0.0, %v1413
    %v1415 = vpop.f32.mrb[0].mxu0
    %1416 = vmatprep.mubr.bf16.mxu0 0
    %1417 = vmatmul.mubr.bf16.gmra.mrb[0].mxu0 %v153
    %v1418 = vpop.f32.mrb[0].mxu0
    %v1419 = vadd.f32 0.0, %v1418
    %v1420 = vpop.f32.mrb[0].mxu0
    %v1421 = vpop.f32.mrb[0].mxu0
    %v1422 = vadd.f32 0.0, %v1421
    %v1423 = vpop.f32.mrb[0].mxu0
    %1424 = vmatprep.mubr.bf16.mxu0 0
    %1425 = vmatmul.mubr.bf16.gmra.mrb[0].mxu0 %v154
    %v1426 = vpop.f32.mrb[0].mxu0
    %v1427 = vadd.f32 0.0, %v1426
    %v1428 = vpop.f32.mrb[0].mxu0
    %v1429 = vpop.f32.mrb[0].mxu0
    %v1430 = vadd.f32 0.0, %v1429
    %v1431 = vpop.f32.mrb[0].mxu0
    %1432 = vmatprep.mubr.bf16.mxu0 0
    %1433 = vmatmul.mubr.bf16.gmra.mrb[0].mxu0 %v155
    %v1434 = vpop.f32.mrb[0].mxu0
    %v1435 = vadd.f32 0.0, %v1434
    %v1436 = vpop.f32.mrb[0].mxu0
    %v1437 = vpop.f32.mrb[0].mxu0
    %v1438 = vadd.f32 0.0, %v1437
    %v1439 = vpop.f32.mrb[0].mxu0
    %1440 = vdwg.mxu0
    %v1441 = vrot.slane %v1379, 7
    %v1442 = vrot.slane %v1382, 7
    %v1443 = vrot.slane %v1387, 7
    %v1444 = vrot.slane %v1390, 7
    %v1445 = vrot.slane %v1395, 7
    %v1446 = vrot.slane %v1398, 7
    %v1447 = vrot.slane %v1403, 7
    %v1448 = vrot.slane %v1406, 7
    %v1449 = vrot.slane %v1411, 7
    %v1450 = vrot.slane %v1414, 7
    %v1451 = vrot.slane %v1419, 7
    %v1452 = vrot.slane %v1422, 7
    %v1453 = vrot.slane %v1427, 7
    %v1454 = vrot.slane %v1430, 7
    %v1455 = vrot.slane %v1435, 7
    %v1456 = vrot.slane %v1438, 7
    %vm1457 = vcmp.lt.s32.totalorder %v487, 1
    %v1458 = vsel %vm1457, %v1455, %v1456
    %v1459 = vsel %vm1457, %v1454, %v1455
    %v1460 = vsel %vm1457, %v1453, %v1454
    %v1461 = vsel %vm1457, %v1452, %v1453
    %v1462 = vsel %vm1457, %v1451, %v1452
    %v1463 = vsel %vm1457, %v1450, %v1451
    %v1464 = vsel %vm1457, %v1449, %v1450
    %v1465 = vsel %vm1457, %v1448, %v1449
    %v1466 = vsel %vm1457, %v1447, %v1448
    %v1467 = vsel %vm1457, %v1446, %v1447
    %v1468 = vsel %vm1457, %v1445, %v1446
    %v1469 = vsel %vm1457, %v1444, %v1445
    %v1470 = vsel %vm1457, %v1443, %v1444
    %v1471 = vsel %vm1457, %v1442, %v1443
    %v1472 = vsel %vm1457, %v1441, %v1442
    %v1473 = vsel %vm1457, %v1456, %v1441
    %vm1474 = vcmp.ge.s32.totalorder %v76, 1
    %vm1475 = vcmp.ge.s32.totalorder %v77, 1
    %vm1476 = vcmp.ge.s32.totalorder %v78, 1
    %vm1477 = vcmp.ge.s32.totalorder %v79, 1
    %vm1478 = vcmp.ge.s32.totalorder %v80, 1
    %vm1479 = vcmp.ge.s32.totalorder %v81, 1
    %vm1480 = vcmp.ge.s32.totalorder %v82, 1
    %vm1481 = vcmp.ge.s32.totalorder %v83, 1
    %vm1482 = vcmp.ge.s32.totalorder %v84, 1
    %vm1483 = vcmp.ge.s32.totalorder %v85, 1
    %vm1484 = vcmp.ge.s32.totalorder %v86, 1
    %vm1485 = vcmp.ge.s32.totalorder %v87, 1
    %vm1486 = vcmp.ge.s32.totalorder %v88, 1
    %vm1487 = vcmp.ge.s32.totalorder %v89, 1
    %vm1488 = vcmp.ge.s32.totalorder %v90, 1
    %vm1489 = vcmp.ge.s32.totalorder %v91, 1
    %v1490 = vsel %vm1474, 1, 0
    %v1491 = vsel %vm1475, 1, 0
    %v1492 = vsel %vm1476, 1, 0
    %v1493 = vsel %vm1477, 1, 0
    %v1494 = vsel %vm1478, 1, 0
    %v1495 = vsel %vm1479, 1, 0
    %v1496 = vsel %vm1480, 1, 0
    %v1497 = vsel %vm1481, 1, 0
    %v1498 = vsel %vm1482, 1, 0
    %v1499 = vsel %vm1483, 1, 0
    %v1500 = vsel %vm1484, 1, 0
    %v1501 = vsel %vm1485, 1, 0
    %v1502 = vsel %vm1486, 1, 0
    %v1503 = vsel %vm1487, 1, 0
    %v1504 = vsel %vm1488, 1, 0
    %v1505 = vsel %vm1489, 1, 0
    %1506 = vset.pattern.permute.xlu0 0
    %1507 = vperm.xlu0 %1506, %v1490
    %v1508 = vpop.permute.xlu0 %1507
    %1509 = vset.pattern.permute.xlu0 0
    %1510 = vperm.xlu0 %1509, %v1491
    %v1511 = vpop.permute.xlu0 %1510
    %1512 = vset.pattern.permute.xlu0 0
    %1513 = vperm.xlu0 %1512, %v1492
    %v1514 = vpop.permute.xlu0 %1513
    %1515 = vset.pattern.permute.xlu0 0
    %1516 = vperm.xlu0 %1515, %v1493
    %v1517 = vpop.permute.xlu0 %1516
    %1518 = vset.pattern.permute.xlu0 0
    %1519 = vperm.xlu0 %1518, %v1494
    %v1520 = vpop.permute.xlu0 %1519
    %1521 = vset.pattern.permute.xlu0 0
    %1522 = vperm.xlu0 %1521, %v1495
    %v1523 = vpop.permute.xlu0 %1522
    %1524 = vset.pattern.permute.xlu0 0
    %1525 = vperm.xlu0 %1524, %v1496
    %v1526 = vpop.permute.xlu0 %1525
    %1527 = vset.pattern.permute.xlu0 0
    %1528 = vperm.xlu0 %1527, %v1497
    %v1529 = vpop.permute.xlu0 %1528
    %1530 = vset.pattern.permute.xlu0 0
    %1531 = vperm.xlu0 %1530, %v1498
    %v1532 = vpop.permute.xlu0 %1531
    %1533 = vset.pattern.permute.xlu0 0
    %1534 = vperm.xlu0 %1533, %v1499
    %v1535 = vpop.permute.xlu0 %1534
    %1536 = vset.pattern.permute.xlu0 0
    %1537 = vperm.xlu0 %1536, %v1500
    %v1538 = vpop.permute.xlu0 %1537
    %1539 = vset.pattern.permute.xlu0 0
    %1540 = vperm.xlu0 %1539, %v1501
    %v1541 = vpop.permute.xlu0 %1540
    %1542 = vset.pattern.permute.xlu0 0
    %1543 = vperm.xlu0 %1542, %v1502
    %v1544 = vpop.permute.xlu0 %1543
    %1545 = vset.pattern.permute.xlu0 0
    %1546 = vperm.xlu0 %1545, %v1503
    %v1547 = vpop.permute.xlu0 %1546
    %1548 = vset.pattern.permute.xlu0 0
    %1549 = vperm.xlu0 %1548, %v1504
    %v1550 = vpop.permute.xlu0 %1549
    %1551 = vset.pattern.permute.xlu0 0
    %1552 = vperm.xlu0 %1551, %v1505
    %v1553 = vpop.permute.xlu0 %1552
    %vm1554 = vcmp.eq.s32.totalorder %v1508, 1
    %vm1555 = vcmp.eq.s32.totalorder %v1511, 1
    %vm1556 = vcmp.eq.s32.totalorder %v1514, 1
    %vm1557 = vcmp.eq.s32.totalorder %v1517, 1
    %vm1558 = vcmp.eq.s32.totalorder %v1520, 1
    %vm1559 = vcmp.eq.s32.totalorder %v1523, 1
    %vm1560 = vcmp.eq.s32.totalorder %v1526, 1
    %vm1561 = vcmp.eq.s32.totalorder %v1529, 1
    %vm1562 = vcmp.eq.s32.totalorder %v1532, 1
    %vm1563 = vcmp.eq.s32.totalorder %v1535, 1
    %vm1564 = vcmp.eq.s32.totalorder %v1538, 1
    %vm1565 = vcmp.eq.s32.totalorder %v1541, 1
    %vm1566 = vcmp.eq.s32.totalorder %v1544, 1
    %vm1567 = vcmp.eq.s32.totalorder %v1547, 1
    %vm1568 = vcmp.eq.s32.totalorder %v1550, 1
    %vm1569 = vcmp.eq.s32.totalorder %v1553, 1
    %v1570 = vsel %vm1554, %v1473, 0.0
    %v1571 = vsel %vm1555, %v1472, 0.0
    %v1572 = vsel %vm1556, %v1471, 0.0
    %v1573 = vsel %vm1557, %v1470, 0.0
    %v1574 = vsel %vm1558, %v1469, 0.0
    %v1575 = vsel %vm1559, %v1468, 0.0
    %v1576 = vsel %vm1560, %v1467, 0.0
    %v1577 = vsel %vm1561, %v1466, 0.0
    %v1578 = vsel %vm1562, %v1465, 0.0
    %v1579 = vsel %vm1563, %v1464, 0.0
    %v1580 = vsel %vm1564, %v1463, 0.0
    %v1581 = vsel %vm1565, %v1462, 0.0
    %v1582 = vsel %vm1566, %v1461, 0.0
    %v1583 = vsel %vm1567, %v1460, 0.0
    %v1584 = vsel %vm1568, %v1459, 0.0
    %v1585 = vsel %vm1569, %v1458, 0.0
    %v1586 = vadd.f32 %v1263, %v1570
    %v1587 = vadd.f32 %v1264, %v1571
    %v1588 = vadd.f32 %v1265, %v1572
    %v1589 = vadd.f32 %v1266, %v1573
    %v1590 = vadd.f32 %v1267, %v1574
    %v1591 = vadd.f32 %v1268, %v1575
    %v1592 = vadd.f32 %v1269, %v1576
    %v1593 = vadd.f32 %v1270, %v1577
    %v1594 = vadd.f32 %v1271, %v1578
    %v1595 = vadd.f32 %v1272, %v1579
    %v1596 = vadd.f32 %v1273, %v1580
    %v1597 = vadd.f32 %v1274, %v1581
    %v1598 = vadd.f32 %v1275, %v1582
    %v1599 = vadd.f32 %v1276, %v1583
    %v1600 = vadd.f32 %v1277, %v1584
    %v1601 = vadd.f32 %v1278, %v1585
    %s1602 = scalar_lea.vmem [#allocation3], 320
    %v1603 = vld [vmem:[%s1602] sm:$0xf]
    %v1604 = vld [vmem:[%s1602 + $0x4] sm:$0xf]
    %v1605 = vld [vmem:[%s1602 + $0x8] sm:$0xf]
    %v1606 = vld [vmem:[%s1602 + $0xc] sm:$0xf]
    %v1607 = vld [vmem:[%s1602 + $0x10] sm:$0xf]
    %v1608 = vld [vmem:[%s1602 + $0x14] sm:$0xf]
    %v1609 = vld [vmem:[%s1602 + $0x18] sm:$0xf]
    %v1610 = vld [vmem:[%s1602 + $0x1c] sm:$0xf]
    %v1611 = vld [vmem:[%s1602 + $0x20] sm:$0xf]
    %v1612 = vld [vmem:[%s1602 + $0x24] sm:$0xf]
    %v1613 = vld [vmem:[%s1602 + $0x28] sm:$0xf]
    %v1614 = vld [vmem:[%s1602 + $0x2c] sm:$0xf]
    %v1615 = vld [vmem:[%s1602 + $0x30] sm:$0xf]
    %v1616 = vld [vmem:[%s1602 + $0x34] sm:$0xf]
    %v1617 = vld [vmem:[%s1602 + $0x38] sm:$0xf]
    %v1618 = vld [vmem:[%s1602 + $0x3c] sm:$0xf]
    %v1635 = vunpack.c.l.b16 %v1603
    %v1636 = vunpack.c.l.b16 %v1604
    %v1637 = vunpack.c.l.b16 %v1605
    %v1638 = vunpack.c.l.b16 %v1606
    %v1639 = vunpack.c.l.b16 %v1607
    %v1640 = vunpack.c.l.b16 %v1608
    %v1641 = vunpack.c.l.b16 %v1609
    %v1642 = vunpack.c.l.b16 %v1610
    %v1643 = vunpack.c.l.b16 %v1611
    %v1644 = vunpack.c.l.b16 %v1612
    %v1645 = vunpack.c.l.b16 %v1613
    %v1646 = vunpack.c.l.b16 %v1614
    %v1647 = vunpack.c.l.b16 %v1615
    %v1648 = vunpack.c.l.b16 %v1616
    %v1649 = vunpack.c.l.b16 %v1617
    %v1650 = vunpack.c.l.b16 %v1618
    %v1651 = vpack.c.b16 %v1636, %v1635
    %v1652 = vpack.c.b16 %v1638, %v1637
    %v1653 = vpack.c.b16 %v1640, %v1639
    %v1654 = vpack.c.b16 %v1642, %v1641
    %v1655 = vpack.c.b16 %v1644, %v1643
    %v1656 = vpack.c.b16 %v1646, %v1645
    %v1657 = vpack.c.b16 %v1648, %v1647
    %v1658 = vpack.c.b16 %v1650, %v1649
    %1667 = vmatprep.subr.bf16.mxu0 0
    %1668 = vmatpush1.bf16.msra.mxu0 %v1651
    %1669 = vmatprep.subr.bf16.mxu0 0
    %1670 = vmatpush1.bf16.msra.mxu0 %v1652
    %1671 = vmatprep.subr.bf16.mxu0 0
    %1672 = vmatpush1.bf16.msra.mxu0 %v1653
    %1673 = vmatprep.subr.bf16.mxu0 0
    %1674 = vmatpush1.bf16.msra.mxu0 %v1654
    %1675 = vmatprep.subr.bf16.mxu0 0
    %1676 = vmatpush1.bf16.msra.mxu0 %v1655
    %1677 = vmatprep.subr.bf16.mxu0 0
    %1678 = vmatpush1.bf16.msra.mxu0 %v1656
    %1679 = vmatprep.subr.bf16.mxu0 0
    %1680 = vmatpush1.bf16.msra.mxu0 %v1657
    %1681 = vmatprep.subr.bf16.mxu0 0
    %1682 = vmatpush1.bf16.msra.mxu0 %v1658
    %1683 = vmatprep.subr.bf16.mxu0 0
    %1684 = vmatpush1.bf16.msra.mxu0 0
    %1685 = vmatprep.subr.bf16.mxu0 0
    %1686 = vmatpush1.bf16.msra.mxu0 0
    %1687 = vmatprep.subr.bf16.mxu0 0
    %1688 = vmatpush1.bf16.msra.mxu0 0
    %1689 = vmatprep.subr.bf16.mxu0 0
    %1690 = vmatpush1.bf16.msra.mxu0 0
    %1691 = vmatprep.subr.bf16.mxu0 0
    %1692 = vmatpush1.bf16.msra.mxu0 0
    %1693 = vmatprep.subr.bf16.mxu0 0
    %1694 = vmatpush1.bf16.msra.mxu0 0
    %1695 = vmatprep.subr.bf16.mxu0 0
    %1696 = vmatpush1.bf16.msra.mxu0 0
    %1697 = vmatprep.subr.bf16.mxu0 0
    %1698 = vmatpush1.bf16.msra.mxu0 0
    %1699 = vmatprep.mubr.bf16.mxu0 0
    %1700 = vmatmul.mubr.bf16.gmra.mrb[0].mxu0 %v148
    %v1701 = vpop.f32.mrb[0].mxu0
    %v1702 = vadd.f32 0.0, %v1701
    %v1703 = vpop.f32.mrb[0].mxu0
    %v1704 = vpop.f32.mrb[0].mxu0
    %v1705 = vadd.f32 0.0, %v1704
    %v1706 = vpop.f32.mrb[0].mxu0
    %1707 = vmatprep.mubr.bf16.mxu0 0
    %1708 = vmatmul.mubr.bf16.gmra.mrb[0].mxu0 %v149
    %v1709 = vpop.f32.mrb[0].mxu0
    %v1710 = vadd.f32 0.0, %v1709
    %v1711 = vpop.f32.mrb[0].mxu0
    %v1712 = vpop.f32.mrb[0].mxu0
    %v1713 = vadd.f32 0.0, %v1712
    %v1714 = vpop.f32.mrb[0].mxu0
    %1715 = vmatprep.mubr.bf16.mxu0 0
    %1716 = vmatmul.mubr.bf16.gmra.mrb[0].mxu0 %v150
    %v1717 = vpop.f32.mrb[0].mxu0
    %v1718 = vadd.f32 0.0, %v1717
    %v1719 = vpop.f32.mrb[0].mxu0
    %v1720 = vpop.f32.mrb[0].mxu0
    %v1721 = vadd.f32 0.0, %v1720
    %v1722 = vpop.f32.mrb[0].mxu0
    %1723 = vmatprep.mubr.bf16.mxu0 0
    %1724 = vmatmul.mubr.bf16.gmra.mrb[0].mxu0 %v151
    %v1725 = vpop.f32.mrb[0].mxu0
    %v1726 = vadd.f32 0.0, %v1725
    %v1727 = vpop.f32.mrb[0].mxu0
    %v1728 = vpop.f32.mrb[0].mxu0
    %v1729 = vadd.f32 0.0, %v1728
    %v1730 = vpop.f32.mrb[0].mxu0
    %1731 = vmatprep.mubr.bf16.mxu0 0
    %1732 = vmatmul.mubr.bf16.gmra.mrb[0].mxu0 %v152
    %v1733 = vpop.f32.mrb[0].mxu0
    %v1734 = vadd.f32 0.0, %v1733
    %v1735 = vpop.f32.mrb[0].mxu0
    %v1736 = vpop.f32.mrb[0].mxu0
    %v1737 = vadd.f32 0.0, %v1736
    %v1738 = vpop.f32.mrb[0].mxu0
    %1739 = vmatprep.mubr.bf16.mxu0 0
    %1740 = vmatmul.mubr.bf16.gmra.mrb[0].mxu0 %v153
    %v1741 = vpop.f32.mrb[0].mxu0
    %v1742 = vadd.f32 0.0, %v1741
    %v1743 = vpop.f32.mrb[0].mxu0
    %v1744 = vpop.f32.mrb[0].mxu0
    %v1745 = vadd.f32 0.0, %v1744
    %v1746 = vpop.f32.mrb[0].mxu0
    %1747 = vmatprep.mubr.bf16.mxu0 0
    %1748 = vmatmul.mubr.bf16.gmra.mrb[0].mxu0 %v154
    %v1749 = vpop.f32.mrb[0].mxu0
    %v1750 = vadd.f32 0.0, %v1749
    %v1751 = vpop.f32.mrb[0].mxu0
    %v1752 = vpop.f32.mrb[0].mxu0
    %v1753 = vadd.f32 0.0, %v1752
    %v1754 = vpop.f32.mrb[0].mxu0
    %1755 = vmatprep.mubr.bf16.mxu0 0
    %1756 = vmatmul.mubr.bf16.gmra.mrb[0].mxu0 %v155
    %v1757 = vpop.f32.mrb[0].mxu0
    %v1758 = vadd.f32 0.0, %v1757
    %v1759 = vpop.f32.mrb[0].mxu0
    %v1760 = vpop.f32.mrb[0].mxu0
    %v1761 = vadd.f32 0.0, %v1760
    %v1762 = vpop.f32.mrb[0].mxu0
    %1763 = vdwg.mxu0
    %v1764 = vrot.slane %v1702, 1
    %v1765 = vrot.slane %v1705, 1
    %v1766 = vrot.slane %v1710, 1
    %v1767 = vrot.slane %v1713, 1
    %v1768 = vrot.slane %v1718, 1
    %v1769 = vrot.slane %v1721, 1
    %v1770 = vrot.slane %v1726, 1
    %v1771 = vrot.slane %v1729, 1
    %v1772 = vrot.slane %v1734, 1
    %v1773 = vrot.slane %v1737, 1
    %v1774 = vrot.slane %v1742, 1
    %v1775 = vrot.slane %v1745, 1
    %v1776 = vrot.slane %v1750, 1
    %v1777 = vrot.slane %v1753, 1
    %v1778 = vrot.slane %v1758, 1
    %v1779 = vrot.slane %v1761, 1
    %vm1780 = vcmp.lt.s32.totalorder %v487, 7
    %v1781 = vsel %vm1780, %v1778, %v1779
    %v1782 = vsel %vm1780, %v1777, %v1778
    %v1783 = vsel %vm1780, %v1776, %v1777
    %v1784 = vsel %vm1780, %v1775, %v1776
    %v1785 = vsel %vm1780, %v1774, %v1775
    %v1786 = vsel %vm1780, %v1773, %v1774
    %v1787 = vsel %vm1780, %v1772, %v1773
    %v1788 = vsel %vm1780, %v1771, %v1772
    %v1789 = vsel %vm1780, %v1770, %v1771
    %v1790 = vsel %vm1780, %v1769, %v1770
    %v1791 = vsel %vm1780, %v1768, %v1769
    %v1792 = vsel %vm1780, %v1767, %v1768
    %v1793 = vsel %vm1780, %v1766, %v1767
    %v1794 = vsel %vm1780, %v1765, %v1766
    %v1795 = vsel %vm1780, %v1764, %v1765
    %v1796 = vsel %vm1780, %v1779, %v1764
    %vm1797 = vcmp.lt.s32.totalorder %v76, 15
    %vm1798 = vcmp.lt.s32.totalorder %v77, 15
    %vm1799 = vcmp.lt.s32.totalorder %v78, 15
    %vm1800 = vcmp.lt.s32.totalorder %v79, 15
    %vm1801 = vcmp.lt.s32.totalorder %v80, 15
    %vm1802 = vcmp.lt.s32.totalorder %v81, 15
    %vm1803 = vcmp.lt.s32.totalorder %v82, 15
    %vm1804 = vcmp.lt.s32.totalorder %v83, 15
    %vm1805 = vcmp.lt.s32.totalorder %v84, 15
    %vm1806 = vcmp.lt.s32.totalorder %v85, 15
    %vm1807 = vcmp.lt.s32.totalorder %v86, 15
    %vm1808 = vcmp.lt.s32.totalorder %v87, 15
    %vm1809 = vcmp.lt.s32.totalorder %v88, 15
    %vm1810 = vcmp.lt.s32.totalorder %v89, 15
    %vm1811 = vcmp.lt.s32.totalorder %v90, 15
    %vm1812 = vcmp.lt.s32.totalorder %v91, 15
    %v1813 = vsel %vm1797, 1, 0
    %v1814 = vsel %vm1798, 1, 0
    %v1815 = vsel %vm1799, 1, 0
    %v1816 = vsel %vm1800, 1, 0
    %v1817 = vsel %vm1801, 1, 0
    %v1818 = vsel %vm1802, 1, 0
    %v1819 = vsel %vm1803, 1, 0
    %v1820 = vsel %vm1804, 1, 0
    %v1821 = vsel %vm1805, 1, 0
    %v1822 = vsel %vm1806, 1, 0
    %v1823 = vsel %vm1807, 1, 0
    %v1824 = vsel %vm1808, 1, 0
    %v1825 = vsel %vm1809, 1, 0
    %v1826 = vsel %vm1810, 1, 0
    %v1827 = vsel %vm1811, 1, 0
    %v1828 = vsel %vm1812, 1, 0
    %1829 = vset.pattern.permute.xlu0 0
    %1830 = vperm.xlu0 %1829, %v1813
    %v1831 = vpop.permute.xlu0 %1830
    %1832 = vset.pattern.permute.xlu0 0
    %1833 = vperm.xlu0 %1832, %v1814
    %v1834 = vpop.permute.xlu0 %1833
    %1835 = vset.pattern.permute.xlu0 0
    %1836 = vperm.xlu0 %1835, %v1815
    %v1837 = vpop.permute.xlu0 %1836
    %1838 = vset.pattern.permute.xlu0 0
    %1839 = vperm.xlu0 %1838, %v1816
    %v1840 = vpop.permute.xlu0 %1839
    %1841 = vset.pattern.permute.xlu0 0
    %1842 = vperm.xlu0 %1841, %v1817
    %v1843 = vpop.permute.xlu0 %1842
    %1844 = vset.pattern.permute.xlu0 0
    %1845 = vperm.xlu0 %1844, %v1818
    %v1846 = vpop.permute.xlu0 %1845
    %1847 = vset.pattern.permute.xlu0 0
    %1848 = vperm.xlu0 %1847, %v1819
    %v1849 = vpop.permute.xlu0 %1848
    %1850 = vset.pattern.permute.xlu0 0
    %1851 = vperm.xlu0 %1850, %v1820
    %v1852 = vpop.permute.xlu0 %1851
    %1853 = vset.pattern.permute.xlu0 0
    %1854 = vperm.xlu0 %1853, %v1821
    %v1855 = vpop.permute.xlu0 %1854
    %1856 = vset.pattern.permute.xlu0 0
    %1857 = vperm.xlu0 %1856, %v1822
    %v1858 = vpop.permute.xlu0 %1857
    %1859 = vset.pattern.permute.xlu0 0
    %1860 = vperm.xlu0 %1859, %v1823
    %v1861 = vpop.permute.xlu0 %1860
    %1862 = vset.pattern.permute.xlu0 0
    %1863 = vperm.xlu0 %1862, %v1824
    %v1864 = vpop.permute.xlu0 %1863
    %1865 = vset.pattern.permute.xlu0 0
    %1866 = vperm.xlu0 %1865, %v1825
    %v1867 = vpop.permute.xlu0 %1866
    %1868 = vset.pattern.permute.xlu0 0
    %1869 = vperm.xlu0 %1868, %v1826
    %v1870 = vpop.permute.xlu0 %1869
    %1871 = vset.pattern.permute.xlu0 0
    %1872 = vperm.xlu0 %1871, %v1827
    %v1873 = vpop.permute.xlu0 %1872
    %1874 = vset.pattern.permute.xlu0 0
    %1875 = vperm.xlu0 %1874, %v1828
    %v1876 = vpop.permute.xlu0 %1875
    %vm1877 = vcmp.eq.s32.totalorder %v1831, 1
    %vm1878 = vcmp.eq.s32.totalorder %v1834, 1
    %vm1879 = vcmp.eq.s32.totalorder %v1837, 1
    %vm1880 = vcmp.eq.s32.totalorder %v1840, 1
    %vm1881 = vcmp.eq.s32.totalorder %v1843, 1
    %vm1882 = vcmp.eq.s32.totalorder %v1846, 1
    %vm1883 = vcmp.eq.s32.totalorder %v1849, 1
    %vm1884 = vcmp.eq.s32.totalorder %v1852, 1
    %vm1885 = vcmp.eq.s32.totalorder %v1855, 1
    %vm1886 = vcmp.eq.s32.totalorder %v1858, 1
    %vm1887 = vcmp.eq.s32.totalorder %v1861, 1
    %vm1888 = vcmp.eq.s32.totalorder %v1864, 1
    %vm1889 = vcmp.eq.s32.totalorder %v1867, 1
    %vm1890 = vcmp.eq.s32.totalorder %v1870, 1
    %vm1891 = vcmp.eq.s32.totalorder %v1873, 1
    %vm1892 = vcmp.eq.s32.totalorder %v1876, 1
    %v1893 = vsel %vm1877, %v1795, 0.0
    %v1894 = vsel %vm1878, %v1794, 0.0
    %v1895 = vsel %vm1879, %v1793, 0.0
    %v1896 = vsel %vm1880, %v1792, 0.0
    %v1897 = vsel %vm1881, %v1791, 0.0
    %v1898 = vsel %vm1882, %v1790, 0.0
    %v1899 = vsel %vm1883, %v1789, 0.0
    %v1900 = vsel %vm1884, %v1788, 0.0
    %v1901 = vsel %vm1885, %v1787, 0.0
    %v1902 = vsel %vm1886, %v1786, 0.0
    %v1903 = vsel %vm1887, %v1785, 0.0
    %v1904 = vsel %vm1888, %v1784, 0.0
    %v1905 = vsel %vm1889, %v1783, 0.0
    %v1906 = vsel %vm1890, %v1782, 0.0
    %v1907 = vsel %vm1891, %v1781, 0.0
    %v1908 = vsel %vm1892, %v1796, 0.0
    %v1909 = vadd.f32 %v1586, %v1893
    %v1910 = vadd.f32 %v1587, %v1894
    %v1911 = vadd.f32 %v1588, %v1895
    %v1912 = vadd.f32 %v1589, %v1896
    %v1913 = vadd.f32 %v1590, %v1897
    %v1914 = vadd.f32 %v1591, %v1898
    %v1915 = vadd.f32 %v1592, %v1899
    %v1916 = vadd.f32 %v1593, %v1900
    %v1917 = vadd.f32 %v1594, %v1901
    %v1918 = vadd.f32 %v1595, %v1902
    %v1919 = vadd.f32 %v1596, %v1903
    %v1920 = vadd.f32 %v1597, %v1904
    %v1921 = vadd.f32 %v1598, %v1905
    %v1922 = vadd.f32 %v1599, %v1906
    %v1923 = vadd.f32 %v1600, %v1907
    %v1924 = vadd.f32 %v1601, %v1908
    %s1925 = scalar_lea.vmem [#allocation3], 384
    %v1926 = vld [vmem:[%s1925] sm:$0xf]
    %v1927 = vld [vmem:[%s1925 + $0x4] sm:$0xf]
    %v1928 = vld [vmem:[%s1925 + $0x8] sm:$0xf]
    %v1929 = vld [vmem:[%s1925 + $0xc] sm:$0xf]
    %v1930 = vld [vmem:[%s1925 + $0x10] sm:$0xf]
    %v1931 = vld [vmem:[%s1925 + $0x14] sm:$0xf]
    %v1932 = vld [vmem:[%s1925 + $0x18] sm:$0xf]
    %v1933 = vld [vmem:[%s1925 + $0x1c] sm:$0xf]
    %v1934 = vld [vmem:[%s1925 + $0x20] sm:$0xf]
    %v1935 = vld [vmem:[%s1925 + $0x24] sm:$0xf]
    %v1936 = vld [vmem:[%s1925 + $0x28] sm:$0xf]
    %v1937 = vld [vmem:[%s1925 + $0x2c] sm:$0xf]
    %v1938 = vld [vmem:[%s1925 + $0x30] sm:$0xf]
    %v1939 = vld [vmem:[%s1925 + $0x34] sm:$0xf]
    %v1940 = vld [vmem:[%s1925 + $0x38] sm:$0xf]
    %v1941 = vld [vmem:[%s1925 + $0x3c] sm:$0xf]
    %v1958 = vunpack.c.l.b16 %v1926
    %v1959 = vunpack.c.l.b16 %v1927
    %v1960 = vunpack.c.l.b16 %v1928
    %v1961 = vunpack.c.l.b16 %v1929
    %v1962 = vunpack.c.l.b16 %v1930
    %v1963 = vunpack.c.l.b16 %v1931
    %v1964 = vunpack.c.l.b16 %v1932
    %v1965 = vunpack.c.l.b16 %v1933
    %v1966 = vunpack.c.l.b16 %v1934
    %v1967 = vunpack.c.l.b16 %v1935
    %v1968 = vunpack.c.l.b16 %v1936
    %v1969 = vunpack.c.l.b16 %v1937
    %v1970 = vunpack.c.l.b16 %v1938
    %v1971 = vunpack.c.l.b16 %v1939
    %v1972 = vunpack.c.l.b16 %v1940
    %v1973 = vunpack.c.l.b16 %v1941
    %v1974 = vpack.c.b16 %v1959, %v1958
    %v1975 = vpack.c.b16 %v1961, %v1960
    %v1976 = vpack.c.b16 %v1963, %v1962
    %v1977 = vpack.c.b16 %v1965, %v1964
    %v1978 = vpack.c.b16 %v1967, %v1966
    %v1979 = vpack.c.b16 %v1969, %v1968
    %v1980 = vpack.c.b16 %v1971, %v1970
    %v1981 = vpack.c.b16 %v1973, %v1972
    %1990 = vmatprep.subr.bf16.mxu0 0
    %1991 = vmatpush1.bf16.msra.mxu0 %v1974
    %1992 = vmatprep.subr.bf16.mxu0 0
    %1993 = vmatpush1.bf16.msra.mxu0 %v1975
    %1994 = vmatprep.subr.bf16.mxu0 0
    %1995 = vmatpush1.bf16.msra.mxu0 %v1976
    %1996 = vmatprep.subr.bf16.mxu0 0
    %1997 = vmatpush1.bf16.msra.mxu0 %v1977
    %1998 = vmatprep.subr.bf16.mxu0 0
    %1999 = vmatpush1.bf16.msra.mxu0 %v1978
    %2000 = vmatprep.subr.bf16.mxu0 0
    %2001 = vmatpush1.bf16.msra.mxu0 %v1979
    %2002 = vmatprep.subr.bf16.mxu0 0
    %2003 = vmatpush1.bf16.msra.mxu0 %v1980
    %2004 = vmatprep.subr.bf16.mxu0 0
    %2005 = vmatpush1.bf16.msra.mxu0 %v1981
    %2006 = vmatprep.subr.bf16.mxu0 0
    %2007 = vmatpush1.bf16.msra.mxu0 0
    %2008 = vmatprep.subr.bf16.mxu0 0
    %2009 = vmatpush1.bf16.msra.mxu0 0
    %2010 = vmatprep.subr.bf16.mxu0 0
    %2011 = vmatpush1.bf16.msra.mxu0 0
    %2012 = vmatprep.subr.bf16.mxu0 0
    %2013 = vmatpush1.bf16.msra.mxu0 0
    %2014 = vmatprep.subr.bf16.mxu0 0
    %2015 = vmatpush1.bf16.msra.mxu0 0
    %2016 = vmatprep.subr.bf16.mxu0 0
    %2017 = vmatpush1.bf16.msra.mxu0 0
    %2018 = vmatprep.subr.bf16.mxu0 0
    %2019 = vmatpush1.bf16.msra.mxu0 0
    %2020 = vmatprep.subr.bf16.mxu0 0
    %2021 = vmatpush1.bf16.msra.mxu0 0
    %2022 = vmatprep.mubr.bf16.mxu0 0
    %2023 = vmatmul.mubr.bf16.gmra.mrb[0].mxu0 %v148
    %v2024 = vpop.f32.mrb[0].mxu0
    %v2025 = vadd.f32 0.0, %v2024
    %v2026 = vpop.f32.mrb[0].mxu0
    %v2027 = vpop.f32.mrb[0].mxu0
    %v2028 = vadd.f32 0.0, %v2027
    %v2029 = vpop.f32.mrb[0].mxu0
    %2030 = vmatprep.mubr.bf16.mxu0 0
    %2031 = vmatmul.mubr.bf16.gmra.mrb[0].mxu0 %v149
    %v2032 = vpop.f32.mrb[0].mxu0
    %v2033 = vadd.f32 0.0, %v2032
    %v2034 = vpop.f32.mrb[0].mxu0
    %v2035 = vpop.f32.mrb[0].mxu0
    %v2036 = vadd.f32 0.0, %v2035
    %v2037 = vpop.f32.mrb[0].mxu0
    %2038 = vmatprep.mubr.bf16.mxu0 0
    %2039 = vmatmul.mubr.bf16.gmra.mrb[0].mxu0 %v150
    %v2040 = vpop.f32.mrb[0].mxu0
    %v2041 = vadd.f32 0.0, %v2040
    %v2042 = vpop.f32.mrb[0].mxu0
    %v2043 = vpop.f32.mrb[0].mxu0
    %v2044 = vadd.f32 0.0, %v2043
    %v2045 = vpop.f32.mrb[0].mxu0
    %2046 = vmatprep.mubr.bf16.mxu0 0
    %2047 = vmatmul.mubr.bf16.gmra.mrb[0].mxu0 %v151
    %v2048 = vpop.f32.mrb[0].mxu0
    %v2049 = vadd.f32 0.0, %v2048
    %v2050 = vpop.f32.mrb[0].mxu0
    %v2051 = vpop.f32.mrb[0].mxu0
    %v2052 = vadd.f32 0.0, %v2051
    %v2053 = vpop.f32.mrb[0].mxu0
    %2054 = vmatprep.mubr.bf16.mxu0 0
    %2055 = vmatmul.mubr.bf16.gmra.mrb[0].mxu0 %v152
    %v2056 = vpop.f32.mrb[0].mxu0
    %v2057 = vadd.f32 0.0, %v2056
    %v2058 = vpop.f32.mrb[0].mxu0
    %v2059 = vpop.f32.mrb[0].mxu0
    %v2060 = vadd.f32 0.0, %v2059
    %v2061 = vpop.f32.mrb[0].mxu0
    %2062 = vmatprep.mubr.bf16.mxu0 0
    %2063 = vmatmul.mubr.bf16.gmra.mrb[0].mxu0 %v153
    %v2064 = vpop.f32.mrb[0].mxu0
    %v2065 = vadd.f32 0.0, %v2064
    %v2066 = vpop.f32.mrb[0].mxu0
    %v2067 = vpop.f32.mrb[0].mxu0
    %v2068 = vadd.f32 0.0, %v2067
    %v2069 = vpop.f32.mrb[0].mxu0
    %2070 = vmatprep.mubr.bf16.mxu0 0
    %2071 = vmatmul.mubr.bf16.gmra.mrb[0].mxu0 %v154
    %v2072 = vpop.f32.mrb[0].mxu0
    %v2073 = vadd.f32 0.0, %v2072
    %v2074 = vpop.f32.mrb[0].mxu0
    %v2075 = vpop.f32.mrb[0].mxu0
    %v2076 = vadd.f32 0.0, %v2075
    %v2077 = vpop.f32.mrb[0].mxu0
    %2078 = vmatprep.mubr.bf16.mxu0 0
    %2079 = vmatmul.mubr.bf16.gmra.mrb[0].mxu0 %v155
    %v2080 = vpop.f32.mrb[0].mxu0
    %v2081 = vadd.f32 0.0, %v2080
    %v2082 = vpop.f32.mrb[0].mxu0
    %v2083 = vpop.f32.mrb[0].mxu0
    %v2084 = vadd.f32 0.0, %v2083
    %v2085 = vpop.f32.mrb[0].mxu0
    %2086 = vdwg.mxu0
    %v2087 = vrot.slane %v2025, 2
    %v2088 = vrot.slane %v2028, 2
    %v2089 = vrot.slane %v2033, 2
    %v2090 = vrot.slane %v2036, 2
    %v2091 = vrot.slane %v2041, 2
    %v2092 = vrot.slane %v2044, 2
    %v2093 = vrot.slane %v2049, 2
    %v2094 = vrot.slane %v2052, 2
    %v2095 = vrot.slane %v2057, 2
    %v2096 = vrot.slane %v2060, 2
    %v2097 = vrot.slane %v2065, 2
    %v2098 = vrot.slane %v2068, 2
    %v2099 = vrot.slane %v2073, 2
    %v2100 = vrot.slane %v2076, 2
    %v2101 = vrot.slane %v2081, 2
    %v2102 = vrot.slane %v2084, 2
    %vm2103 = vcmp.lt.s32.totalorder %v487, 6
    %v2104 = vsel %vm2103, %v2101, %v2102
    %v2105 = vsel %vm2103, %v2100, %v2101
    %v2106 = vsel %vm2103, %v2099, %v2100
    %v2107 = vsel %vm2103, %v2098, %v2099
    %v2108 = vsel %vm2103, %v2097, %v2098
    %v2109 = vsel %vm2103, %v2096, %v2097
    %v2110 = vsel %vm2103, %v2095, %v2096
    %v2111 = vsel %vm2103, %v2094, %v2095
    %v2112 = vsel %vm2103, %v2093, %v2094
    %v2113 = vsel %vm2103, %v2092, %v2093
    %v2114 = vsel %vm2103, %v2091, %v2092
    %v2115 = vsel %vm2103, %v2090, %v2091
    %v2116 = vsel %vm2103, %v2089, %v2090
    %v2117 = vsel %vm2103, %v2088, %v2089
    %v2118 = vsel %vm2103, %v2087, %v2088
    %v2119 = vsel %vm2103, %v2102, %v2087
    %vm2120 = vcmp.lt.s32.totalorder %v76, 14
    %vm2121 = vcmp.lt.s32.totalorder %v77, 14
    %vm2122 = vcmp.lt.s32.totalorder %v78, 14
    %vm2123 = vcmp.lt.s32.totalorder %v79, 14
    %vm2124 = vcmp.lt.s32.totalorder %v80, 14
    %vm2125 = vcmp.lt.s32.totalorder %v81, 14
    %vm2126 = vcmp.lt.s32.totalorder %v82, 14
    %vm2127 = vcmp.lt.s32.totalorder %v83, 14
    %vm2128 = vcmp.lt.s32.totalorder %v84, 14
    %vm2129 = vcmp.lt.s32.totalorder %v85, 14
    %vm2130 = vcmp.lt.s32.totalorder %v86, 14
    %vm2131 = vcmp.lt.s32.totalorder %v87, 14
    %vm2132 = vcmp.lt.s32.totalorder %v88, 14
    %vm2133 = vcmp.lt.s32.totalorder %v89, 14
    %vm2134 = vcmp.lt.s32.totalorder %v90, 14
    %vm2135 = vcmp.lt.s32.totalorder %v91, 14
    %v2136 = vsel %vm2120, 1, 0
    %v2137 = vsel %vm2121, 1, 0
    %v2138 = vsel %vm2122, 1, 0
    %v2139 = vsel %vm2123, 1, 0
    %v2140 = vsel %vm2124, 1, 0
    %v2141 = vsel %vm2125, 1, 0
    %v2142 = vsel %vm2126, 1, 0
    %v2143 = vsel %vm2127, 1, 0
    %v2144 = vsel %vm2128, 1, 0
    %v2145 = vsel %vm2129, 1, 0
    %v2146 = vsel %vm2130, 1, 0
    %v2147 = vsel %vm2131, 1, 0
    %v2148 = vsel %vm2132, 1, 0
    %v2149 = vsel %vm2133, 1, 0
    %v2150 = vsel %vm2134, 1, 0
    %v2151 = vsel %vm2135, 1, 0
    %2152 = vset.pattern.permute.xlu0 0
    %2153 = vperm.xlu0 %2152, %v2136
    %v2154 = vpop.permute.xlu0 %2153
    %2155 = vset.pattern.permute.xlu0 0
    %2156 = vperm.xlu0 %2155, %v2137
    %v2157 = vpop.permute.xlu0 %2156
    %2158 = vset.pattern.permute.xlu0 0
    %2159 = vperm.xlu0 %2158, %v2138
    %v2160 = vpop.permute.xlu0 %2159
    %2161 = vset.pattern.permute.xlu0 0
    %2162 = vperm.xlu0 %2161, %v2139
    %v2163 = vpop.permute.xlu0 %2162
    %2164 = vset.pattern.permute.xlu0 0
    %2165 = vperm.xlu0 %2164, %v2140
    %v2166 = vpop.permute.xlu0 %2165
    %2167 = vset.pattern.permute.xlu0 0
    %2168 = vperm.xlu0 %2167, %v2141
    %v2169 = vpop.permute.xlu0 %2168
    %2170 = vset.pattern.permute.xlu0 0
    %2171 = vperm.xlu0 %2170, %v2142
    %v2172 = vpop.permute.xlu0 %2171
    %2173 = vset.pattern.permute.xlu0 0
    %2174 = vperm.xlu0 %2173, %v2143
    %v2175 = vpop.permute.xlu0 %2174
    %2176 = vset.pattern.permute.xlu0 0
    %2177 = vperm.xlu0 %2176, %v2144
    %v2178 = vpop.permute.xlu0 %2177
    %2179 = vset.pattern.permute.xlu0 0
    %2180 = vperm.xlu0 %2179, %v2145
    %v2181 = vpop.permute.xlu0 %2180
    %2182 = vset.pattern.permute.xlu0 0
    %2183 = vperm.xlu0 %2182, %v2146
    %v2184 = vpop.permute.xlu0 %2183
    %2185 = vset.pattern.permute.xlu0 0
    %2186 = vperm.xlu0 %2185, %v2147
    %v2187 = vpop.permute.xlu0 %2186
    %2188 = vset.pattern.permute.xlu0 0
    %2189 = vperm.xlu0 %2188, %v2148
    %v2190 = vpop.permute.xlu0 %2189
    %2191 = vset.pattern.permute.xlu0 0
    %2192 = vperm.xlu0 %2191, %v2149
    %v2193 = vpop.permute.xlu0 %2192
    %2194 = vset.pattern.permute.xlu0 0
    %2195 = vperm.xlu0 %2194, %v2150
    %v2196 = vpop.permute.xlu0 %2195
    %2197 = vset.pattern.permute.xlu0 0
    %2198 = vperm.xlu0 %2197, %v2151
    %v2199 = vpop.permute.xlu0 %2198
    %vm2200 = vcmp.eq.s32.totalorder %v2154, 1
    %vm2201 = vcmp.eq.s32.totalorder %v2157, 1
    %vm2202 = vcmp.eq.s32.totalorder %v2160, 1
    %vm2203 = vcmp.eq.s32.totalorder %v2163, 1
    %vm2204 = vcmp.eq.s32.totalorder %v2166, 1
    %vm2205 = vcmp.eq.s32.totalorder %v2169, 1
    %vm2206 = vcmp.eq.s32.totalorder %v2172, 1
    %vm2207 = vcmp.eq.s32.totalorder %v2175, 1
    %vm2208 = vcmp.eq.s32.totalorder %v2178, 1
    %vm2209 = vcmp.eq.s32.totalorder %v2181, 1
    %vm2210 = vcmp.eq.s32.totalorder %v2184, 1
    %vm2211 = vcmp.eq.s32.totalorder %v2187, 1
    %vm2212 = vcmp.eq.s32.totalorder %v2190, 1
    %vm2213 = vcmp.eq.s32.totalorder %v2193, 1
    %vm2214 = vcmp.eq.s32.totalorder %v2196, 1
    %vm2215 = vcmp.eq.s32.totalorder %v2199, 1
    %v2216 = vsel %vm2200, %v2118, 0.0
    %v2217 = vsel %vm2201, %v2117, 0.0
    %v2218 = vsel %vm2202, %v2116, 0.0
    %v2219 = vsel %vm2203, %v2115, 0.0
    %v2220 = vsel %vm2204, %v2114, 0.0
    %v2221 = vsel %vm2205, %v2113, 0.0
    %v2222 = vsel %vm2206, %v2112, 0.0
    %v2223 = vsel %vm2207, %v2111, 0.0
    %v2224 = vsel %vm2208, %v2110, 0.0
    %v2225 = vsel %vm2209, %v2109, 0.0
    %v2226 = vsel %vm2210, %v2108, 0.0
    %v2227 = vsel %vm2211, %v2107, 0.0
    %v2228 = vsel %vm2212, %v2106, 0.0
    %v2229 = vsel %vm2213, %v2105, 0.0
    %v2230 = vsel %vm2214, %v2104, 0.0
    %v2231 = vsel %vm2215, %v2119, 0.0
    %v2232 = vadd.f32 %v1909, %v2216
    %v2233 = vadd.f32 %v1910, %v2217
    %v2234 = vadd.f32 %v1911, %v2218
    %v2235 = vadd.f32 %v1912, %v2219
    %v2236 = vadd.f32 %v1913, %v2220
    %v2237 = vadd.f32 %v1914, %v2221
    %v2238 = vadd.f32 %v1915, %v2222
    %v2239 = vadd.f32 %v1916, %v2223
    %v2240 = vadd.f32 %v1917, %v2224
    %v2241 = vadd.f32 %v1918, %v2225
    %v2242 = vadd.f32 %v1919, %v2226
    %v2243 = vadd.f32 %v1920, %v2227
    %v2244 = vadd.f32 %v1921, %v2228
    %v2245 = vadd.f32 %v1922, %v2229
    %v2246 = vadd.f32 %v1923, %v2230
    %v2247 = vadd.f32 %v1924, %v2231
    %s2248 = scalar_lea.vmem [#allocation3], 448
    %v2249 = vld [vmem:[%s2248] sm:$0xf]
    %v2250 = vld [vmem:[%s2248 + $0x4] sm:$0xf]
    %v2251 = vld [vmem:[%s2248 + $0x8] sm:$0xf]
    %v2252 = vld [vmem:[%s2248 + $0xc] sm:$0xf]
    %v2253 = vld [vmem:[%s2248 + $0x10] sm:$0xf]
    %v2254 = vld [vmem:[%s2248 + $0x14] sm:$0xf]
    %v2255 = vld [vmem:[%s2248 + $0x18] sm:$0xf]
    %v2256 = vld [vmem:[%s2248 + $0x1c] sm:$0xf]
    %v2257 = vld [vmem:[%s2248 + $0x20] sm:$0xf]
    %v2258 = vld [vmem:[%s2248 + $0x24] sm:$0xf]
    %v2259 = vld [vmem:[%s2248 + $0x28] sm:$0xf]
    %v2260 = vld [vmem:[%s2248 + $0x2c] sm:$0xf]
    %v2261 = vld [vmem:[%s2248 + $0x30] sm:$0xf]
    %v2262 = vld [vmem:[%s2248 + $0x34] sm:$0xf]
    %v2263 = vld [vmem:[%s2248 + $0x38] sm:$0xf]
    %v2264 = vld [vmem:[%s2248 + $0x3c] sm:$0xf]
    %v2281 = vunpack.c.l.b16 %v2249
    %v2282 = vunpack.c.l.b16 %v2250
    %v2283 = vunpack.c.l.b16 %v2251
    %v2284 = vunpack.c.l.b16 %v2252
    %v2285 = vunpack.c.l.b16 %v2253
    %v2286 = vunpack.c.l.b16 %v2254
    %v2287 = vunpack.c.l.b16 %v2255
    %v2288 = vunpack.c.l.b16 %v2256
    %v2289 = vunpack.c.l.b16 %v2257
    %v2290 = vunpack.c.l.b16 %v2258
    %v2291 = vunpack.c.l.b16 %v2259
    %v2292 = vunpack.c.l.b16 %v2260
    %v2293 = vunpack.c.l.b16 %v2261
    %v2294 = vunpack.c.l.b16 %v2262
    %v2295 = vunpack.c.l.b16 %v2263
    %v2296 = vunpack.c.l.b16 %v2264
    %v2297 = vpack.c.b16 %v2282, %v2281
    %v2298 = vpack.c.b16 %v2284, %v2283
    %v2299 = vpack.c.b16 %v2286, %v2285
    %v2300 = vpack.c.b16 %v2288, %v2287
    %v2301 = vpack.c.b16 %v2290, %v2289
    %v2302 = vpack.c.b16 %v2292, %v2291
    %v2303 = vpack.c.b16 %v2294, %v2293
    %v2304 = vpack.c.b16 %v2296, %v2295
    %2313 = vmatprep.subr.bf16.mxu0 0
    %2314 = vmatpush1.bf16.msra.mxu0 %v2297
    %2315 = vmatprep.subr.bf16.mxu0 0
    %2316 = vmatpush1.bf16.msra.mxu0 %v2298
    %2317 = vmatprep.subr.bf16.mxu0 0
    %2318 = vmatpush1.bf16.msra.mxu0 %v2299
    %2319 = vmatprep.subr.bf16.mxu0 0
    %2320 = vmatpush1.bf16.msra.mxu0 %v2300
    %2321 = vmatprep.subr.bf16.mxu0 0
    %2322 = vmatpush1.bf16.msra.mxu0 %v2301
    %2323 = vmatprep.subr.bf16.mxu0 0
    %2324 = vmatpush1.bf16.msra.mxu0 %v2302
    %2325 = vmatprep.subr.bf16.mxu0 0
    %2326 = vmatpush1.bf16.msra.mxu0 %v2303
    %2327 = vmatprep.subr.bf16.mxu0 0
    %2328 = vmatpush1.bf16.msra.mxu0 %v2304
    %2329 = vmatprep.subr.bf16.mxu0 0
    %2330 = vmatpush1.bf16.msra.mxu0 0
    %2331 = vmatprep.subr.bf16.mxu0 0
    %2332 = vmatpush1.bf16.msra.mxu0 0
    %2333 = vmatprep.subr.bf16.mxu0 0
    %2334 = vmatpush1.bf16.msra.mxu0 0
    %2335 = vmatprep.subr.bf16.mxu0 0
    %2336 = vmatpush1.bf16.msra.mxu0 0
    %2337 = vmatprep.subr.bf16.mxu0 0
    %2338 = vmatpush1.bf16.msra.mxu0 0
    %2339 = vmatprep.subr.bf16.mxu0 0
    %2340 = vmatpush1.bf16.msra.mxu0 0
    %2341 = vmatprep.subr.bf16.mxu0 0
    %2342 = vmatpush1.bf16.msra.mxu0 0
    %2343 = vmatprep.subr.bf16.mxu0 0
    %2344 = vmatpush1.bf16.msra.mxu0 0
    %2345 = vmatprep.mubr.bf16.mxu0 0
    %2346 = vmatmul.mubr.bf16.gmra.mrb[0].mxu0 %v148
    %v2347 = vpop.f32.mrb[0].mxu0
    %v2348 = vadd.f32 0.0, %v2347
    %v2349 = vpop.f32.mrb[0].mxu0
    %v2350 = vpop.f32.mrb[0].mxu0
    %v2351 = vadd.f32 0.0, %v2350
    %v2352 = vpop.f32.mrb[0].mxu0
    %2353 = vmatprep.mubr.bf16.mxu0 0
    %2354 = vmatmul.mubr.bf16.gmra.mrb[0].mxu0 %v149
    %v2355 = vpop.f32.mrb[0].mxu0
    %v2356 = vadd.f32 0.0, %v2355
    %v2357 = vpop.f32.mrb[0].mxu0
    %v2358 = vpop.f32.mrb[0].mxu0
    %v2359 = vadd.f32 0.0, %v2358
    %v2360 = vpop.f32.mrb[0].mxu0
    %2361 = vmatprep.mubr.bf16.mxu0 0
    %2362 = vmatmul.mubr.bf16.gmra.mrb[0].mxu0 %v150
    %v2363 = vpop.f32.mrb[0].mxu0
    %v2364 = vadd.f32 0.0, %v2363
    %v2365 = vpop.f32.mrb[0].mxu0
    %v2366 = vpop.f32.mrb[0].mxu0
    %v2367 = vadd.f32 0.0, %v2366
    %v2368 = vpop.f32.mrb[0].mxu0
    %2369 = vmatprep.mubr.bf16.mxu0 0
    %2370 = vmatmul.mubr.bf16.gmra.mrb[0].mxu0 %v151
    %v2371 = vpop.f32.mrb[0].mxu0
    %v2372 = vadd.f32 0.0, %v2371
    %v2373 = vpop.f32.mrb[0].mxu0
    %v2374 = vpop.f32.mrb[0].mxu0
    %v2375 = vadd.f32 0.0, %v2374
    %v2376 = vpop.f32.mrb[0].mxu0
    %2377 = vmatprep.mubr.bf16.mxu0 0
    %2378 = vmatmul.mubr.bf16.gmra.mrb[0].mxu0 %v152
    %v2379 = vpop.f32.mrb[0].mxu0
    %v2380 = vadd.f32 0.0, %v2379
    %v2381 = vpop.f32.mrb[0].mxu0
    %v2382 = vpop.f32.mrb[0].mxu0
    %v2383 = vadd.f32 0.0, %v2382
    %v2384 = vpop.f32.mrb[0].mxu0
    %2385 = vmatprep.mubr.bf16.mxu0 0
    %2386 = vmatmul.mubr.bf16.gmra.mrb[0].mxu0 %v153
    %v2387 = vpop.f32.mrb[0].mxu0
    %v2388 = vadd.f32 0.0, %v2387
    %v2389 = vpop.f32.mrb[0].mxu0
    %v2390 = vpop.f32.mrb[0].mxu0
    %v2391 = vadd.f32 0.0, %v2390
    %v2392 = vpop.f32.mrb[0].mxu0
    %2393 = vmatprep.mubr.bf16.mxu0 0
    %2394 = vmatmul.mubr.bf16.gmra.mrb[0].mxu0 %v154
    %v2395 = vpop.f32.mrb[0].mxu0
    %v2396 = vadd.f32 0.0, %v2395
    %v2397 = vpop.f32.mrb[0].mxu0
    %v2398 = vpop.f32.mrb[0].mxu0
    %v2399 = vadd.f32 0.0, %v2398
    %v2400 = vpop.f32.mrb[0].mxu0
    %2401 = vmatprep.mubr.bf16.mxu0 0
    %2402 = vmatmul.mubr.bf16.gmra.mrb[0].mxu0 %v155
    %v2403 = vpop.f32.mrb[0].mxu0
    %v2404 = vadd.f32 0.0, %v2403
    %v2405 = vpop.f32.mrb[0].mxu0
    %v2406 = vpop.f32.mrb[0].mxu0
    %v2407 = vadd.f32 0.0, %v2406
    %v2408 = vpop.f32.mrb[0].mxu0
    %2409 = vdwg.mxu0
    %v2410 = vrot.slane %v2348, 3
    %v2411 = vrot.slane %v2351, 3
    %v2412 = vrot.slane %v2356, 3
    %v2413 = vrot.slane %v2359, 3
    %v2414 = vrot.slane %v2364, 3
    %v2415 = vrot.slane %v2367, 3
    %v2416 = vrot.slane %v2372, 3
    %v2417 = vrot.slane %v2375, 3
    %v2418 = vrot.slane %v2380, 3
    %v2419 = vrot.slane %v2383, 3
    %v2420 = vrot.slane %v2388, 3
    %v2421 = vrot.slane %v2391, 3
    %v2422 = vrot.slane %v2396, 3
    %v2423 = vrot.slane %v2399, 3
    %v2424 = vrot.slane %v2404, 3
    %v2425 = vrot.slane %v2407, 3
    %vm2426 = vcmp.lt.s32.totalorder %v487, 5
    %v2427 = vsel %vm2426, %v2424, %v2425
    %v2428 = vsel %vm2426, %v2423, %v2424
    %v2429 = vsel %vm2426, %v2422, %v2423
    %v2430 = vsel %vm2426, %v2421, %v2422
    %v2431 = vsel %vm2426, %v2420, %v2421
    %v2432 = vsel %vm2426, %v2419, %v2420
    %v2433 = vsel %vm2426, %v2418, %v2419
    %v2434 = vsel %vm2426, %v2417, %v2418
    %v2435 = vsel %vm2426, %v2416, %v2417
    %v2436 = vsel %vm2426, %v2415, %v2416
    %v2437 = vsel %vm2426, %v2414, %v2415
    %v2438 = vsel %vm2426, %v2413, %v2414
    %v2439 = vsel %vm2426, %v2412, %v2413
    %v2440 = vsel %vm2426, %v2411, %v2412
    %v2441 = vsel %vm2426, %v2410, %v2411
    %v2442 = vsel %vm2426, %v2425, %v2410
    %vm2443 = vcmp.lt.s32.totalorder %v76, 13
    %vm2444 = vcmp.lt.s32.totalorder %v77, 13
    %vm2445 = vcmp.lt.s32.totalorder %v78, 13
    %vm2446 = vcmp.lt.s32.totalorder %v79, 13
    %vm2447 = vcmp.lt.s32.totalorder %v80, 13
    %vm2448 = vcmp.lt.s32.totalorder %v81, 13
    %vm2449 = vcmp.lt.s32.totalorder %v82, 13
    %vm2450 = vcmp.lt.s32.totalorder %v83, 13
    %vm2451 = vcmp.lt.s32.totalorder %v84, 13
    %vm2452 = vcmp.lt.s32.totalorder %v85, 13
    %vm2453 = vcmp.lt.s32.totalorder %v86, 13
    %vm2454 = vcmp.lt.s32.totalorder %v87, 13
    %vm2455 = vcmp.lt.s32.totalorder %v88, 13
    %vm2456 = vcmp.lt.s32.totalorder %v89, 13
    %vm2457 = vcmp.lt.s32.totalorder %v90, 13
    %vm2458 = vcmp.lt.s32.totalorder %v91, 13
    %v2459 = vsel %vm2443, 1, 0
    %v2460 = vsel %vm2444, 1, 0
    %v2461 = vsel %vm2445, 1, 0
    %v2462 = vsel %vm2446, 1, 0
    %v2463 = vsel %vm2447, 1, 0
    %v2464 = vsel %vm2448, 1, 0
    %v2465 = vsel %vm2449, 1, 0
    %v2466 = vsel %vm2450, 1, 0
    %v2467 = vsel %vm2451, 1, 0
    %v2468 = vsel %vm2452, 1, 0
    %v2469 = vsel %vm2453, 1, 0
    %v2470 = vsel %vm2454, 1, 0
    %v2471 = vsel %vm2455, 1, 0
    %v2472 = vsel %vm2456, 1, 0
    %v2473 = vsel %vm2457, 1, 0
    %v2474 = vsel %vm2458, 1, 0
    %2475 = vset.pattern.permute.xlu0 0
    %2476 = vperm.xlu0 %2475, %v2459
    %v2477 = vpop.permute.xlu0 %2476
    %2478 = vset.pattern.permute.xlu0 0
    %2479 = vperm.xlu0 %2478, %v2460
    %v2480 = vpop.permute.xlu0 %2479
    %2481 = vset.pattern.permute.xlu0 0
    %2482 = vperm.xlu0 %2481, %v2461
    %v2483 = vpop.permute.xlu0 %2482
    %2484 = vset.pattern.permute.xlu0 0
    %2485 = vperm.xlu0 %2484, %v2462
    %v2486 = vpop.permute.xlu0 %2485
    %2487 = vset.pattern.permute.xlu0 0
    %2488 = vperm.xlu0 %2487, %v2463
    %v2489 = vpop.permute.xlu0 %2488
    %2490 = vset.pattern.permute.xlu0 0
    %2491 = vperm.xlu0 %2490, %v2464
    %v2492 = vpop.permute.xlu0 %2491
    %2493 = vset.pattern.permute.xlu0 0
    %2494 = vperm.xlu0 %2493, %v2465
    %v2495 = vpop.permute.xlu0 %2494
    %2496 = vset.pattern.permute.xlu0 0
    %2497 = vperm.xlu0 %2496, %v2466
    %v2498 = vpop.permute.xlu0 %2497
    %2499 = vset.pattern.permute.xlu0 0
    %2500 = vperm.xlu0 %2499, %v2467
    %v2501 = vpop.permute.xlu0 %2500
    %2502 = vset.pattern.permute.xlu0 0
    %2503 = vperm.xlu0 %2502, %v2468
    %v2504 = vpop.permute.xlu0 %2503
    %2505 = vset.pattern.permute.xlu0 0
    %2506 = vperm.xlu0 %2505, %v2469
    %v2507 = vpop.permute.xlu0 %2506
    %2508 = vset.pattern.permute.xlu0 0
    %2509 = vperm.xlu0 %2508, %v2470
    %v2510 = vpop.permute.xlu0 %2509
    %2511 = vset.pattern.permute.xlu0 0
    %2512 = vperm.xlu0 %2511, %v2471
    %v2513 = vpop.permute.xlu0 %2512
    %2514 = vset.pattern.permute.xlu0 0
    %2515 = vperm.xlu0 %2514, %v2472
    %v2516 = vpop.permute.xlu0 %2515
    %2517 = vset.pattern.permute.xlu0 0
    %2518 = vperm.xlu0 %2517, %v2473
    %v2519 = vpop.permute.xlu0 %2518
    %2520 = vset.pattern.permute.xlu0 0
    %2521 = vperm.xlu0 %2520, %v2474
    %v2522 = vpop.permute.xlu0 %2521
    %vm2523 = vcmp.eq.s32.totalorder %v2477, 1
    %vm2524 = vcmp.eq.s32.totalorder %v2480, 1
    %vm2525 = vcmp.eq.s32.totalorder %v2483, 1
    %vm2526 = vcmp.eq.s32.totalorder %v2486, 1
    %vm2527 = vcmp.eq.s32.totalorder %v2489, 1
    %vm2528 = vcmp.eq.s32.totalorder %v2492, 1
    %vm2529 = vcmp.eq.s32.totalorder %v2495, 1
    %vm2530 = vcmp.eq.s32.totalorder %v2498, 1
    %vm2531 = vcmp.eq.s32.totalorder %v2501, 1
    %vm2532 = vcmp.eq.s32.totalorder %v2504, 1
    %vm2533 = vcmp.eq.s32.totalorder %v2507, 1
    %vm2534 = vcmp.eq.s32.totalorder %v2510, 1
    %vm2535 = vcmp.eq.s32.totalorder %v2513, 1
    %vm2536 = vcmp.eq.s32.totalorder %v2516, 1
    %vm2537 = vcmp.eq.s32.totalorder %v2519, 1
    %vm2538 = vcmp.eq.s32.totalorder %v2522, 1
    %v2539 = vsel %vm2523, %v2441, 0.0
    %v2540 = vsel %vm2524, %v2440, 0.0
    %v2541 = vsel %vm2525, %v2439, 0.0
    %v2542 = vsel %vm2526, %v2438, 0.0
    %v2543 = vsel %vm2527, %v2437, 0.0
    %v2544 = vsel %vm2528, %v2436, 0.0
    %v2545 = vsel %vm2529, %v2435, 0.0
    %v2546 = vsel %vm2530, %v2434, 0.0
    %v2547 = vsel %vm2531, %v2433, 0.0
    %v2548 = vsel %vm2532, %v2432, 0.0
    %v2549 = vsel %vm2533, %v2431, 0.0
    %v2550 = vsel %vm2534, %v2430, 0.0
    %v2551 = vsel %vm2535, %v2429, 0.0
    %v2552 = vsel %vm2536, %v2428, 0.0
    %v2553 = vsel %vm2537, %v2427, 0.0
    %v2554 = vsel %vm2538, %v2442, 0.0
    %v2555 = vadd.f32 %v2232, %v2539
    %v2556 = vadd.f32 %v2233, %v2540
    %v2557 = vadd.f32 %v2234, %v2541
    %v2558 = vadd.f32 %v2235, %v2542
    %v2559 = vadd.f32 %v2236, %v2543
    %v2560 = vadd.f32 %v2237, %v2544
    %v2561 = vadd.f32 %v2238, %v2545
    %v2562 = vadd.f32 %v2239, %v2546
    %v2563 = vadd.f32 %v2240, %v2547
    %v2564 = vadd.f32 %v2241, %v2548
    %v2565 = vadd.f32 %v2242, %v2549
    %v2566 = vadd.f32 %v2243, %v2550
    %v2567 = vadd.f32 %v2244, %v2551
    %v2568 = vadd.f32 %v2245, %v2552
    %v2569 = vadd.f32 %v2246, %v2553
    %v2570 = vadd.f32 %v2247, %v2554
    %s2571 = scalar_lea.vmem [#allocation3], 512
    %v2572 = vld [vmem:[%s2571] sm:$0xf]
    %v2573 = vld [vmem:[%s2571 + $0x4] sm:$0xf]
    %v2574 = vld [vmem:[%s2571 + $0x8] sm:$0xf]
    %v2575 = vld [vmem:[%s2571 + $0xc] sm:$0xf]
    %v2576 = vld [vmem:[%s2571 + $0x10] sm:$0xf]
    %v2577 = vld [vmem:[%s2571 + $0x14] sm:$0xf]
    %v2578 = vld [vmem:[%s2571 + $0x18] sm:$0xf]
    %v2579 = vld [vmem:[%s2571 + $0x1c] sm:$0xf]
    %v2580 = vld [vmem:[%s2571 + $0x20] sm:$0xf]
    %v2581 = vld [vmem:[%s2571 + $0x24] sm:$0xf]
    %v2582 = vld [vmem:[%s2571 + $0x28] sm:$0xf]
    %v2583 = vld [vmem:[%s2571 + $0x2c] sm:$0xf]
    %v2584 = vld [vmem:[%s2571 + $0x30] sm:$0xf]
    %v2585 = vld [vmem:[%s2571 + $0x34] sm:$0xf]
    %v2586 = vld [vmem:[%s2571 + $0x38] sm:$0xf]
    %v2587 = vld [vmem:[%s2571 + $0x3c] sm:$0xf]
    %v2604 = vunpack.c.l.b16 %v2572
    %v2605 = vunpack.c.l.b16 %v2573
    %v2606 = vunpack.c.l.b16 %v2574
    %v2607 = vunpack.c.l.b16 %v2575
    %v2608 = vunpack.c.l.b16 %v2576
    %v2609 = vunpack.c.l.b16 %v2577
    %v2610 = vunpack.c.l.b16 %v2578
    %v2611 = vunpack.c.l.b16 %v2579
    %v2612 = vunpack.c.l.b16 %v2580
    %v2613 = vunpack.c.l.b16 %v2581
    %v2614 = vunpack.c.l.b16 %v2582
    %v2615 = vunpack.c.l.b16 %v2583
    %v2616 = vunpack.c.l.b16 %v2584
    %v2617 = vunpack.c.l.b16 %v2585
    %v2618 = vunpack.c.l.b16 %v2586
    %v2619 = vunpack.c.l.b16 %v2587
    %v2620 = vpack.c.b16 %v2605, %v2604
    %v2621 = vpack.c.b16 %v2607, %v2606
    %v2622 = vpack.c.b16 %v2609, %v2608
    %v2623 = vpack.c.b16 %v2611, %v2610
    %v2624 = vpack.c.b16 %v2613, %v2612
    %v2625 = vpack.c.b16 %v2615, %v2614
    %v2626 = vpack.c.b16 %v2617, %v2616
    %v2627 = vpack.c.b16 %v2619, %v2618
    %2636 = vmatprep.subr.bf16.mxu0 0
    %2637 = vmatpush1.bf16.msra.mxu0 %v2620
    %2638 = vmatprep.subr.bf16.mxu0 0
    %2639 = vmatpush1.bf16.msra.mxu0 %v2621
    %2640 = vmatprep.subr.bf16.mxu0 0
    %2641 = vmatpush1.bf16.msra.mxu0 %v2622
    %2642 = vmatprep.subr.bf16.mxu0 0
    %2643 = vmatpush1.bf16.msra.mxu0 %v2623
    %2644 = vmatprep.subr.bf16.mxu0 0
    %2645 = vmatpush1.bf16.msra.mxu0 %v2624
    %2646 = vmatprep.subr.bf16.mxu0 0
    %2647 = vmatpush1.bf16.msra.mxu0 %v2625
    %2648 = vmatprep.subr.bf16.mxu0 0
    %2649 = vmatpush1.bf16.msra.mxu0 %v2626
    %2650 = vmatprep.subr.bf16.mxu0 0
    %2651 = vmatpush1.bf16.msra.mxu0 %v2627
    %2652 = vmatprep.subr.bf16.mxu0 0
    %2653 = vmatpush1.bf16.msra.mxu0 0
    %2654 = vmatprep.subr.bf16.mxu0 0
    %2655 = vmatpush1.bf16.msra.mxu0 0
    %2656 = vmatprep.subr.bf16.mxu0 0
    %2657 = vmatpush1.bf16.msra.mxu0 0
    %2658 = vmatprep.subr.bf16.mxu0 0
    %2659 = vmatpush1.bf16.msra.mxu0 0
    %2660 = vmatprep.subr.bf16.mxu0 0
    %2661 = vmatpush1.bf16.msra.mxu0 0
    %2662 = vmatprep.subr.bf16.mxu0 0
    %2663 = vmatpush1.bf16.msra.mxu0 0
    %2664 = vmatprep.subr.bf16.mxu0 0
    %2665 = vmatpush1.bf16.msra.mxu0 0
    %2666 = vmatprep.subr.bf16.mxu0 0
    %2667 = vmatpush1.bf16.msra.mxu0 0
    %2668 = vmatprep.mubr.bf16.mxu0 0
    %2669 = vmatmul.mubr.bf16.gmra.mrb[0].mxu0 %v148
    %v2670 = vpop.f32.mrb[0].mxu0
    %v2671 = vadd.f32 0.0, %v2670
    %v2672 = vpop.f32.mrb[0].mxu0
    %v2673 = vpop.f32.mrb[0].mxu0
    %v2674 = vadd.f32 0.0, %v2673
    %v2675 = vpop.f32.mrb[0].mxu0
    %2676 = vmatprep.mubr.bf16.mxu0 0
    %2677 = vmatmul.mubr.bf16.gmra.mrb[0].mxu0 %v149
    %v2678 = vpop.f32.mrb[0].mxu0
    %v2679 = vadd.f32 0.0, %v2678
    %v2680 = vpop.f32.mrb[0].mxu0
    %v2681 = vpop.f32.mrb[0].mxu0
    %v2682 = vadd.f32 0.0, %v2681
    %v2683 = vpop.f32.mrb[0].mxu0
    %2684 = vmatprep.mubr.bf16.mxu0 0
    %2685 = vmatmul.mubr.bf16.gmra.mrb[0].mxu0 %v150
    %v2686 = vpop.f32.mrb[0].mxu0
    %v2687 = vadd.f32 0.0, %v2686
    %v2688 = vpop.f32.mrb[0].mxu0
    %v2689 = vpop.f32.mrb[0].mxu0
    %v2690 = vadd.f32 0.0, %v2689
    %v2691 = vpop.f32.mrb[0].mxu0
    %2692 = vmatprep.mubr.bf16.mxu0 0
    %2693 = vmatmul.mubr.bf16.gmra.mrb[0].mxu0 %v151
    %v2694 = vpop.f32.mrb[0].mxu0
    %v2695 = vadd.f32 0.0, %v2694
    %v2696 = vpop.f32.mrb[0].mxu0
    %v2697 = vpop.f32.mrb[0].mxu0
    %v2698 = vadd.f32 0.0, %v2697
    %v2699 = vpop.f32.mrb[0].mxu0
    %2700 = vmatprep.mubr.bf16.mxu0 0
    %2701 = vmatmul.mubr.bf16.gmra.mrb[0].mxu0 %v152
    %v2702 = vpop.f32.mrb[0].mxu0
    %v2703 = vadd.f32 0.0, %v2702
    %v2704 = vpop.f32.mrb[0].mxu0
    %v2705 = vpop.f32.mrb[0].mxu0
    %v2706 = vadd.f32 0.0, %v2705
    %v2707 = vpop.f32.mrb[0].mxu0
    %2708 = vmatprep.mubr.bf16.mxu0 0
    %2709 = vmatmul.mubr.bf16.gmra.mrb[0].mxu0 %v153
    %v2710 = vpop.f32.mrb[0].mxu0
    %v2711 = vadd.f32 0.0, %v2710
    %v2712 = vpop.f32.mrb[0].mxu0
    %v2713 = vpop.f32.mrb[0].mxu0
    %v2714 = vadd.f32 0.0, %v2713
    %v2715 = vpop.f32.mrb[0].mxu0
    %2716 = vmatprep.mubr.bf16.mxu0 0
    %2717 = vmatmul.mubr.bf16.gmra.mrb[0].mxu0 %v154
    %v2718 = vpop.f32.mrb[0].mxu0
    %v2719 = vadd.f32 0.0, %v2718
    %v2720 = vpop.f32.mrb[0].mxu0
    %v2721 = vpop.f32.mrb[0].mxu0
    %v2722 = vadd.f32 0.0, %v2721
    %v2723 = vpop.f32.mrb[0].mxu0
    %2724 = vmatprep.mubr.bf16.mxu0 0
    %2725 = vmatmul.mubr.bf16.gmra.mrb[0].mxu0 %v155
    %v2726 = vpop.f32.mrb[0].mxu0
    %v2727 = vadd.f32 0.0, %v2726
    %v2728 = vpop.f32.mrb[0].mxu0
    %v2729 = vpop.f32.mrb[0].mxu0
    %v2730 = vadd.f32 0.0, %v2729
    %v2731 = vpop.f32.mrb[0].mxu0
    %2732 = vdwg.mxu0
    %v2733 = vrot.slane %v2671, 4
    %v2734 = vrot.slane %v2674, 4
    %v2735 = vrot.slane %v2679, 4
    %v2736 = vrot.slane %v2682, 4
    %v2737 = vrot.slane %v2687, 4
    %v2738 = vrot.slane %v2690, 4
    %v2739 = vrot.slane %v2695, 4
    %v2740 = vrot.slane %v2698, 4
    %v2741 = vrot.slane %v2703, 4
    %v2742 = vrot.slane %v2706, 4
    %v2743 = vrot.slane %v2711, 4
    %v2744 = vrot.slane %v2714, 4
    %v2745 = vrot.slane %v2719, 4
    %v2746 = vrot.slane %v2722, 4
    %v2747 = vrot.slane %v2727, 4
    %v2748 = vrot.slane %v2730, 4
    %v2749 = vsel %vm488, %v2747, %v2748
    %v2750 = vsel %vm488, %v2746, %v2747
    %v2751 = vsel %vm488, %v2745, %v2746
    %v2752 = vsel %vm488, %v2744, %v2745
    %v2753 = vsel %vm488, %v2743, %v2744
    %v2754 = vsel %vm488, %v2742, %v2743
    %v2755 = vsel %vm488, %v2741, %v2742
    %v2756 = vsel %vm488, %v2740, %v2741
    %v2757 = vsel %vm488, %v2739, %v2740
    %v2758 = vsel %vm488, %v2738, %v2739
    %v2759 = vsel %vm488, %v2737, %v2738
    %v2760 = vsel %vm488, %v2736, %v2737
    %v2761 = vsel %vm488, %v2735, %v2736
    %v2762 = vsel %vm488, %v2734, %v2735
    %v2763 = vsel %vm488, %v2733, %v2734
    %v2764 = vsel %vm488, %v2748, %v2733
    %vm2765 = vcmp.lt.s32.totalorder %v76, 12
    %vm2766 = vcmp.lt.s32.totalorder %v77, 12
    %vm2767 = vcmp.lt.s32.totalorder %v78, 12
    %vm2768 = vcmp.lt.s32.totalorder %v79, 12
    %vm2769 = vcmp.lt.s32.totalorder %v80, 12
    %vm2770 = vcmp.lt.s32.totalorder %v81, 12
    %vm2771 = vcmp.lt.s32.totalorder %v82, 12
    %vm2772 = vcmp.lt.s32.totalorder %v83, 12
    %vm2773 = vcmp.lt.s32.totalorder %v84, 12
    %vm2774 = vcmp.lt.s32.totalorder %v85, 12
    %vm2775 = vcmp.lt.s32.totalorder %v86, 12
    %vm2776 = vcmp.lt.s32.totalorder %v87, 12
    %vm2777 = vcmp.lt.s32.totalorder %v88, 12
    %vm2778 = vcmp.lt.s32.totalorder %v89, 12
    %vm2779 = vcmp.lt.s32.totalorder %v90, 12
    %vm2780 = vcmp.lt.s32.totalorder %v91, 12
    %v2781 = vsel %vm2765, 1, 0
    %v2782 = vsel %vm2766, 1, 0
    %v2783 = vsel %vm2767, 1, 0
    %v2784 = vsel %vm2768, 1, 0
    %v2785 = vsel %vm2769, 1, 0
    %v2786 = vsel %vm2770, 1, 0
    %v2787 = vsel %vm2771, 1, 0
    %v2788 = vsel %vm2772, 1, 0
    %v2789 = vsel %vm2773, 1, 0
    %v2790 = vsel %vm2774, 1, 0
    %v2791 = vsel %vm2775, 1, 0
    %v2792 = vsel %vm2776, 1, 0
    %v2793 = vsel %vm2777, 1, 0
    %v2794 = vsel %vm2778, 1, 0
    %v2795 = vsel %vm2779, 1, 0
    %v2796 = vsel %vm2780, 1, 0
    %2797 = vset.pattern.permute.xlu0 0
    %2798 = vperm.xlu0 %2797, %v2781
    %v2799 = vpop.permute.xlu0 %2798
    %2800 = vset.pattern.permute.xlu0 0
    %2801 = vperm.xlu0 %2800, %v2782
    %v2802 = vpop.permute.xlu0 %2801
    %2803 = vset.pattern.permute.xlu0 0
    %2804 = vperm.xlu0 %2803, %v2783
    %v2805 = vpop.permute.xlu0 %2804
    %2806 = vset.pattern.permute.xlu0 0
    %2807 = vperm.xlu0 %2806, %v2784
    %v2808 = vpop.permute.xlu0 %2807
    %2809 = vset.pattern.permute.xlu0 0
    %2810 = vperm.xlu0 %2809, %v2785
    %v2811 = vpop.permute.xlu0 %2810
    %2812 = vset.pattern.permute.xlu0 0
    %2813 = vperm.xlu0 %2812, %v2786
    %v2814 = vpop.permute.xlu0 %2813
    %2815 = vset.pattern.permute.xlu0 0
    %2816 = vperm.xlu0 %2815, %v2787
    %v2817 = vpop.permute.xlu0 %2816
    %2818 = vset.pattern.permute.xlu0 0
    %2819 = vperm.xlu0 %2818, %v2788
    %v2820 = vpop.permute.xlu0 %2819
    %2821 = vset.pattern.permute.xlu0 0
    %2822 = vperm.xlu0 %2821, %v2789
    %v2823 = vpop.permute.xlu0 %2822
    %2824 = vset.pattern.permute.xlu0 0
    %2825 = vperm.xlu0 %2824, %v2790
    %v2826 = vpop.permute.xlu0 %2825
    %2827 = vset.pattern.permute.xlu0 0
    %2828 = vperm.xlu0 %2827, %v2791
    %v2829 = vpop.permute.xlu0 %2828
    %2830 = vset.pattern.permute.xlu0 0
    %2831 = vperm.xlu0 %2830, %v2792
    %v2832 = vpop.permute.xlu0 %2831
    %2833 = vset.pattern.permute.xlu0 0
    %2834 = vperm.xlu0 %2833, %v2793
    %v2835 = vpop.permute.xlu0 %2834
    %2836 = vset.pattern.permute.xlu0 0
    %2837 = vperm.xlu0 %2836, %v2794
    %v2838 = vpop.permute.xlu0 %2837
    %2839 = vset.pattern.permute.xlu0 0
    %2840 = vperm.xlu0 %2839, %v2795
    %v2841 = vpop.permute.xlu0 %2840
    %2842 = vset.pattern.permute.xlu0 0
    %2843 = vperm.xlu0 %2842, %v2796
    %v2844 = vpop.permute.xlu0 %2843
    %vm2845 = vcmp.eq.s32.totalorder %v2799, 1
    %vm2846 = vcmp.eq.s32.totalorder %v2802, 1
    %vm2847 = vcmp.eq.s32.totalorder %v2805, 1
    %vm2848 = vcmp.eq.s32.totalorder %v2808, 1
    %vm2849 = vcmp.eq.s32.totalorder %v2811, 1
    %vm2850 = vcmp.eq.s32.totalorder %v2814, 1
    %vm2851 = vcmp.eq.s32.totalorder %v2817, 1
    %vm2852 = vcmp.eq.s32.totalorder %v2820, 1
    %vm2853 = vcmp.eq.s32.totalorder %v2823, 1
    %vm2854 = vcmp.eq.s32.totalorder %v2826, 1
    %vm2855 = vcmp.eq.s32.totalorder %v2829, 1
    %vm2856 = vcmp.eq.s32.totalorder %v2832, 1
    %vm2857 = vcmp.eq.s32.totalorder %v2835, 1
    %vm2858 = vcmp.eq.s32.totalorder %v2838, 1
    %vm2859 = vcmp.eq.s32.totalorder %v2841, 1
    %vm2860 = vcmp.eq.s32.totalorder %v2844, 1
    %v2861 = vsel %vm2845, %v2763, 0.0
    %v2862 = vsel %vm2846, %v2762, 0.0
    %v2863 = vsel %vm2847, %v2761, 0.0
    %v2864 = vsel %vm2848, %v2760, 0.0
    %v2865 = vsel %vm2849, %v2759, 0.0
    %v2866 = vsel %vm2850, %v2758, 0.0
    %v2867 = vsel %vm2851, %v2757, 0.0
    %v2868 = vsel %vm2852, %v2756, 0.0
    %v2869 = vsel %vm2853, %v2755, 0.0
    %v2870 = vsel %vm2854, %v2754, 0.0
    %v2871 = vsel %vm2855, %v2753, 0.0
    %v2872 = vsel %vm2856, %v2752, 0.0
    %v2873 = vsel %vm2857, %v2751, 0.0
    %v2874 = vsel %vm2858, %v2750, 0.0
    %v2875 = vsel %vm2859, %v2749, 0.0
    %v2876 = vsel %vm2860, %v2764, 0.0
    %v2877 = vadd.f32 %v2555, %v2861
    %v2878 = vadd.f32 %v2556, %v2862
    %v2879 = vadd.f32 %v2557, %v2863
    %v2880 = vadd.f32 %v2558, %v2864
    %v2881 = vadd.f32 %v2559, %v2865
    %v2882 = vadd.f32 %v2560, %v2866
    %v2883 = vadd.f32 %v2561, %v2867
    %v2884 = vadd.f32 %v2562, %v2868
    %v2885 = vadd.f32 %v2563, %v2869
    %v2886 = vadd.f32 %v2564, %v2870
    %v2887 = vadd.f32 %v2565, %v2871
    %v2888 = vadd.f32 %v2566, %v2872
    %v2889 = vadd.f32 %v2567, %v2873
    %v2890 = vadd.f32 %v2568, %v2874
    %v2891 = vadd.f32 %v2569, %v2875
    %v2892 = vadd.f32 %v2570, %v2876
    %v2893 = vmul.f32 %v2877, 0.1
    %v2894 = vmul.f32 %v2878, 0.1
    %v2895 = vmul.f32 %v2879, 0.1
    %v2896 = vmul.f32 %v2880, 0.1
    %v2897 = vmul.f32 %v2881, 0.1
    %v2898 = vmul.f32 %v2882, 0.1
    %v2899 = vmul.f32 %v2883, 0.1
    %v2900 = vmul.f32 %v2884, 0.1
    %v2901 = vmul.f32 %v2885, 0.1
    %v2902 = vmul.f32 %v2886, 0.1
    %v2903 = vmul.f32 %v2887, 0.1
    %v2904 = vmul.f32 %v2888, 0.1
    %v2905 = vmul.f32 %v2889, 0.1
    %v2906 = vmul.f32 %v2890, 0.1
    %v2907 = vmul.f32 %v2891, 0.1
    %v2908 = vmul.f32 %v2892, 0.1
    %v2909 = vmax.f32 %v2877, %v2893
    %v2910 = vmax.f32 %v2878, %v2894
    %v2911 = vmax.f32 %v2879, %v2895
    %v2912 = vmax.f32 %v2880, %v2896
    %v2913 = vmax.f32 %v2881, %v2897
    %v2914 = vmax.f32 %v2882, %v2898
    %v2915 = vmax.f32 %v2883, %v2899
    %v2916 = vmax.f32 %v2884, %v2900
    %v2917 = vmax.f32 %v2885, %v2901
    %v2918 = vmax.f32 %v2886, %v2902
    %v2919 = vmax.f32 %v2887, %v2903
    %v2920 = vmax.f32 %v2888, %v2904
    %v2921 = vmax.f32 %v2889, %v2905
    %v2922 = vmax.f32 %v2890, %v2906
    %v2923 = vmax.f32 %v2891, %v2907
    %v2924 = vmax.f32 %v2892, %v2908
    %v2925 = vpack.c.bf16 %v2910, %v2909
    %v2926 = vpack.c.bf16 %v2912, %v2911
    %v2927 = vpack.c.bf16 %v2914, %v2913
    %v2928 = vpack.c.bf16 %v2916, %v2915
    %v2929 = vpack.c.bf16 %v2918, %v2917
    %v2930 = vpack.c.bf16 %v2920, %v2919
    %v2931 = vpack.c.bf16 %v2922, %v2921
    %v2932 = vpack.c.bf16 %v2924, %v2923
    %s2933 = scalar_lea.vmem [#allocation5], 64
    %v2934 = vld [vmem:[%s2933] sm:$0xf]
    %v2935 = vld [vmem:[%s2933 + $0x4] sm:$0xf]
    %v2936 = vld [vmem:[%s2933 + $0x8] sm:$0xf]
    %v2937 = vld [vmem:[%s2933 + $0xc] sm:$0xf]
    %v2938 = vld [vmem:[%s2933 + $0x10] sm:$0xf]
    %v2939 = vld [vmem:[%s2933 + $0x14] sm:$0xf]
    %v2940 = vld [vmem:[%s2933 + $0x18] sm:$0xf]
    %v2941 = vld [vmem:[%s2933 + $0x1c] sm:$0xf]
    %v2942 = vld [vmem:[%s2933 + $0x20] sm:$0xf]
    %v2943 = vld [vmem:[%s2933 + $0x24] sm:$0xf]
    %v2944 = vld [vmem:[%s2933 + $0x28] sm:$0xf]
    %v2945 = vld [vmem:[%s2933 + $0x2c] sm:$0xf]
    %v2946 = vld [vmem:[%s2933 + $0x30] sm:$0xf]
    %v2947 = vld [vmem:[%s2933 + $0x34] sm:$0xf]
    %v2948 = vld [vmem:[%s2933 + $0x38] sm:$0xf]
    %v2949 = vld [vmem:[%s2933 + $0x3c] sm:$0xf]
    %v2950 = vld [vmem:[%s5] sm:$0x1]
    %v2952 = vlaneseq
    %v2953 = vshrl.u32 %v2952, 7
    %v2954 = vsub.s32 0, %v2953
    %v2955 = vrot.slane %v2950, %v2954
    %v2973 = vunpack.c.l.b16 %v2934
    %v2974 = vunpack.c.l.b16 %v2935
    %v2975 = vunpack.c.l.b16 %v2936
    %v2976 = vunpack.c.l.b16 %v2937
    %v2977 = vunpack.c.l.b16 %v2938
    %v2978 = vunpack.c.l.b16 %v2939
    %v2979 = vunpack.c.l.b16 %v2940
    %v2980 = vunpack.c.l.b16 %v2941
    %v2981 = vunpack.c.l.b16 %v2942
    %v2982 = vunpack.c.l.b16 %v2943
    %v2983 = vunpack.c.l.b16 %v2944
    %v2984 = vunpack.c.l.b16 %v2945
    %v2985 = vunpack.c.l.b16 %v2946
    %v2986 = vunpack.c.l.b16 %v2947
    %v2987 = vunpack.c.l.b16 %v2948
    %v2988 = vunpack.c.l.b16 %v2949
    %v2989 = vpack.c.b16 %v2974, %v2973
    %v2990 = vpack.c.b16 %v2976, %v2975
    %v2991 = vpack.c.b16 %v2978, %v2977
    %v2992 = vpack.c.b16 %v2980, %v2979
    %v2993 = vpack.c.b16 %v2982, %v2981
    %v2994 = vpack.c.b16 %v2984, %v2983
    %v2995 = vpack.c.b16 %v2986, %v2985
    %v2996 = vpack.c.b16 %v2988, %v2987
    %3005 = vmatprep.subr.bf16.mxu0 0
    %3006 = vmatpush1.bf16.msra.mxu0 %v2989
    %3007 = vmatprep.subr.bf16.mxu0 0
    %3008 = vmatpush1.bf16.msra.mxu0 %v2990
    %3009 = vmatprep.subr.bf16.mxu0 0
    %3010 = vmatpush1.bf16.msra.mxu0 %v2991
    %3011 = vmatprep.subr.bf16.mxu0 0
    %3012 = vmatpush1.bf16.msra.mxu0 %v2992
    %3013 = vmatprep.subr.bf16.mxu0 0
    %3014 = vmatpush1.bf16.msra.mxu0 %v2993
    %3015 = vmatprep.subr.bf16.mxu0 0
    %3016 = vmatpush1.bf16.msra.mxu0 %v2994
    %3017 = vmatprep.subr.bf16.mxu0 0
    %3018 = vmatpush1.bf16.msra.mxu0 %v2995
    %3019 = vmatprep.subr.bf16.mxu0 0
    %3020 = vmatpush1.bf16.msra.mxu0 %v2996
    %3021 = vmatprep.subr.bf16.mxu0 0
    %3022 = vmatpush1.bf16.msra.mxu0 0
    %3023 = vmatprep.subr.bf16.mxu0 0
    %3024 = vmatpush1.bf16.msra.mxu0 0
    %3025 = vmatprep.subr.bf16.mxu0 0
    %3026 = vmatpush1.bf16.msra.mxu0 0
    %3027 = vmatprep.subr.bf16.mxu0 0
    %3028 = vmatpush1.bf16.msra.mxu0 0
    %3029 = vmatprep.subr.bf16.mxu0 0
    %3030 = vmatpush1.bf16.msra.mxu0 0
    %3031 = vmatprep.subr.bf16.mxu0 0
    %3032 = vmatpush1.bf16.msra.mxu0 0
    %3033 = vmatprep.subr.bf16.mxu0 0
    %3034 = vmatpush1.bf16.msra.mxu0 0
    %3035 = vmatprep.subr.bf16.mxu0 0
    %3036 = vmatpush1.bf16.msra.mxu0 0
    %3037 = vmatprep.mubr.bf16.mxu0 0
    %3038 = vmatmul.mubr.bf16.gmra.mrb[0].mxu0 %v2925
    %v3039 = vpop.f32.mrb[0].mxu0
    %v3040 = vadd.f32 %v2955, %v3039
    %v3041 = vpop.f32.mrb[0].mxu0
    %v3042 = vpop.f32.mrb[0].mxu0
    %v3043 = vadd.f32 %v2955, %v3042
    %v3044 = vpop.f32.mrb[0].mxu0
    %3045 = vmatprep.mubr.bf16.mxu0 0
    %3046 = vmatmul.mubr.bf16.gmra.mrb[0].mxu0 %v2926
    %v3047 = vpop.f32.mrb[0].mxu0
    %v3048 = vadd.f32 %v2955, %v3047
    %v3049 = vpop.f32.mrb[0].mxu0
    %v3050 = vpop.f32.mrb[0].mxu0
    %v3051 = vadd.f32 %v2955, %v3050
    %v3052 = vpop.f32.mrb[0].mxu0
    %3053 = vmatprep.mubr.bf16.mxu0 0
    %3054 = vmatmul.mubr.bf16.gmra.mrb[0].mxu0 %v2927
    %v3055 = vpop.f32.mrb[0].mxu0
    %v3056 = vadd.f32 %v2955, %v3055
    %v3057 = vpop.f32.mrb[0].mxu0
    %v3058 = vpop.f32.mrb[0].mxu0
    %v3059 = vadd.f32 %v2955, %v3058
    %v3060 = vpop.f32.mrb[0].mxu0
    %3061 = vmatprep.mubr.bf16.mxu0 0
    %3062 = vmatmul.mubr.bf16.gmra.mrb[0].mxu0 %v2928
    %v3063 = vpop.f32.mrb[0].mxu0
    %v3064 = vadd.f32 %v2955, %v3063
    %v3065 = vpop.f32.mrb[0].mxu0
    %v3066 = vpop.f32.mrb[0].mxu0
    %v3067 = vadd.f32 %v2955, %v3066
    %v3068 = vpop.f32.mrb[0].mxu0
    %3069 = vmatprep.mubr.bf16.mxu0 0
    %3070 = vmatmul.mubr.bf16.gmra.mrb[0].mxu0 %v2929
    %v3071 = vpop.f32.mrb[0].mxu0
    %v3072 = vadd.f32 %v2955, %v3071
    %v3073 = vpop.f32.mrb[0].mxu0
    %v3074 = vpop.f32.mrb[0].mxu0
    %v3075 = vadd.f32 %v2955, %v3074
    %v3076 = vpop.f32.mrb[0].mxu0
    %3077 = vmatprep.mubr.bf16.mxu0 0
    %3078 = vmatmul.mubr.bf16.gmra.mrb[0].mxu0 %v2930
    %v3079 = vpop.f32.mrb[0].mxu0
    %v3080 = vadd.f32 %v2955, %v3079
    %v3081 = vpop.f32.mrb[0].mxu0
    %v3082 = vpop.f32.mrb[0].mxu0
    %v3083 = vadd.f32 %v2955, %v3082
    %v3084 = vpop.f32.mrb[0].mxu0
    %3085 = vmatprep.mubr.bf16.mxu0 0
    %3086 = vmatmul.mubr.bf16.gmra.mrb[0].mxu0 %v2931
    %v3087 = vpop.f32.mrb[0].mxu0
    %v3088 = vadd.f32 %v2955, %v3087
    %v3089 = vpop.f32.mrb[0].mxu0
    %v3090 = vpop.f32.mrb[0].mxu0
    %v3091 = vadd.f32 %v2955, %v3090
    %v3092 = vpop.f32.mrb[0].mxu0
    %3093 = vmatprep.mubr.bf16.mxu0 0
    %3094 = vmatmul.mubr.bf16.gmra.mrb[0].mxu0 %v2932
    %v3095 = vpop.f32.mrb[0].mxu0
    %v3096 = vadd.f32 %v2955, %v3095
    %v3097 = vpop.f32.mrb[0].mxu0
    %v3098 = vpop.f32.mrb[0].mxu0
    %v3099 = vadd.f32 %v2955, %v3098
    %v3100 = vpop.f32.mrb[0].mxu0
    %3101 = vdwg.mxu0
    %v3102 = vld [vmem:[#allocation5] sm:$0xf]
    %v3103 = vld [vmem:[#allocation5 + $0x4] sm:$0xf]
    %v3104 = vld [vmem:[#allocation5 + $0x8] sm:$0xf]
    %v3105 = vld [vmem:[#allocation5 + $0xc] sm:$0xf]
    %v3106 = vld [vmem:[#allocation5 + $0x10] sm:$0xf]
    %v3107 = vld [vmem:[#allocation5 + $0x14] sm:$0xf]
    %v3108 = vld [vmem:[#allocation5 + $0x18] sm:$0xf]
    %v3109 = vld [vmem:[#allocation5 + $0x1c] sm:$0xf]
    %v3110 = vld [vmem:[#allocation5 + $0x20] sm:$0xf]
    %v3111 = vld [vmem:[#allocation5 + $0x24] sm:$0xf]
    %v3112 = vld [vmem:[#allocation5 + $0x28] sm:$0xf]
    %v3113 = vld [vmem:[#allocation5 + $0x2c] sm:$0xf]
    %v3114 = vld [vmem:[#allocation5 + $0x30] sm:$0xf]
    %v3115 = vld [vmem:[#allocation5 + $0x34] sm:$0xf]
    %v3116 = vld [vmem:[#allocation5 + $0x38] sm:$0xf]
    %v3117 = vld [vmem:[#allocation5 + $0x3c] sm:$0xf]
    %v3134 = vunpack.c.l.b16 %v3102
    %v3135 = vunpack.c.l.b16 %v3103
    %v3136 = vunpack.c.l.b16 %v3104
    %v3137 = vunpack.c.l.b16 %v3105
    %v3138 = vunpack.c.l.b16 %v3106
    %v3139 = vunpack.c.l.b16 %v3107
    %v3140 = vunpack.c.l.b16 %v3108
    %v3141 = vunpack.c.l.b16 %v3109
    %v3142 = vunpack.c.l.b16 %v3110
    %v3143 = vunpack.c.l.b16 %v3111
    %v3144 = vunpack.c.l.b16 %v3112
    %v3145 = vunpack.c.l.b16 %v3113
    %v3146 = vunpack.c.l.b16 %v3114
    %v3147 = vunpack.c.l.b16 %v3115
    %v3148 = vunpack.c.l.b16 %v3116
    %v3149 = vunpack.c.l.b16 %v3117
    %v3150 = vpack.c.b16 %v3135, %v3134
    %v3151 = vpack.c.b16 %v3137, %v3136
    %v3152 = vpack.c.b16 %v3139, %v3138
    %v3153 = vpack.c.b16 %v3141, %v3140
    %v3154 = vpack.c.b16 %v3143, %v3142
    %v3155 = vpack.c.b16 %v3145, %v3144
    %v3156 = vpack.c.b16 %v3147, %v3146
    %v3157 = vpack.c.b16 %v3149, %v3148
    %3166 = vmatprep.subr.bf16.mxu0 0
    %3167 = vmatpush1.bf16.msra.mxu0 %v3150
    %3168 = vmatprep.subr.bf16.mxu0 0
    %3169 = vmatpush1.bf16.msra.mxu0 %v3151
    %3170 = vmatprep.subr.bf16.mxu0 0
    %3171 = vmatpush1.bf16.msra.mxu0 %v3152
    %3172 = vmatprep.subr.bf16.mxu0 0
    %3173 = vmatpush1.bf16.msra.mxu0 %v3153
    %3174 = vmatprep.subr.bf16.mxu0 0
    %3175 = vmatpush1.bf16.msra.mxu0 %v3154
    %3176 = vmatprep.subr.bf16.mxu0 0
    %3177 = vmatpush1.bf16.msra.mxu0 %v3155
    %3178 = vmatprep.subr.bf16.mxu0 0
    %3179 = vmatpush1.bf16.msra.mxu0 %v3156
    %3180 = vmatprep.subr.bf16.mxu0 0
    %3181 = vmatpush1.bf16.msra.mxu0 %v3157
    %3182 = vmatprep.subr.bf16.mxu0 0
    %3183 = vmatpush1.bf16.msra.mxu0 0
    %3184 = vmatprep.subr.bf16.mxu0 0
    %3185 = vmatpush1.bf16.msra.mxu0 0
    %3186 = vmatprep.subr.bf16.mxu0 0
    %3187 = vmatpush1.bf16.msra.mxu0 0
    %3188 = vmatprep.subr.bf16.mxu0 0
    %3189 = vmatpush1.bf16.msra.mxu0 0
    %3190 = vmatprep.subr.bf16.mxu0 0
    %3191 = vmatpush1.bf16.msra.mxu0 0
    %3192 = vmatprep.subr.bf16.mxu0 0
    %3193 = vmatpush1.bf16.msra.mxu0 0
    %3194 = vmatprep.subr.bf16.mxu0 0
    %3195 = vmatpush1.bf16.msra.mxu0 0
    %3196 = vmatprep.subr.bf16.mxu0 0
    %3197 = vmatpush1.bf16.msra.mxu0 0
    %3198 = vmatprep.mubr.bf16.mxu0 0
    %3199 = vmatmul.mubr.bf16.gmra.mrb[0].mxu0 %v2925
    %v3200 = vpop.f32.mrb[0].mxu0
    %v3201 = vadd.f32 0.0, %v3200
    %v3202 = vpop.f32.mrb[0].mxu0
    %v3203 = vpop.f32.mrb[0].mxu0
    %v3204 = vadd.f32 0.0, %v3203
    %v3205 = vpop.f32.mrb[0].mxu0
    %3206 = vmatprep.mubr.bf16.mxu0 0
    %3207 = vmatmul.mubr.bf16.gmra.mrb[0].mxu0 %v2926
    %v3208 = vpop.f32.mrb[0].mxu0
    %v3209 = vadd.f32 0.0, %v3208
    %v3210 = vpop.f32.mrb[0].mxu0
    %v3211 = vpop.f32.mrb[0].mxu0
    %v3212 = vadd.f32 0.0, %v3211
    %v3213 = vpop.f32.mrb[0].mxu0
    %3214 = vmatprep.mubr.bf16.mxu0 0
    %3215 = vmatmul.mubr.bf16.gmra.mrb[0].mxu0 %v2927
    %v3216 = vpop.f32.mrb[0].mxu0
    %v3217 = vadd.f32 0.0, %v3216
    %v3218 = vpop.f32.mrb[0].mxu0
    %v3219 = vpop.f32.mrb[0].mxu0
    %v3220 = vadd.f32 0.0, %v3219
    %v3221 = vpop.f32.mrb[0].mxu0
    %3222 = vmatprep.mubr.bf16.mxu0 0
    %3223 = vmatmul.mubr.bf16.gmra.mrb[0].mxu0 %v2928
    %v3224 = vpop.f32.mrb[0].mxu0
    %v3225 = vadd.f32 0.0, %v3224
    %v3226 = vpop.f32.mrb[0].mxu0
    %v3227 = vpop.f32.mrb[0].mxu0
    %v3228 = vadd.f32 0.0, %v3227
    %v3229 = vpop.f32.mrb[0].mxu0
    %3230 = vmatprep.mubr.bf16.mxu0 0
    %3231 = vmatmul.mubr.bf16.gmra.mrb[0].mxu0 %v2929
    %v3232 = vpop.f32.mrb[0].mxu0
    %v3233 = vadd.f32 0.0, %v3232
    %v3234 = vpop.f32.mrb[0].mxu0
    %v3235 = vpop.f32.mrb[0].mxu0
    %v3236 = vadd.f32 0.0, %v3235
    %v3237 = vpop.f32.mrb[0].mxu0
    %3238 = vmatprep.mubr.bf16.mxu0 0
    %3239 = vmatmul.mubr.bf16.gmra.mrb[0].mxu0 %v2930
    %v3240 = vpop.f32.mrb[0].mxu0
    %v3241 = vadd.f32 0.0, %v3240
    %v3242 = vpop.f32.mrb[0].mxu0
    %v3243 = vpop.f32.mrb[0].mxu0
    %v3244 = vadd.f32 0.0, %v3243
    %v3245 = vpop.f32.mrb[0].mxu0
    %3246 = vmatprep.mubr.bf16.mxu0 0
    %3247 = vmatmul.mubr.bf16.gmra.mrb[0].mxu0 %v2931
    %v3248 = vpop.f32.mrb[0].mxu0
    %v3249 = vadd.f32 0.0, %v3248
    %v3250 = vpop.f32.mrb[0].mxu0
    %v3251 = vpop.f32.mrb[0].mxu0
    %v3252 = vadd.f32 0.0, %v3251
    %v3253 = vpop.f32.mrb[0].mxu0
    %3254 = vmatprep.mubr.bf16.mxu0 0
    %3255 = vmatmul.mubr.bf16.gmra.mrb[0].mxu0 %v2932
    %v3256 = vpop.f32.mrb[0].mxu0
    %v3257 = vadd.f32 0.0, %v3256
    %v3258 = vpop.f32.mrb[0].mxu0
    %v3259 = vpop.f32.mrb[0].mxu0
    %v3260 = vadd.f32 0.0, %v3259
    %v3261 = vpop.f32.mrb[0].mxu0
    %3262 = vdwg.mxu0
    %v3263 = vrot.slane %v3201, 7
    %v3264 = vrot.slane %v3204, 7
    %v3265 = vrot.slane %v3209, 7
    %v3266 = vrot.slane %v3212, 7
    %v3267 = vrot.slane %v3217, 7
    %v3268 = vrot.slane %v3220, 7
    %v3269 = vrot.slane %v3225, 7
    %v3270 = vrot.slane %v3228, 7
    %v3271 = vrot.slane %v3233, 7
    %v3272 = vrot.slane %v3236, 7
    %v3273 = vrot.slane %v3241, 7
    %v3274 = vrot.slane %v3244, 7
    %v3275 = vrot.slane %v3249, 7
    %v3276 = vrot.slane %v3252, 7
    %v3277 = vrot.slane %v3257, 7
    %v3278 = vrot.slane %v3260, 7
    %v3279 = vsel %vm1457, %v3277, %v3278
    %v3280 = vsel %vm1457, %v3276, %v3277
    %v3281 = vsel %vm1457, %v3275, %v3276
    %v3282 = vsel %vm1457, %v3274, %v3275
    %v3283 = vsel %vm1457, %v3273, %v3274
    %v3284 = vsel %vm1457, %v3272, %v3273
    %v3285 = vsel %vm1457, %v3271, %v3272
    %v3286 = vsel %vm1457, %v3270, %v3271
    %v3287 = vsel %vm1457, %v3269, %v3270
    %v3288 = vsel %vm1457, %v3268, %v3269
    %v3289 = vsel %vm1457, %v3267, %v3268
    %v3290 = vsel %vm1457, %v3266, %v3267
    %v3291 = vsel %vm1457, %v3265, %v3266
    %v3292 = vsel %vm1457, %v3264, %v3265
    %v3293 = vsel %vm1457, %v3263, %v3264
    %v3294 = vsel %vm1457, %v3278, %v3263
    %v3295 = vsel %vm1554, %v3294, 0.0
    %v3296 = vsel %vm1555, %v3293, 0.0
    %v3297 = vsel %vm1556, %v3292, 0.0
    %v3298 = vsel %vm1557, %v3291, 0.0
    %v3299 = vsel %vm1558, %v3290, 0.0
    %v3300 = vsel %vm1559, %v3289, 0.0
    %v3301 = vsel %vm1560, %v3288, 0.0
    %v3302 = vsel %vm1561, %v3287, 0.0
    %v3303 = vsel %vm1562, %v3286, 0.0
    %v3304 = vsel %vm1563, %v3285, 0.0
    %v3305 = vsel %vm1564, %v3284, 0.0
    %v3306 = vsel %vm1565, %v3283, 0.0
    %v3307 = vsel %vm1566, %v3282, 0.0
    %v3308 = vsel %vm1567, %v3281, 0.0
    %v3309 = vsel %vm1568, %v3280, 0.0
    %v3310 = vsel %vm1569, %v3279, 0.0
    %v3311 = vadd.f32 %v3040, %v3295
    %v3312 = vadd.f32 %v3043, %v3296
    %v3313 = vadd.f32 %v3048, %v3297
    %v3314 = vadd.f32 %v3051, %v3298
    %v3315 = vadd.f32 %v3056, %v3299
    %v3316 = vadd.f32 %v3059, %v3300
    %v3317 = vadd.f32 %v3064, %v3301
    %v3318 = vadd.f32 %v3067, %v3302
    %v3319 = vadd.f32 %v3072, %v3303
    %v3320 = vadd.f32 %v3075, %v3304
    %v3321 = vadd.f32 %v3080, %v3305
    %v3322 = vadd.f32 %v3083, %v3306
    %v3323 = vadd.f32 %v3088, %v3307
    %v3324 = vadd.f32 %v3091, %v3308
    %v3325 = vadd.f32 %v3096, %v3309
    %v3326 = vadd.f32 %v3099, %v3310
    %s3327 = scalar_lea.vmem [#allocation5], 128
    %v3328 = vld [vmem:[%s3327] sm:$0xf]
    %v3329 = vld [vmem:[%s3327 + $0x4] sm:$0xf]
    %v3330 = vld [vmem:[%s3327 + $0x8] sm:$0xf]
    %v3331 = vld [vmem:[%s3327 + $0xc] sm:$0xf]
    %v3332 = vld [vmem:[%s3327 + $0x10] sm:$0xf]
    %v3333 = vld [vmem:[%s3327 + $0x14] sm:$0xf]
    %v3334 = vld [vmem:[%s3327 + $0x18] sm:$0xf]
    %v3335 = vld [vmem:[%s3327 + $0x1c] sm:$0xf]
    %v3336 = vld [vmem:[%s3327 + $0x20] sm:$0xf]
    %v3337 = vld [vmem:[%s3327 + $0x24] sm:$0xf]
    %v3338 = vld [vmem:[%s3327 + $0x28] sm:$0xf]
    %v3339 = vld [vmem:[%s3327 + $0x2c] sm:$0xf]
    %v3340 = vld [vmem:[%s3327 + $0x30] sm:$0xf]
    %v3341 = vld [vmem:[%s3327 + $0x34] sm:$0xf]
    %v3342 = vld [vmem:[%s3327 + $0x38] sm:$0xf]
    %v3343 = vld [vmem:[%s3327 + $0x3c] sm:$0xf]
    %v3360 = vunpack.c.l.b16 %v3328
    %v3361 = vunpack.c.l.b16 %v3329
    %v3362 = vunpack.c.l.b16 %v3330
    %v3363 = vunpack.c.l.b16 %v3331
    %v3364 = vunpack.c.l.b16 %v3332
    %v3365 = vunpack.c.l.b16 %v3333
    %v3366 = vunpack.c.l.b16 %v3334
    %v3367 = vunpack.c.l.b16 %v3335
    %v3368 = vunpack.c.l.b16 %v3336
    %v3369 = vunpack.c.l.b16 %v3337
    %v3370 = vunpack.c.l.b16 %v3338
    %v3371 = vunpack.c.l.b16 %v3339
    %v3372 = vunpack.c.l.b16 %v3340
    %v3373 = vunpack.c.l.b16 %v3341
    %v3374 = vunpack.c.l.b16 %v3342
    %v3375 = vunpack.c.l.b16 %v3343
    %v3376 = vpack.c.b16 %v3361, %v3360
    %v3377 = vpack.c.b16 %v3363, %v3362
    %v3378 = vpack.c.b16 %v3365, %v3364
    %v3379 = vpack.c.b16 %v3367, %v3366
    %v3380 = vpack.c.b16 %v3369, %v3368
    %v3381 = vpack.c.b16 %v3371, %v3370
    %v3382 = vpack.c.b16 %v3373, %v3372
    %v3383 = vpack.c.b16 %v3375, %v3374
    %3392 = vmatprep.subr.bf16.mxu0 0
    %3393 = vmatpush1.bf16.msra.mxu0 %v3376
    %3394 = vmatprep.subr.bf16.mxu0 0
    %3395 = vmatpush1.bf16.msra.mxu0 %v3377
    %3396 = vmatprep.subr.bf16.mxu0 0
    %3397 = vmatpush1.bf16.msra.mxu0 %v3378
    %3398 = vmatprep.subr.bf16.mxu0 0
    %3399 = vmatpush1.bf16.msra.mxu0 %v3379
    %3400 = vmatprep.subr.bf16.mxu0 0
    %3401 = vmatpush1.bf16.msra.mxu0 %v3380
    %3402 = vmatprep.subr.bf16.mxu0 0
    %3403 = vmatpush1.bf16.msra.mxu0 %v3381
    %3404 = vmatprep.subr.bf16.mxu0 0
    %3405 = vmatpush1.bf16.msra.mxu0 %v3382
    %3406 = vmatprep.subr.bf16.mxu0 0
    %3407 = vmatpush1.bf16.msra.mxu0 %v3383
    %3408 = vmatprep.subr.bf16.mxu0 0
    %3409 = vmatpush1.bf16.msra.mxu0 0
    %3410 = vmatprep.subr.bf16.mxu0 0
    %3411 = vmatpush1.bf16.msra.mxu0 0
    %3412 = vmatprep.subr.bf16.mxu0 0
    %3413 = vmatpush1.bf16.msra.mxu0 0
    %3414 = vmatprep.subr.bf16.mxu0 0
    %3415 = vmatpush1.bf16.msra.mxu0 0
    %3416 = vmatprep.subr.bf16.mxu0 0
    %3417 = vmatpush1.bf16.msra.mxu0 0
    %3418 = vmatprep.subr.bf16.mxu0 0
    %3419 = vmatpush1.bf16.msra.mxu0 0
    %3420 = vmatprep.subr.bf16.mxu0 0
    %3421 = vmatpush1.bf16.msra.mxu0 0
    %3422 = vmatprep.subr.bf16.mxu0 0
    %3423 = vmatpush1.bf16.msra.mxu0 0
    %3424 = vmatprep.mubr.bf16.mxu0 0
    %3425 = vmatmul.mubr.bf16.gmra.mrb[0].mxu0 %v2925
    %v3426 = vpop.f32.mrb[0].mxu0
    %v3427 = vadd.f32 0.0, %v3426
    %v3428 = vpop.f32.mrb[0].mxu0
    %v3429 = vpop.f32.mrb[0].mxu0
    %v3430 = vadd.f32 0.0, %v3429
    %v3431 = vpop.f32.mrb[0].mxu0
    %3432 = vmatprep.mubr.bf16.mxu0 0
    %3433 = vmatmul.mubr.bf16.gmra.mrb[0].mxu0 %v2926
    %v3434 = vpop.f32.mrb[0].mxu0
    %v3435 = vadd.f32 0.0, %v3434
    %v3436 = vpop.f32.mrb[0].mxu0
    %v3437 = vpop.f32.mrb[0].mxu0
    %v3438 = vadd.f32 0.0, %v3437
    %v3439 = vpop.f32.mrb[0].mxu0
    %3440 = vmatprep.mubr.bf16.mxu0 0
    %3441 = vmatmul.mubr.bf16.gmra.mrb[0].mxu0 %v2927
    %v3442 = vpop.f32.mrb[0].mxu0
    %v3443 = vadd.f32 0.0, %v3442
    %v3444 = vpop.f32.mrb[0].mxu0
    %v3445 = vpop.f32.mrb[0].mxu0
    %v3446 = vadd.f32 0.0, %v3445
    %v3447 = vpop.f32.mrb[0].mxu0
    %3448 = vmatprep.mubr.bf16.mxu0 0
    %3449 = vmatmul.mubr.bf16.gmra.mrb[0].mxu0 %v2928
    %v3450 = vpop.f32.mrb[0].mxu0
    %v3451 = vadd.f32 0.0, %v3450
    %v3452 = vpop.f32.mrb[0].mxu0
    %v3453 = vpop.f32.mrb[0].mxu0
    %v3454 = vadd.f32 0.0, %v3453
    %v3455 = vpop.f32.mrb[0].mxu0
    %3456 = vmatprep.mubr.bf16.mxu0 0
    %3457 = vmatmul.mubr.bf16.gmra.mrb[0].mxu0 %v2929
    %v3458 = vpop.f32.mrb[0].mxu0
    %v3459 = vadd.f32 0.0, %v3458
    %v3460 = vpop.f32.mrb[0].mxu0
    %v3461 = vpop.f32.mrb[0].mxu0
    %v3462 = vadd.f32 0.0, %v3461
    %v3463 = vpop.f32.mrb[0].mxu0
    %3464 = vmatprep.mubr.bf16.mxu0 0
    %3465 = vmatmul.mubr.bf16.gmra.mrb[0].mxu0 %v2930
    %v3466 = vpop.f32.mrb[0].mxu0
    %v3467 = vadd.f32 0.0, %v3466
    %v3468 = vpop.f32.mrb[0].mxu0
    %v3469 = vpop.f32.mrb[0].mxu0
    %v3470 = vadd.f32 0.0, %v3469
    %v3471 = vpop.f32.mrb[0].mxu0
    %3472 = vmatprep.mubr.bf16.mxu0 0
    %3473 = vmatmul.mubr.bf16.gmra.mrb[0].mxu0 %v2931
    %v3474 = vpop.f32.mrb[0].mxu0
    %v3475 = vadd.f32 0.0, %v3474
    %v3476 = vpop.f32.mrb[0].mxu0
    %v3477 = vpop.f32.mrb[0].mxu0
    %v3478 = vadd.f32 0.0, %v3477
    %v3479 = vpop.f32.mrb[0].mxu0
    %3480 = vmatprep.mubr.bf16.mxu0 0
    %3481 = vmatmul.mubr.bf16.gmra.mrb[0].mxu0 %v2932
    %v3482 = vpop.f32.mrb[0].mxu0
    %v3483 = vadd.f32 0.0, %v3482
    %v3484 = vpop.f32.mrb[0].mxu0
    %v3485 = vpop.f32.mrb[0].mxu0
    %v3486 = vadd.f32 0.0, %v3485
    %v3487 = vpop.f32.mrb[0].mxu0
    %3488 = vdwg.mxu0
    %v3489 = vrot.slane %v3427, 1
    %v3490 = vrot.slane %v3430, 1
    %v3491 = vrot.slane %v3435, 1
    %v3492 = vrot.slane %v3438, 1
    %v3493 = vrot.slane %v3443, 1
    %v3494 = vrot.slane %v3446, 1
    %v3495 = vrot.slane %v3451, 1
    %v3496 = vrot.slane %v3454, 1
    %v3497 = vrot.slane %v3459, 1
    %v3498 = vrot.slane %v3462, 1
    %v3499 = vrot.slane %v3467, 1
    %v3500 = vrot.slane %v3470, 1
    %v3501 = vrot.slane %v3475, 1
    %v3502 = vrot.slane %v3478, 1
    %v3503 = vrot.slane %v3483, 1
    %v3504 = vrot.slane %v3486, 1
    %v3505 = vsel %vm1780, %v3503, %v3504
    %v3506 = vsel %vm1780, %v3502, %v3503
    %v3507 = vsel %vm1780, %v3501, %v3502
    %v3508 = vsel %vm1780, %v3500, %v3501
    %v3509 = vsel %vm1780, %v3499, %v3500
    %v3510 = vsel %vm1780, %v3498, %v3499
    %v3511 = vsel %vm1780, %v3497, %v3498
    %v3512 = vsel %vm1780, %v3496, %v3497
    %v3513 = vsel %vm1780, %v3495, %v3496
    %v3514 = vsel %vm1780, %v3494, %v3495
    %v3515 = vsel %vm1780, %v3493, %v3494
    %v3516 = vsel %vm1780, %v3492, %v3493
    %v3517 = vsel %vm1780, %v3491, %v3492
    %v3518 = vsel %vm1780, %v3490, %v3491
    %v3519 = vsel %vm1780, %v3489, %v3490
    %v3520 = vsel %vm1780, %v3504, %v3489
    %v3521 = vsel %vm1877, %v3519, 0.0
    %v3522 = vsel %vm1878, %v3518, 0.0
    %v3523 = vsel %vm1879, %v3517, 0.0
    %v3524 = vsel %vm1880, %v3516, 0.0
    %v3525 = vsel %vm1881, %v3515, 0.0
    %v3526 = vsel %vm1882, %v3514, 0.0
    %v3527 = vsel %vm1883, %v3513, 0.0
    %v3528 = vsel %vm1884, %v3512, 0.0
    %v3529 = vsel %vm1885, %v3511, 0.0
    %v3530 = vsel %vm1886, %v3510, 0.0
    %v3531 = vsel %vm1887, %v3509, 0.0
    %v3532 = vsel %vm1888, %v3508, 0.0
    %v3533 = vsel %vm1889, %v3507, 0.0
    %v3534 = vsel %vm1890, %v3506, 0.0
    %v3535 = vsel %vm1891, %v3505, 0.0
    %v3536 = vsel %vm1892, %v3520, 0.0
    %v3537 = vadd.f32 %v3311, %v3521
    %v3538 = vadd.f32 %v3312, %v3522
    %v3539 = vadd.f32 %v3313, %v3523
    %v3540 = vadd.f32 %v3314, %v3524
    %v3541 = vadd.f32 %v3315, %v3525
    %v3542 = vadd.f32 %v3316, %v3526
    %v3543 = vadd.f32 %v3317, %v3527
    %v3544 = vadd.f32 %v3318, %v3528
    %v3545 = vadd.f32 %v3319, %v3529
    %v3546 = vadd.f32 %v3320, %v3530
    %v3547 = vadd.f32 %v3321, %v3531
    %v3548 = vadd.f32 %v3322, %v3532
    %v3549 = vadd.f32 %v3323, %v3533
    %v3550 = vadd.f32 %v3324, %v3534
    %v3551 = vadd.f32 %v3325, %v3535
    %v3552 = vadd.f32 %v3326, %v3536
    %v3553 = vmul.f32 %v3537, 0.1
    %v3554 = vmul.f32 %v3538, 0.1
    %v3555 = vmul.f32 %v3539, 0.1
    %v3556 = vmul.f32 %v3540, 0.1
    %v3557 = vmul.f32 %v3541, 0.1
    %v3558 = vmul.f32 %v3542, 0.1
    %v3559 = vmul.f32 %v3543, 0.1
    %v3560 = vmul.f32 %v3544, 0.1
    %v3561 = vmul.f32 %v3545, 0.1
    %v3562 = vmul.f32 %v3546, 0.1
    %v3563 = vmul.f32 %v3547, 0.1
    %v3564 = vmul.f32 %v3548, 0.1
    %v3565 = vmul.f32 %v3549, 0.1
    %v3566 = vmul.f32 %v3550, 0.1
    %v3567 = vmul.f32 %v3551, 0.1
    %v3568 = vmul.f32 %v3552, 0.1
    %v3569 = vmax.f32 %v3537, %v3553
    %v3570 = vmax.f32 %v3538, %v3554
    %v3571 = vmax.f32 %v3539, %v3555
    %v3572 = vmax.f32 %v3540, %v3556
    %v3573 = vmax.f32 %v3541, %v3557
    %v3574 = vmax.f32 %v3542, %v3558
    %v3575 = vmax.f32 %v3543, %v3559
    %v3576 = vmax.f32 %v3544, %v3560
    %v3577 = vmax.f32 %v3545, %v3561
    %v3578 = vmax.f32 %v3546, %v3562
    %v3579 = vmax.f32 %v3547, %v3563
    %v3580 = vmax.f32 %v3548, %v3564
    %v3581 = vmax.f32 %v3549, %v3565
    %v3582 = vmax.f32 %v3550, %v3566
    %v3583 = vmax.f32 %v3551, %v3567
    %v3584 = vmax.f32 %v3552, %v3568
    %v3585 = vld [vmem:[%s6] sm:$0xff]
    %v3586 = vld [vmem:[%s6 + $0x8] sm:$0xff]
    %v3587 = vmul.f32 %v3569, %v3585
    %v3588 = vmul.f32 %v3570, %v3586
    %v3589 = vmul.f32 %v3571, %v3585
    %v3590 = vmul.f32 %v3572, %v3586
    %v3591 = vmul.f32 %v3573, %v3585
    %v3592 = vmul.f32 %v3574, %v3586
    %v3593 = vmul.f32 %v3575, %v3585
    %v3594 = vmul.f32 %v3576, %v3586
    %v3595 = vmul.f32 %v3577, %v3585
    %v3596 = vmul.f32 %v3578, %v3586
    %v3597 = vmul.f32 %v3579, %v3585
    %v3598 = vmul.f32 %v3580, %v3586
    %v3599 = vmul.f32 %v3581, %v3585
    %v3600 = vmul.f32 %v3582, %v3586
    %v3601 = vmul.f32 %v3583, %v3585
    %v3602 = vmul.f32 %v3584, %v3586
    %3603 = vadd.xlane.f32.xlu0 %v3587
    %v3604 = vpop.xlane.xlu0 %3603
    %3605 = vadd.xlane.f32.xlu0 %v3588
    %v3606 = vpop.xlane.xlu0 %3605
    %3607 = vadd.xlane.f32.xlu0 %v3589
    %v3608 = vpop.xlane.xlu0 %3607
    %3609 = vadd.xlane.f32.xlu0 %v3590
    %v3610 = vpop.xlane.xlu0 %3609
    %3611 = vadd.xlane.f32.xlu0 %v3591
    %v3612 = vpop.xlane.xlu0 %3611
    %3613 = vadd.xlane.f32.xlu0 %v3592
    %v3614 = vpop.xlane.xlu0 %3613
    %3615 = vadd.xlane.f32.xlu0 %v3593
    %v3616 = vpop.xlane.xlu0 %3615
    %3617 = vadd.xlane.f32.xlu0 %v3594
    %v3618 = vpop.xlane.xlu0 %3617
    %3619 = vadd.xlane.f32.xlu0 %v3595
    %v3620 = vpop.xlane.xlu0 %3619
    %3621 = vadd.xlane.f32.xlu0 %v3596
    %v3622 = vpop.xlane.xlu0 %3621
    %3623 = vadd.xlane.f32.xlu0 %v3597
    %v3624 = vpop.xlane.xlu0 %3623
    %3625 = vadd.xlane.f32.xlu0 %v3598
    %v3626 = vpop.xlane.xlu0 %3625
    %3627 = vadd.xlane.f32.xlu0 %v3599
    %v3628 = vpop.xlane.xlu0 %3627
    %3629 = vadd.xlane.f32.xlu0 %v3600
    %v3630 = vpop.xlane.xlu0 %3629
    %3631 = vadd.xlane.f32.xlu0 %v3601
    %v3632 = vpop.xlane.xlu0 %3631
    %3633 = vadd.xlane.f32.xlu0 %v3602
    %v3634 = vpop.xlane.xlu0 %3633
    %v3651 = vlaneseq
    %v3652 = vand.u32 %v3651, 127
    %v3653 = vlaneseq
    %v3654 = vshrl.u32 %v3653, 7
    %v3655 = vsub.s32 %v3652, %v3654
    %v3656 = vrot.slane %v3604, %v3655
    %v3657 = vadd.s32 %v3652, 4294967288
    %v3658 = vlaneseq
    %v3659 = vshrl.u32 %v3658, 7
    %v3660 = vsub.s32 %v3657, %v3659
    %v3661 = vrot.slane %v3606, %v3660
    %vm3662 = vcmask 130112
    %v3663 = vsel %vm3662, %v3661, %v3656
    %v3664 = vlaneseq
    %v3665 = vshrl.u32 %v3664, 7
    %v3666 = vsub.s32 %v3652, %v3665
    %v3667 = vrot.slane %v3608, %v3666
    %v3668 = vlaneseq
    %v3669 = vshrl.u32 %v3668, 7
    %v3670 = vsub.s32 %v3657, %v3669
    %v3671 = vrot.slane %v3610, %v3670
    %v3672 = vsel %vm3662, %v3671, %v3667
    %v3673 = vlaneseq
    %v3674 = vshrl.u32 %v3673, 7
    %v3675 = vsub.s32 %v3652, %v3674
    %v3676 = vrot.slane %v3612, %v3675
    %v3677 = vlaneseq
    %v3678 = vshrl.u32 %v3677, 7
    %v3679 = vsub.s32 %v3657, %v3678
    %v3680 = vrot.slane %v3614, %v3679
    %v3681 = vsel %vm3662, %v3680, %v3676
    %v3682 = vlaneseq
    %v3683 = vshrl.u32 %v3682, 7
    %v3684 = vsub.s32 %v3652, %v3683
    %v3685 = vrot.slane %v3616, %v3684
    %v3686 = vlaneseq
    %v3687 = vshrl.u32 %v3686, 7
    %v3688 = vsub.s32 %v3657, %v3687
    %v3689 = vrot.slane %v3618, %v3688
    %v3690 = vsel %vm3662, %v3689, %v3685
    %v3691 = vlaneseq
    %v3692 = vshrl.u32 %v3691, 7
    %v3693 = vsub.s32 %v3652, %v3692
    %v3694 = vrot.slane %v3620, %v3693
    %v3695 = vlaneseq
    %v3696 = vshrl.u32 %v3695, 7
    %v3697 = vsub.s32 %v3657, %v3696
    %v3698 = vrot.slane %v3622, %v3697
    %v3699 = vsel %vm3662, %v3698, %v3694
    %v3700 = vlaneseq
    %v3701 = vshrl.u32 %v3700, 7
    %v3702 = vsub.s32 %v3652, %v3701
    %v3703 = vrot.slane %v3624, %v3702
    %v3704 = vlaneseq
    %v3705 = vshrl.u32 %v3704, 7
    %v3706 = vsub.s32 %v3657, %v3705
    %v3707 = vrot.slane %v3626, %v3706
    %v3708 = vsel %vm3662, %v3707, %v3703
    %v3709 = vlaneseq
    %v3710 = vshrl.u32 %v3709, 7
    %v3711 = vsub.s32 %v3652, %v3710
    %v3712 = vrot.slane %v3628, %v3711
    %v3713 = vlaneseq
    %v3714 = vshrl.u32 %v3713, 7
    %v3715 = vsub.s32 %v3657, %v3714
    %v3716 = vrot.slane %v3630, %v3715
    %v3717 = vsel %vm3662, %v3716, %v3712
    %v3718 = vlaneseq
    %v3719 = vshrl.u32 %v3718, 7
    %v3720 = vsub.s32 %v3652, %v3719
    %v3721 = vrot.slane %v3632, %v3720
    %v3722 = vlaneseq
    %v3723 = vshrl.u32 %v3722, 7
    %v3724 = vsub.s32 %v3657, %v3723
    %v3725 = vrot.slane %v3634, %v3724
    %v3726 = vsel %vm3662, %v3725, %v3721
    %vm3727 = vcmask 1041409
    %v3728 = vsel %vm3727, %v3672, %v3663
    %vm3729 = vcmask 1042434
    %v3730 = vsel %vm3729, %v3681, %v3728
    %vm3731 = vcmask 1043459
    %v3732 = vsel %vm3731, %v3690, %v3730
    %vm3733 = vcmask 1044484
    %v3734 = vsel %vm3733, %v3699, %v3732
    %vm3735 = vcmask 1045509
    %v3736 = vsel %vm3735, %v3708, %v3734
    %vm3737 = vcmask 1046534
    %v3738 = vsel %vm3737, %v3717, %v3736
    %vm3739 = vcmask 1047559
    %v3740 = vsel %vm3739, %v3726, %v3738
    %vm3742 = vcmask 130048
    %v3743 = vsel %vm3742, %v3740, 0.0
    %3744 = vadd.xlane.f32.xlu0 %v3743
    %v3745 = vpop.xlane.xlu0 %3744
    %v3746 = vld [vmem:[#allocation2] sm:$0x1]
    %v3748 = vlaneseq
    %v3749 = vshrl.u32 %v3748, 7
    %v3750 = vsub.s32 0, %v3749
    %v3751 = vrot.slane %v3746, %v3750
    %v3753 = vadd.f32 %v3745, %v3751
    %vm3754 = vcmask 7168
    %3755 = vst.msk [vmem:[%s8] sm:$0xff] %vm3754, %v3753
    // Predicated region
    $region42: #{tpu_custom_call.1} parent=1 // pred_check
      _
    $region43: #{tpu_custom_call.1} parent=1 // pred_check_branch
      %3757 = sbr.rel (0) target = $region45
    $region44: #{tpu_custom_call.1} parent=1 // pred_region
      _
    $region45: #{tpu_custom_call.1} parent=1 // pred_fallthru
      _
    // Predicated region
    $region46: #{tpu_custom_call.1} parent=1 // pred_check
      _
    $region47: #{tpu_custom_call.1} parent=1 // pred_check_branch
      %3759 = sbr.rel (0) target = $region49
    $region48: #{tpu_custom_call.1} parent=1 // pred_region
      _
    $region49: #{tpu_custom_call.1} parent=1 // pred_fallthru
      _
    %3760 = vsyncpa [#allocation4], 1
    %3761 = vsyncpa [#allocation6], 1

</llo_original>
